<compile_context>
chip_gen: v6e
topology: v6e:2x2x1
jax: 0.10.0
libtpu: 0.0.40
codegen_flags: <defaults>
</compile_context>

<pallas_src>
import jax
import jax.numpy as jnp
import numpy as np
from jax.experimental import pallas as pl
from jax.experimental.pallas import tpu as pltpu

N_JOINTS = 24
N_POSE_JOINTS = 23              # joint 0 (global rotation) is dropped
C_HID = 32                      # PoseDiscriminator channels [9, 32, 32, 1]
FULL_HID = 1024                 # FullPoseDiscriminator [736, 1024, 1024, 1]
BETA = 10                       # ShapeDiscriminator [10, 5, 1]
N_OUT = N_POSE_JOINTS + 1 + 1   # 25
OUT_PAD = 128                   # lane-dense output width (sliced to 25 outside)
K216 = 9 * N_JOINTS             # packed rotation-entry contraction dim
EPS = 1e-8


def _round_up(x, m):
    return ((x + m - 1) // m) * m


def _pose_shape_disc_kernel(
    pose_ref, shp_ref,
    wmain_ref, bf1_ref, wpose_ref,
    wf2_ref, bf2_ref, ws1_ref, bs1_ref,
    wf3_ref, ws2_ref, b128_ref,
    out_ref,
):
    f32 = jnp.float32
    bf16 = jnp.bfloat16

    # ---------------- batch_rodrigues (axis-angle -> quaternion -> R) --------
    px = pose_ref[0]                                       # (tm, 24)
    py = pose_ref[1]
    pz = pose_ref[2]
    angle = jnp.sqrt((px + EPS) ** 2 + (py + EPS) ** 2 + (pz + EPS) ** 2)
    inv_a = 1.0 / angle
    nx, ny, nz = px * inv_a, py * inv_a, pz * inv_a
    half = angle * 0.5
    qw = jnp.cos(half)
    s = jnp.sin(half)
    qx, qy, qz = s * nx, s * ny, s * nz
    inv_qn = 1.0 / jnp.sqrt(qw * qw + qx * qx + qy * qy + qz * qz)
    qw, qx, qy, qz = qw * inv_qn, qx * inv_qn, qy * inv_qn, qz * inv_qn
    w2, x2, y2, z2 = qw * qw, qx * qx, qy * qy, qz * qz
    wx, wy, wz = qw * qx, qw * qy, qw * qz
    xy, xz, yz = qx * qy, qx * qz, qy * qz
    # Row-major 3x3 rotation entries, each (tm, 24); packed as (tm, 216) with
    # lane index = k*24 + j (k = rot entry, j = joint).
    comps = (
        w2 + x2 - y2 - z2, 2 * xy - 2 * wz, 2 * wy + 2 * xz,
        2 * wz + 2 * xy, w2 - x2 + y2 - z2, 2 * yz - 2 * wx,
        2 * xz - 2 * wy, 2 * wx + 2 * yz, w2 - x2 - y2 + z2,
    )
    rot216 = jnp.concatenate(comps, axis=1)                # (tm, 216) f32

    # -------- FullPose MLP: composed (rot -> conv0 -> conv1 -> fc1) ----------
    # wmain already folds both 1x1 convs and the channel-major flatten.
    fh1 = jnp.maximum(
        jnp.dot(rot216.astype(bf16), wmain_ref[...],
                preferred_element_type=f32) + bf1_ref[...], 0.0)     # (tm,1024)
    fh2 = jnp.maximum(
        jnp.dot(fh1.astype(bf16), wf2_ref[...],
                preferred_element_type=f32) + bf2_ref[...], 0.0)     # (tm,1024)
    # Final Linear(1024,1) as VPU multiply + XLU lane reduce (exact f32).
    full_col = jnp.sum(fh2 * wf3_ref[...], axis=-1, keepdims=True)   # (tm,1)

    # -------- ShapeDiscriminator MLP: 10 -> 5 -> 1 ---------------------------
    sh1 = jnp.maximum(
        jnp.dot(shp_ref[...], ws1_ref[...],
                preferred_element_type=f32) + bs1_ref[...], 0.0)     # (tm,5)
    shape_col = jnp.sum(sh1 * ws2_ref[...], axis=-1, keepdims=True)  # (tm,1)

    # -------- 23 per-joint heads, composed through the convs (exact f32) -----
    heads = jnp.dot(rot216, wpose_ref[...],
                    preferred_element_type=f32)                      # (tm,128)

    # -------- assemble lane-dense (tm, 128) output ---------------------------
    lane = jax.lax.broadcasted_iota(jnp.int32, heads.shape, 1)
    out = heads + b128_ref[...]
    out = out + jnp.where(lane == N_POSE_JOINTS, full_col, 0.0)
    out = out + jnp.where(lane == N_POSE_JOINTS + 1, shape_col, 0.0)
    out_ref[...] = out


def pose_shape_discriminator(thetas, params):
    """Forward of PoseShapeDiscriminator. thetas: (B, 85) f32 -> (B, 25)."""
    B = thetas.shape[0]
    thetas = thetas.astype(jnp.float32)
    # glue: split theta into pose axis-angle components and SMPL betas
    poses = thetas[:, 3:75].reshape(B, N_JOINTS, 3)
    pose3 = jnp.transpose(poses, (2, 0, 1))                # (3, B, 24)
    shapes = thetas[:, 75:85]                              # (B, 10)

    # batch tiling: 256-row tiles fill the MXU; weights stay VMEM resident.
    tm = min(256, _round_up(B, 8))
    Bp = _round_up(B, tm)
    if Bp != B:
        pad = Bp - B
        pose3 = jnp.pad(pose3, ((0, 0), (0, pad), (0, 0)))
        shapes = jnp.pad(shapes, ((0, pad), (0, 0)))
    grid = (Bp // tm,)

    def wspec(shape):
        nd = len(shape)
        return pl.BlockSpec(shape, lambda i, _nd=nd: (0,) * _nd)

    weights = (
        params["wmain"], params["bf1"], params["wpose"],
        params["wf2"], params["bf2"],
        params["ws1"], params["bs1"],
        params["wf3row"], params["ws2row"], params["bias128"],
    )
    in_specs = ([pl.BlockSpec((3, tm, N_JOINTS), lambda i: (0, i, 0)),
                 pl.BlockSpec((tm, BETA), lambda i: (i, 0))]
                + [wspec(w.shape) for w in weights])

    out = pl.pallas_call(
        _pose_shape_disc_kernel,
        out_shape=jax.ShapeDtypeStruct((Bp, OUT_PAD), jnp.float32),
        grid=grid,
        in_specs=in_specs,
        out_specs=pl.BlockSpec((tm, OUT_PAD), lambda i: (i, 0)),
        compiler_params=pltpu.CompilerParams(
            dimension_semantics=("parallel",),
            vmem_limit_bytes=32 * 1024 * 1024,
        ),
    )(pose3, shapes, *weights)
    return out[:B, :N_OUT]


# ------------------------------ parameters -----------------------------------
def _sn(w2d):
    """Exact spectral normalization (limit of torch's power iteration)."""
    s = np.linalg.svd(np.asarray(w2d), compute_uv=False)[0]
    return (w2d / s).astype(jnp.float32)


def init_params(key):
    ks = jax.random.split(key, 16)
    std = 0.02
    f32 = jnp.float32

    # PoseDiscriminator([9, 32, 32, 1]) -- two spectral-normed 1x1 Conv2d
    Wc0 = _sn(jax.random.normal(ks[0], (32, 9), f32) * std)       # (out, in)
    bc0 = jax.random.normal(ks[1], (32,), f32) * std
    Wc1 = _sn(jax.random.normal(ks[2], (32, 32), f32) * std)
    bc1 = jax.random.normal(ks[3], (32,), f32) * std
    # 23 spectral-normed Linear(32, 1)
    Wfc = jax.random.normal(ks[4], (23, 1, 32), f32) * std
    Wfc = Wfc / jnp.linalg.norm(Wfc, axis=-1, keepdims=True)      # sigma of (1,32) row
    bfc = jax.random.normal(ks[5], (23,), f32) * std

    # FullPoseDiscriminator: fc_layers [736, 1024, 1024, 1], ReLU, ReLU, -
    Wf1 = _sn(jax.random.normal(ks[6], (1024, 736), f32) * std)
    bf1 = jax.random.normal(ks[7], (1024,), f32) * std
    Wf2 = _sn(jax.random.normal(ks[8], (1024, 1024), f32) * std)
    bf2 = jax.random.normal(ks[9], (1024,), f32) * std
    Wf3 = _sn(jax.random.normal(ks[10], (1, 1024), f32) * std)
    bf3 = jax.random.normal(ks[11], (1,), f32) * std

    # ShapeDiscriminator: fc_layers [10, 5, 1], ReLU, -
    Ws1 = _sn(jax.random.normal(ks[12], (5, 10), f32) * std)
    bs1 = jax.random.normal(ks[13], (5,), f32) * std
    Ws2 = _sn(jax.random.normal(ks[14], (1, 5), f32) * std)
    bs2 = jax.random.normal(ks[15], (1,), f32) * std

    # ------------- fold the linear prefix (NumPy glue, float64) --------------
    # No activation between conv_0 and conv_1 in VIBE's PoseDiscriminator, so
    # h2_j = Wcc @ rot_j + bcc with Wcc = Wc1 @ Wc0, bcc = Wc1 @ bc0 + bc1.
    Wc0n = np.asarray(Wc0, np.float64)
    bc0n = np.asarray(bc0, np.float64)
    Wc1n = np.asarray(Wc1, np.float64)
    bc1n = np.asarray(bc1, np.float64)
    Wfcn = np.asarray(Wfc, np.float64)[:, 0, :]          # (23, 32)
    bfcn = np.asarray(bfc, np.float64)
    Wf1n = np.asarray(Wf1, np.float64)                   # (1024, 736)
    bf1n = np.asarray(bf1, np.float64)

    Wcc = Wc1n @ Wc0n                                    # (32, 9)
    bcc = Wc1n @ bc0n + bc1n                             # (32,)

    # torch flatten of internal_outputs (B, 32, 1, 23) is channel-major:
    # flat[c*23 + jj] = h2[joint jj+1, channel c].
    Wf1r = Wf1n.reshape(FULL_HID, C_HID, N_POSE_JOINTS)  # [o, c, jj]

    # Composed FullPose layer-1 weight over the packed rot216 layout
    # (lane index = k*24 + j;  joint 0 rows stay zero).
    A = np.einsum("ck,ocj->kjo", Wcc, Wf1r)              # (9, 23, 1024)
    wmain = np.zeros((K216, FULL_HID), np.float64)
    for k in range(9):
        wmain[k * N_JOINTS + 1: k * N_JOINTS + 1 + N_POSE_JOINTS, :] = A[k]
    bf1_eff = bf1n + np.einsum("ocj,c->o", Wf1r, bcc)    # (1024,)

    # Composed 23 per-joint heads -> output columns 0..22 (exact f32 path).
    P = np.einsum("jc,ck->kj", Wfcn, Wcc)                # (9, 23)
    wpose = np.zeros((K216, OUT_PAD), np.float64)
    for k in range(9):
        for jj in range(N_POSE_JOINTS):
            wpose[k * N_JOINTS + 1 + jj, jj] = P[k, jj]
    bfc_eff = Wfcn @ bcc + bfcn                          # (23,)

    # Combined output bias over the padded 128-lane output.
    bias128 = np.zeros((1, OUT_PAD), np.float64)
    bias128[0, :N_POSE_JOINTS] = bfc_eff
    bias128[0, N_POSE_JOINTS] = np.asarray(bf3, np.float64)[0]
    bias128[0, N_POSE_JOINTS + 1] = np.asarray(bs2, np.float64)[0]

    kernel_params = dict(
        wmain=jnp.asarray(wmain, dtype=jnp.bfloat16),           # (216, 1024)
        bf1=jnp.asarray(bf1_eff, dtype=jnp.float32).reshape(1, FULL_HID),
        wpose=jnp.asarray(wpose, dtype=jnp.float32),            # (216, 128)
        wf2=jnp.asarray(np.asarray(Wf2).T, dtype=jnp.bfloat16), # (1024, 1024)
        bf2=jnp.asarray(bf2).reshape(1, FULL_HID),
        ws1=jnp.asarray(np.asarray(Ws1).T, dtype=jnp.float32),  # (10, 5)
        bs1=jnp.asarray(bs1).reshape(1, 5),
        wf3row=jnp.asarray(Wf3, dtype=jnp.float32).reshape(1, FULL_HID),
        ws2row=jnp.asarray(Ws2, dtype=jnp.float32).reshape(1, 5),
        bias128=jnp.asarray(bias128, dtype=jnp.float32),        # (1, 128)
    )
    torch_params = dict(Wc0=Wc0, bc0=bc0, Wc1=Wc1, bc1=bc1, Wfc=Wfc, bfc=bfc,
                        Wf1=Wf1, bf1=bf1, Wf2=Wf2, bf2=bf2, Wf3=Wf3, bf3=bf3,
                        Ws1=Ws1, bs1=bs1, Ws2=Ws2, bs2=bs2)
    return kernel_params, torch_params


# ------------------ pure-JAX reference (mirrors the torch code) --------------
def reference_forward(thetas, tp):
    B = thetas.shape[0]
    poses = thetas[:, 3:75]
    shapes = thetas[:, 75:85]
    aa = poses.reshape(-1, 3)
    l1 = jnp.linalg.norm(aa + EPS, axis=1, keepdims=True)
    normalized = aa / l1
    half = l1 * 0.5
    quat = jnp.concatenate([jnp.cos(half), jnp.sin(half) * normalized], axis=1)
    quat = quat / jnp.linalg.norm(quat, axis=1, keepdims=True)
    w, x, y, z = quat[:, 0], quat[:, 1], quat[:, 2], quat[:, 3]
    w2, x2, y2, z2 = w * w, x * x, y * y, z * z
    wx, wy, wz = w * x, w * y, w * z
    xy, xz, yz = x * y, x * z, y * z
    rot = jnp.stack([
        w2 + x2 - y2 - z2, 2 * xy - 2 * wz, 2 * wy + 2 * xz,
        2 * wz + 2 * xy, w2 - x2 + y2 - z2, 2 * yz - 2 * wx,
        2 * xz - 2 * wy, 2 * wx + 2 * yz, w2 - x2 - y2 + z2], axis=1)
    rot = rot.reshape(B, 24, 9)[:, 1:, :]                        # (B, 23, 9)
    h1 = jnp.einsum("bjk,ck->bjc", rot, tp["Wc0"]) + tp["bc0"][None, None, :]
    h2 = jnp.einsum("bjc,dc->bjd", h1, tp["Wc1"]) + tp["bc1"][None, None, :]
    pose_disc = jnp.einsum("bjc,jc->bj", h2, tp["Wfc"][:, 0, :]) + tp["bfc"][None, :]
    flat = jnp.transpose(h2, (0, 2, 1)).reshape(B, 32 * 23)      # channel-major flatten
    fh1 = jax.nn.relu(flat @ tp["Wf1"].T + tp["bf1"])
    fh2 = jax.nn.relu(fh1 @ tp["Wf2"].T + tp["bf2"])
    full_disc = fh2 @ tp["Wf3"].T + tp["bf3"]
    sh1 = jax.nn.relu(shapes @ tp["Ws1"].T + tp["bs1"])
    shape_disc = sh1 @ tp["Ws2"].T + tp["bs2"]
    return jnp.concatenate([pose_disc, full_disc, shape_disc], axis=1)


if __name__ == "__main__":
    key = jax.random.PRNGKey(0)
    k_params, k_inputs = jax.random.split(key)
    params, torch_params = init_params(k_params)

    B = 8
    thetas = jax.random.normal(k_inputs, (B, 85), jnp.float32) * 0.5  # (B, 85) SMPL theta

    out = pose_shape_discriminator(thetas, params)
    out = jax.block_until_ready(out)

    ref = reference_forward(thetas, torch_params)
    np.testing.assert_allclose(np.asarray(out), np.asarray(ref), rtol=2e-3, atol=2e-3)
    print("KERNEL_OK")
</pallas_src>

<mosaic_0001>
module attributes {stable_mosaic.version = 11 : i64} {
  func.func @_pose_shape_disc_kernel(%arg0: i32, %arg1: memref<3x8x24xf32, #tpu.memory_space<vmem>>, %arg2: memref<8x10xf32, #tpu.memory_space<vmem>>, %arg3: memref<216x1024xbf16, #tpu.memory_space<vmem>>, %arg4: memref<1x1024xf32, #tpu.memory_space<vmem>>, %arg5: memref<216x128xf32, #tpu.memory_space<vmem>>, %arg6: memref<1024x1024xbf16, #tpu.memory_space<vmem>>, %arg7: memref<1x1024xf32, #tpu.memory_space<vmem>>, %arg8: memref<10x5xf32, #tpu.memory_space<vmem>>, %arg9: memref<1x5xf32, #tpu.memory_space<vmem>>, %arg10: memref<1x1024xf32, #tpu.memory_space<vmem>>, %arg11: memref<1x5xf32, #tpu.memory_space<vmem>>, %arg12: memref<1x128xf32, #tpu.memory_space<vmem>>, %arg13: memref<8x128xf32, #tpu.memory_space<vmem>>) attributes {dimension_semantics = [#tpu.dimension_semantics<parallel>], iteration_bounds = array<i64: 1>, scalar_prefetch = 0 : i64, scratch_operands = 0 : i64, tpu.core_type = #tpu.core_type<tc>, window_params = [{transform_indices = @transform_0, window_bounds = array<i64: 3, 8, 24>}, {transform_indices = @transform_1, window_bounds = array<i64: 8, 10>}, {pipeline_mode = #tpu.pipeline_mode<synchronous>, transform_indices = @transform_2, window_bounds = array<i64: 216, 1024>}, {pipeline_mode = #tpu.pipeline_mode<synchronous>, transform_indices = @transform_3, window_bounds = array<i64: 1, 1024>}, {pipeline_mode = #tpu.pipeline_mode<synchronous>, transform_indices = @transform_4, window_bounds = array<i64: 216, 128>}, {pipeline_mode = #tpu.pipeline_mode<synchronous>, transform_indices = @transform_5, window_bounds = array<i64: 1024, 1024>}, {pipeline_mode = #tpu.pipeline_mode<synchronous>, transform_indices = @transform_6, window_bounds = array<i64: 1, 1024>}, {pipeline_mode = #tpu.pipeline_mode<synchronous>, transform_indices = @transform_7, window_bounds = array<i64: 10, 5>}, {pipeline_mode = #tpu.pipeline_mode<synchronous>, transform_indices = @transform_8, window_bounds = array<i64: 1, 5>}, {pipeline_mode = #tpu.pipeline_mode<synchronous>, transform_indices = @transform_9, window_bounds = array<i64: 1, 1024>}, {pipeline_mode = #tpu.pipeline_mode<synchronous>, transform_indices = @transform_10, window_bounds = array<i64: 1, 5>}, {pipeline_mode = #tpu.pipeline_mode<synchronous>, transform_indices = @transform_11, window_bounds = array<i64: 1, 128>}, {transform_indices = @transform_12, window_bounds = array<i64: 8, 128>}]} {
    %c0 = arith.constant 0 : index
    %c0_0 = arith.constant 0 : index
    %c0_1 = arith.constant 0 : index
    %0 = vector.load %arg1[%c0, %c0_0, %c0_1] : memref<3x8x24xf32, #tpu.memory_space<vmem>>, vector<1x8x24xf32>
    %1 = vector.shape_cast %0 : vector<1x8x24xf32> to vector<8x24xf32>
    %c1 = arith.constant 1 : index
    %c0_2 = arith.constant 0 : index
    %c0_3 = arith.constant 0 : index
    %2 = vector.load %arg1[%c1, %c0_2, %c0_3] : memref<3x8x24xf32, #tpu.memory_space<vmem>>, vector<1x8x24xf32>
    %3 = vector.shape_cast %2 : vector<1x8x24xf32> to vector<8x24xf32>
    %c2 = arith.constant 2 : index
    %c0_4 = arith.constant 0 : index
    %c0_5 = arith.constant 0 : index
    %4 = vector.load %arg1[%c2, %c0_4, %c0_5] : memref<3x8x24xf32, #tpu.memory_space<vmem>>, vector<1x8x24xf32>
    %5 = vector.shape_cast %4 : vector<1x8x24xf32> to vector<8x24xf32>
    %cst = arith.constant 9.99999993E-9 : f32
    %6 = vector.broadcast %cst : f32 to vector<8x24xf32>
    %7 = arith.addf %1, %6 : vector<8x24xf32>
    %8 = arith.mulf %7, %7 : vector<8x24xf32>
    %cst_6 = arith.constant 9.99999993E-9 : f32
    %9 = vector.broadcast %cst_6 : f32 to vector<8x24xf32>
    %10 = arith.addf %3, %9 : vector<8x24xf32>
    %11 = arith.mulf %10, %10 : vector<8x24xf32>
    %12 = arith.addf %8, %11 : vector<8x24xf32>
    %cst_7 = arith.constant 9.99999993E-9 : f32
    %13 = vector.broadcast %cst_7 : f32 to vector<8x24xf32>
    %14 = arith.addf %5, %13 : vector<8x24xf32>
    %15 = arith.mulf %14, %14 : vector<8x24xf32>
    %16 = arith.addf %12, %15 : vector<8x24xf32>
    %17 = math.sqrt %16 : vector<8x24xf32>
    %cst_8 = arith.constant 1.000000e+00 : f32
    %18 = vector.broadcast %cst_8 : f32 to vector<8x24xf32>
    %19 = arith.divf %18, %17 : vector<8x24xf32>
    %20 = arith.mulf %1, %19 : vector<8x24xf32>
    %21 = arith.mulf %3, %19 : vector<8x24xf32>
    %22 = arith.mulf %5, %19 : vector<8x24xf32>
    %cst_9 = arith.constant 5.000000e-01 : f32
    %23 = vector.broadcast %cst_9 : f32 to vector<8x24xf32>
    %24 = arith.mulf %17, %23 : vector<8x24xf32>
    %25 = math.cos %24 : vector<8x24xf32>
    %26 = math.sin %24 : vector<8x24xf32>
    %27 = arith.mulf %26, %20 : vector<8x24xf32>
    %28 = arith.mulf %26, %21 : vector<8x24xf32>
    %29 = arith.mulf %26, %22 : vector<8x24xf32>
    %30 = arith.mulf %25, %25 : vector<8x24xf32>
    %31 = arith.mulf %27, %27 : vector<8x24xf32>
    %32 = arith.addf %30, %31 : vector<8x24xf32>
    %33 = arith.mulf %28, %28 : vector<8x24xf32>
    %34 = arith.addf %32, %33 : vector<8x24xf32>
    %35 = arith.mulf %29, %29 : vector<8x24xf32>
    %36 = arith.addf %34, %35 : vector<8x24xf32>
    %37 = math.sqrt %36 : vector<8x24xf32>
    %cst_10 = arith.constant 1.000000e+00 : f32
    %38 = vector.broadcast %cst_10 : f32 to vector<8x24xf32>
    %39 = arith.divf %38, %37 : vector<8x24xf32>
    %40 = arith.mulf %25, %39 : vector<8x24xf32>
    %41 = arith.mulf %27, %39 : vector<8x24xf32>
    %42 = arith.mulf %28, %39 : vector<8x24xf32>
    %43 = arith.mulf %29, %39 : vector<8x24xf32>
    %44 = arith.mulf %40, %40 : vector<8x24xf32>
    %45 = arith.mulf %41, %41 : vector<8x24xf32>
    %46 = arith.mulf %42, %42 : vector<8x24xf32>
    %47 = arith.mulf %43, %43 : vector<8x24xf32>
    %48 = arith.mulf %40, %41 : vector<8x24xf32>
    %49 = arith.mulf %40, %42 : vector<8x24xf32>
    %50 = arith.mulf %40, %43 : vector<8x24xf32>
    %51 = arith.mulf %41, %42 : vector<8x24xf32>
    %52 = arith.mulf %41, %43 : vector<8x24xf32>
    %53 = arith.mulf %42, %43 : vector<8x24xf32>
    %54 = arith.addf %44, %45 : vector<8x24xf32>
    %55 = arith.subf %54, %46 : vector<8x24xf32>
    %56 = arith.subf %55, %47 : vector<8x24xf32>
    %cst_11 = arith.constant 2.000000e+00 : f32
    %57 = vector.broadcast %cst_11 : f32 to vector<8x24xf32>
    %58 = arith.mulf %57, %51 : vector<8x24xf32>
    %cst_12 = arith.constant 2.000000e+00 : f32
    %59 = vector.broadcast %cst_12 : f32 to vector<8x24xf32>
    %60 = arith.mulf %59, %50 : vector<8x24xf32>
    %61 = arith.subf %58, %60 : vector<8x24xf32>
    %cst_13 = arith.constant 2.000000e+00 : f32
    %62 = vector.broadcast %cst_13 : f32 to vector<8x24xf32>
    %63 = arith.mulf %62, %49 : vector<8x24xf32>
    %cst_14 = arith.constant 2.000000e+00 : f32
    %64 = vector.broadcast %cst_14 : f32 to vector<8x24xf32>
    %65 = arith.mulf %64, %52 : vector<8x24xf32>
    %66 = arith.addf %63, %65 : vector<8x24xf32>
    %cst_15 = arith.constant 2.000000e+00 : f32
    %67 = vector.broadcast %cst_15 : f32 to vector<8x24xf32>
    %68 = arith.mulf %67, %50 : vector<8x24xf32>
    %cst_16 = arith.constant 2.000000e+00 : f32
    %69 = vector.broadcast %cst_16 : f32 to vector<8x24xf32>
    %70 = arith.mulf %69, %51 : vector<8x24xf32>
    %71 = arith.addf %68, %70 : vector<8x24xf32>
    %72 = arith.subf %44, %45 : vector<8x24xf32>
    %73 = arith.addf %72, %46 : vector<8x24xf32>
    %74 = arith.subf %73, %47 : vector<8x24xf32>
    %cst_17 = arith.constant 2.000000e+00 : f32
    %75 = vector.broadcast %cst_17 : f32 to vector<8x24xf32>
    %76 = arith.mulf %75, %53 : vector<8x24xf32>
    %cst_18 = arith.constant 2.000000e+00 : f32
    %77 = vector.broadcast %cst_18 : f32 to vector<8x24xf32>
    %78 = arith.mulf %77, %48 : vector<8x24xf32>
    %79 = arith.subf %76, %78 : vector<8x24xf32>
    %cst_19 = arith.constant 2.000000e+00 : f32
    %80 = vector.broadcast %cst_19 : f32 to vector<8x24xf32>
    %81 = arith.mulf %80, %52 : vector<8x24xf32>
    %cst_20 = arith.constant 2.000000e+00 : f32
    %82 = vector.broadcast %cst_20 : f32 to vector<8x24xf32>
    %83 = arith.mulf %82, %49 : vector<8x24xf32>
    %84 = arith.subf %81, %83 : vector<8x24xf32>
    %cst_21 = arith.constant 2.000000e+00 : f32
    %85 = vector.broadcast %cst_21 : f32 to vector<8x24xf32>
    %86 = arith.mulf %85, %48 : vector<8x24xf32>
    %cst_22 = arith.constant 2.000000e+00 : f32
    %87 = vector.broadcast %cst_22 : f32 to vector<8x24xf32>
    %88 = arith.mulf %87, %53 : vector<8x24xf32>
    %89 = arith.addf %86, %88 : vector<8x24xf32>
    %90 = arith.subf %44, %45 : vector<8x24xf32>
    %91 = arith.subf %90, %46 : vector<8x24xf32>
    %92 = arith.addf %91, %47 : vector<8x24xf32>
    %93 = tpu.concatenate %56, %61, %66, %71, %74, %79, %84, %89, %92 in 1 : vector<8x24xf32>, vector<8x24xf32>, vector<8x24xf32>, vector<8x24xf32>, vector<8x24xf32>, vector<8x24xf32>, vector<8x24xf32>, vector<8x24xf32>, vector<8x24xf32> -> vector<8x216xf32>
    %94 = arith.truncf %93 : vector<8x216xf32> to vector<8x216xbf16>
    %c0_23 = arith.constant 0 : index
    %c0_24 = arith.constant 0 : index
    %95 = vector.load %arg3[%c0_23, %c0_24] : memref<216x1024xbf16, #tpu.memory_space<vmem>>, vector<216x1024xbf16>
    %cst_25 = arith.constant dense<0.000000e+00> : vector<8x1024xf32>
    %96 = tpu.matmul %94, %95, %cst_25 {dimension_numbers = #tpu.dot_dimension_numbers<[1], [0], [0], [1], [0, 0, 1, 1], [], []>} : vector<8x216xbf16>, vector<216x1024xbf16>, vector<8x1024xf32> -> vector<8x1024xf32>
    %c0_26 = arith.constant 0 : index
    %c0_27 = arith.constant 0 : index
    %97 = vector.load %arg4[%c0_26, %c0_27] : memref<1x1024xf32, #tpu.memory_space<vmem>>, vector<1x1024xf32>
    %98 = vector.broadcast %97 : vector<1x1024xf32> to vector<8x1024xf32>
    %99 = arith.addf %96, %98 : vector<8x1024xf32>
    %cst_28 = arith.constant 0.000000e+00 : f32
    %100 = vector.broadcast %cst_28 : f32 to vector<8x1024xf32>
    %101 = arith.maximumf %99, %100 : vector<8x1024xf32>
    %102 = arith.truncf %101 : vector<8x1024xf32> to vector<8x1024xbf16>
    %c0_29 = arith.constant 0 : index
    %c0_30 = arith.constant 0 : index
    %103 = vector.load %arg6[%c0_29, %c0_30] : memref<1024x1024xbf16, #tpu.memory_space<vmem>>, vector<1024x1024xbf16>
    %cst_31 = arith.constant dense<0.000000e+00> : vector<8x1024xf32>
    %104 = tpu.matmul %102, %103, %cst_31 {dimension_numbers = #tpu.dot_dimension_numbers<[1], [0], [0], [1], [0, 0, 1, 1], [], []>} : vector<8x1024xbf16>, vector<1024x1024xbf16>, vector<8x1024xf32> -> vector<8x1024xf32>
    %c0_32 = arith.constant 0 : index
    %c0_33 = arith.constant 0 : index
    %105 = vector.load %arg7[%c0_32, %c0_33] : memref<1x1024xf32, #tpu.memory_space<vmem>>, vector<1x1024xf32>
    %106 = vector.broadcast %105 : vector<1x1024xf32> to vector<8x1024xf32>
    %107 = arith.addf %104, %106 : vector<8x1024xf32>
    %cst_34 = arith.constant 0.000000e+00 : f32
    %108 = vector.broadcast %cst_34 : f32 to vector<8x1024xf32>
    %109 = arith.maximumf %107, %108 : vector<8x1024xf32>
    %c0_35 = arith.constant 0 : index
    %c0_36 = arith.constant 0 : index
    %110 = vector.load %arg10[%c0_35, %c0_36] : memref<1x1024xf32, #tpu.memory_space<vmem>>, vector<1x1024xf32>
    %111 = vector.broadcast %110 : vector<1x1024xf32> to vector<8x1024xf32>
    %112 = arith.mulf %109, %111 : vector<8x1024xf32>
    %cst_37 = arith.constant dense<0.000000e+00> : vector<8xf32>
    %113 = vector.multi_reduction <add>, %112, %cst_37 [1] : vector<8x1024xf32> to vector<8xf32>
    %114 = vector.shape_cast %113 : vector<8xf32> to vector<8x1xf32>
    %c0_38 = arith.constant 0 : index
    %c0_39 = arith.constant 0 : index
    %115 = vector.load %arg2[%c0_38, %c0_39] : memref<8x10xf32, #tpu.memory_space<vmem>>, vector<8x10xf32>
    %c0_40 = arith.constant 0 : index
    %c0_41 = arith.constant 0 : index
    %116 = vector.load %arg8[%c0_40, %c0_41] : memref<10x5xf32, #tpu.memory_space<vmem>>, vector<10x5xf32>
    %cst_42 = arith.constant dense<0.000000e+00> : vector<8x5xf32>
    %117 = tpu.matmul %115, %116, %cst_42 {dimension_numbers = #tpu.dot_dimension_numbers<[1], [0], [0], [1], [0, 0, 1, 1], [], []>} : vector<8x10xf32>, vector<10x5xf32>, vector<8x5xf32> -> vector<8x5xf32>
    %c0_43 = arith.constant 0 : index
    %c0_44 = arith.constant 0 : index
    %118 = vector.load %arg9[%c0_43, %c0_44] : memref<1x5xf32, #tpu.memory_space<vmem>>, vector<1x5xf32>
    %119 = vector.broadcast %118 : vector<1x5xf32> to vector<8x5xf32>
    %120 = arith.addf %117, %119 : vector<8x5xf32>
    %cst_45 = arith.constant 0.000000e+00 : f32
    %121 = vector.broadcast %cst_45 : f32 to vector<8x5xf32>
    %122 = arith.maximumf %120, %121 : vector<8x5xf32>
    %c0_46 = arith.constant 0 : index
    %c0_47 = arith.constant 0 : index
    %123 = vector.load %arg11[%c0_46, %c0_47] : memref<1x5xf32, #tpu.memory_space<vmem>>, vector<1x5xf32>
    %124 = vector.broadcast %123 : vector<1x5xf32> to vector<8x5xf32>
    %125 = arith.mulf %122, %124 : vector<8x5xf32>
    %cst_48 = arith.constant dense<0.000000e+00> : vector<8xf32>
    %126 = vector.multi_reduction <add>, %125, %cst_48 [1] : vector<8x5xf32> to vector<8xf32>
    %127 = vector.shape_cast %126 : vector<8xf32> to vector<8x1xf32>
    %c0_49 = arith.constant 0 : index
    %c0_50 = arith.constant 0 : index
    %128 = vector.load %arg5[%c0_49, %c0_50] : memref<216x128xf32, #tpu.memory_space<vmem>>, vector<216x128xf32>
    %cst_51 = arith.constant dense<0.000000e+00> : vector<8x128xf32>
    %129 = tpu.matmul %93, %128, %cst_51 {dimension_numbers = #tpu.dot_dimension_numbers<[1], [0], [0], [1], [0, 0, 1, 1], [], []>} : vector<8x216xf32>, vector<216x128xf32>, vector<8x128xf32> -> vector<8x128xf32>
    %130 = tpu.iota {dimensions = array<i32: 1>} : vector<8x128xi32>
    %c0_52 = arith.constant 0 : index
    %c0_53 = arith.constant 0 : index
    %131 = vector.load %arg12[%c0_52, %c0_53] : memref<1x128xf32, #tpu.memory_space<vmem>>, vector<1x128xf32>
    %132 = vector.broadcast %131 : vector<1x128xf32> to vector<8x128xf32>
    %133 = arith.addf %129, %132 : vector<8x128xf32>
    %c23_i32 = arith.constant 23 : i32
    %134 = vector.broadcast %c23_i32 : i32 to vector<8x128xi32>
    %135 = arith.cmpi eq, %130, %134 : vector<8x128xi32>
    %cst_54 = arith.constant 0.000000e+00 : f32
    %136 = vector.shape_cast %114 : vector<8x1xf32> to vector<8x1xf32>
    %137 = vector.broadcast %136 : vector<8x1xf32> to vector<8x128xf32>
    %138 = vector.broadcast %cst_54 : f32 to vector<8x128xf32>
    %139 = arith.select %135, %137, %138 : vector<8x128xi1>, vector<8x128xf32>
    %140 = arith.addf %133, %139 : vector<8x128xf32>
    %c24_i32 = arith.constant 24 : i32
    %141 = vector.broadcast %c24_i32 : i32 to vector<8x128xi32>
    %142 = arith.cmpi eq, %130, %141 : vector<8x128xi32>
    %cst_55 = arith.constant 0.000000e+00 : f32
    %143 = vector.shape_cast %127 : vector<8x1xf32> to vector<8x1xf32>
    %144 = vector.broadcast %143 : vector<8x1xf32> to vector<8x128xf32>
    %145 = vector.broadcast %cst_55 : f32 to vector<8x128xf32>
    %146 = arith.select %142, %144, %145 : vector<8x128xi1>, vector<8x128xf32>
    %147 = arith.addf %140, %146 : vector<8x128xf32>
    %c0_56 = arith.constant 0 : index
    %c0_57 = arith.constant 0 : index
    %148 = vector.load %arg13[%c0_56, %c0_57] : memref<8x128xf32, #tpu.memory_space<vmem>>, vector<8x128xf32>
    tpu.vector_store %arg13[%c0_56, %c0_57], %147 {strides = array<i32>} : memref<8x128xf32, #tpu.memory_space<vmem>>, vector<8x128xf32>,
    return
  }
  func.func @transform_0(%arg0: i32) -> (i32, i32, i32) {
    %c0_i32 = arith.constant 0 : i32
    %c0_i32_0 = arith.constant 0 : i32
    %c0_i32_1 = arith.constant 0 : i32
    return %c0_i32, %arg0, %c0_i32_0 : i32, i32, i32
  }
  func.func @transform_1(%arg0: i32) -> (i32, i32) {
    %c0_i32 = arith.constant 0 : i32
    %c0_i32_0 = arith.constant 0 : i32
    return %arg0, %c0_i32 : i32, i32
  }
  func.func @transform_2(%arg0: i32) -> (i32, i32) {
    %c0_i32 = arith.constant 0 : i32
    %c0_i32_0 = arith.constant 0 : i32
    %c0_i32_1 = arith.constant 0 : i32
    return %c0_i32, %c0_i32_0 : i32, i32
  }
  func.func @transform_3(%arg0: i32) -> (i32, i32) {
    %c0_i32 = arith.constant 0 : i32
    %c0_i32_0 = arith.constant 0 : i32
    %c0_i32_1 = arith.constant 0 : i32
    return %c0_i32, %c0_i32_0 : i32, i32
  }
  func.func @transform_4(%arg0: i32) -> (i32, i32) {
    %c0_i32 = arith.constant 0 : i32
    %c0_i32_0 = arith.constant 0 : i32
    %c0_i32_1 = arith.constant 0 : i32
    return %c0_i32, %c0_i32_0 : i32, i32
  }
  func.func @transform_5(%arg0: i32) -> (i32, i32) {
    %c0_i32 = arith.constant 0 : i32
    %c0_i32_0 = arith.constant 0 : i32
    %c0_i32_1 = arith.constant 0 : i32
    return %c0_i32, %c0_i32_0 : i32, i32
  }
  func.func @transform_6(%arg0: i32) -> (i32, i32) {
    %c0_i32 = arith.constant 0 : i32
    %c0_i32_0 = arith.constant 0 : i32
    %c0_i32_1 = arith.constant 0 : i32
    return %c0_i32, %c0_i32_0 : i32, i32
  }
  func.func @transform_7(%arg0: i32) -> (i32, i32) {
    %c0_i32 = arith.constant 0 : i32
    %c0_i32_0 = arith.constant 0 : i32
    %c0_i32_1 = arith.constant 0 : i32
    return %c0_i32, %c0_i32_0 : i32, i32
  }
  func.func @transform_8(%arg0: i32) -> (i32, i32) {
    %c0_i32 = arith.constant 0 : i32
    %c0_i32_0 = arith.constant 0 : i32
    %c0_i32_1 = arith.constant 0 : i32
    return %c0_i32, %c0_i32_0 : i32, i32
  }
  func.func @transform_9(%arg0: i32) -> (i32, i32) {
    %c0_i32 = arith.constant 0 : i32
    %c0_i32_0 = arith.constant 0 : i32
    %c0_i32_1 = arith.constant 0 : i32
    return %c0_i32, %c0_i32_0 : i32, i32
  }
  func.func @transform_10(%arg0: i32) -> (i32, i32) {
    %c0_i32 = arith.constant 0 : i32
    %c0_i32_0 = arith.constant 0 : i32
    %c0_i32_1 = arith.constant 0 : i32
    return %c0_i32, %c0_i32_0 : i32, i32
  }
  func.func @transform_11(%arg0: i32) -> (i32, i32) {
    %c0_i32 = arith.constant 0 : i32
    %c0_i32_0 = arith.constant 0 : i32
    %c0_i32_1 = arith.constant 0 : i32
    return %c0_i32, %c0_i32_0 : i32, i32
  }
  func.func @transform_12(%arg0: i32) -> (i32, i32) {
    %c0_i32 = arith.constant 0 : i32
    %c0_i32_0 = arith.constant 0 : i32
    return %arg0, %c0_i32 : i32, i32
  }
}

</mosaic_0001>

<llo_original>
// kernel: tpu_custom_call.1
$region0: #{tpu_custom_call.1}
  #allocation0 [shape = 'u32[]', space=smem, size = 0x4, offset = 0x4, fixed_abs, tag = 'smem constant byte address 0x4 - core index']
  #allocation1 [shape = 'u32[144,128]{1,0:T(1,128)}', space=vmem, size = 0x12000, scoped, tag = 'internal scratch']
  %s0 = inlined_call_operand.hbm [shape: f32[3,8,24], index: 0, kind: input, shape index: {}]
  %s1 = inlined_call_operand.hbm [shape: f32[8,10], index: 1, kind: input, shape index: {}]
  %s2 = inlined_call_operand.hbm [shape: bf16[216,1024], index: 2, kind: input, shape index: {}]
  %s3 = inlined_call_operand.hbm [shape: f32[1,1024], index: 3, kind: input, shape index: {}]
  %s4 = inlined_call_operand.hbm [shape: f32[216,128], index: 4, kind: input, shape index: {}]
  %s5 = inlined_call_operand.hbm [shape: bf16[1024,1024], index: 5, kind: input, shape index: {}]
  %s6 = inlined_call_operand.hbm [shape: f32[1,1024], index: 6, kind: input, shape index: {}]
  %s7 = inlined_call_operand.vmem [shape: f32[10,5], index: 7, kind: input, shape index: {}]
  %s8 = inlined_call_operand.hbm [shape: f32[1,5], index: 8, kind: input, shape index: {}]
  %s9 = inlined_call_operand.hbm [shape: f32[1,1024], index: 9, kind: input, shape index: {}]
  %s10 = inlined_call_operand.hbm [shape: f32[1,5], index: 10, kind: input, shape index: {}]
  %s11 = inlined_call_operand.hbm [shape: f32[1,128], index: 11, kind: input, shape index: {}]
  %s12 = inlined_call_operand.hbm [shape: f32[8,128], index: 12, kind: output, shape index: {}]
  %s13 = sld [smem:[#allocation0]]
  $region102: #{tpu_custom_call.1} parent=0
    _
  %s15 = ssub.s32 1, %s13
  %s16 = scalar_select 0, %s15, %s13
  $region1: #{tpu_custom_call.1} parent=0
    #allocation2 [shape = 'u8[12288]{0}', space=vmem, size = 0x3000, scoped, tag = 'input window, operand 0, single buffered']
    #allocation3 [shape = 's32[1]{0}', space=sflag, size = 0x4, scoped, tag = 'scoped memory for tpu_custom_call.1']
    #allocation4 [shape = 's32[1]{0}', space=sflag, size = 0x4, scoped, tag = 'scoped memory for tpu_custom_call.1']
    #allocation5 [shape = 'u8[4096]{0}', space=vmem, size = 0x1000, scoped, tag = 'input window, operand 1, single buffered']
    #allocation6 [shape = 's32[1]{0}', space=sflag, size = 0x4, scoped, tag = 'scoped memory for tpu_custom_call.1']
    #allocation7 [shape = 'u8[442368]{0}', space=vmem, size = 0x6c000, scoped, tag = 'input window, operand 2, single buffered']
    #allocation8 [shape = 'u8[4096]{0}', space=vmem, size = 0x1000, scoped, tag = 'input window, operand 3, single buffered']
    #allocation9 [shape = 's32[1]{0}', space=sflag, size = 0x4, scoped, tag = 'scoped memory for tpu_custom_call.1']
    #allocation10 [shape = 'u8[110592]{0}', space=vmem, size = 0x1b000, scoped, tag = 'input window, operand 4, single buffered']
    #allocation11 [shape = 'u8[2097152]{0}', space=vmem, size = 0x200000, scoped, tag = 'input window, operand 5, single buffered']
    #allocation12 [shape = 's32[1]{0}', space=sflag, size = 0x4, scoped, tag = 'scoped memory for tpu_custom_call.1']
    #allocation13 [shape = 'u8[4096]{0}', space=vmem, size = 0x1000, scoped, tag = 'input window, operand 6, single buffered']
    #allocation14 [shape = 'u8[512]{0}', space=vmem, size = 0x400, scoped, tag = 'input window, operand 8, single buffered']
    #allocation15 [shape = 's32[1]{0}', space=sflag, size = 0x4, scoped, tag = 'scoped memory for tpu_custom_call.1']
    #allocation16 [shape = 'u8[4096]{0}', space=vmem, size = 0x1000, scoped, tag = 'input window, operand 9, single buffered']
    #allocation17 [shape = 'u8[512]{0}', space=vmem, size = 0x400, scoped, tag = 'input window, operand 10, single buffered']
    #allocation18 [shape = 's32[1]{0}', space=sflag, size = 0x4, scoped, tag = 'scoped memory for tpu_custom_call.1']
    #allocation19 [shape = 'u8[512]{0}', space=vmem, size = 0x400, scoped, tag = 'input window, operand 11, single buffered']
    #allocation20 [shape = 'u8[4096]{0}', space=vmem, size = 0x1000, scoped, tag = 'output window, operand 0, single buffered']
    %17 = vsyncpa [#allocation3], 0
    %18 = vsyncpa [#allocation6], 0
    %19 = vsyncpa [#allocation9], 0
    %20 = vsyncpa [#allocation12], 0
    %21 = vsyncpa [#allocation15], 0
    %22 = vsyncpa [#allocation18], 0
    %23 = vsyncpa [#allocation4], 0
    // Predicated region
    $region2: #{tpu_custom_call.1} parent=1 // pred_check
      _
    $region3: #{tpu_custom_call.1} parent=1 // pred_check_branch
      %25 = sbr.rel (0) target = $region5
    $region4: #{tpu_custom_call.1} parent=1 // pred_region
      %s27 = ssub.s32 384, 384
      %28 = vsyncadd [#allocation3], %s27
      %s29 = sshll.u32 [#allocation2], 4
      %s30 = int_to_ptr.vmem [resolvable:$true] %s29
      %35 = dma.hbm_to_vmem [thread:$0]  %s0, 384, %s30, [#allocation3], 128, 128, 8
    $region5: #{tpu_custom_call.1} parent=1 // pred_fallthru
      _
    // Predicated region
    $region6: #{tpu_custom_call.1} parent=1 // pred_check
      _
    $region7: #{tpu_custom_call.1} parent=1 // pred_check_branch
      %37 = sbr.rel (0) target = $region9
    $region8: #{tpu_custom_call.1} parent=1 // pred_region
      %s39 = ssub.s32 128, 128
      %40 = vsyncadd [#allocation6], %s39
      %s42 = sshll.u32 [#allocation5], 4
      %s43 = int_to_ptr.vmem [resolvable:$true] %s42
      %45 = dma.hbm_to_vmem [thread:$0]  %s1, 128, %s43, [#allocation6]
    $region9: #{tpu_custom_call.1} parent=1 // pred_fallthru
      _
    // Predicated region
    $region10: #{tpu_custom_call.1} parent=1 // pred_check
      _
    $region11: #{tpu_custom_call.1} parent=1 // pred_check_branch
      %47 = sbr.rel (0) target = $region13
    $region12: #{tpu_custom_call.1} parent=1 // pred_region
      %s49 = ssub.s32 13824, 13824
      %50 = vsyncadd [#allocation6], %s49
      %s51 = sshll.u32 [#allocation7], 4
      %s52 = int_to_ptr.vmem [resolvable:$true] %s51
      %57 = dma.hbm_to_vmem [thread:$0]  %s2, 13824, %s52, [#allocation6], 512, 512, 32
    $region13: #{tpu_custom_call.1} parent=1 // pred_fallthru
      _
    // Predicated region
    $region14: #{tpu_custom_call.1} parent=1 // pred_check
      _
    $region15: #{tpu_custom_call.1} parent=1 // pred_check_branch
      %59 = sbr.rel (0) target = $region17
    $region16: #{tpu_custom_call.1} parent=1 // pred_region
      %s61 = ssub.s32 128, 128
      %62 = vsyncadd [#allocation9], %s61
      %s64 = sshll.u32 [#allocation8], 4
      %s65 = int_to_ptr.vmem [resolvable:$true] %s64
      %67 = dma.hbm_to_vmem [thread:$0]  %s3, 128, %s65, [#allocation9]
    $region17: #{tpu_custom_call.1} parent=1 // pred_fallthru
      _
    // Predicated region
    $region18: #{tpu_custom_call.1} parent=1 // pred_check
      _
    $region19: #{tpu_custom_call.1} parent=1 // pred_check_branch
      %69 = sbr.rel (0) target = $region21
    $region20: #{tpu_custom_call.1} parent=1 // pred_region
      %s71 = ssub.s32 3456, 3456
      %72 = vsyncadd [#allocation9], %s71
      %s73 = sshll.u32 [#allocation10], 4
      %s74 = int_to_ptr.vmem [resolvable:$true] %s73
      %79 = dma.hbm_to_vmem [thread:$0]  %s4, 3456, %s74, [#allocation9], 128, 128, 8
    $region21: #{tpu_custom_call.1} parent=1 // pred_fallthru
      _
    // Predicated region
    $region22: #{tpu_custom_call.1} parent=1 // pred_check
      _
    $region23: #{tpu_custom_call.1} parent=1 // pred_check_branch
      %81 = sbr.rel (0) target = $region25
    $region24: #{tpu_custom_call.1} parent=1 // pred_region
      %s83 = ssub.s32 65536, 65536
      %84 = vsyncadd [#allocation12], %s83
      %s85 = sshll.u32 [#allocation11], 4
      %s86 = int_to_ptr.vmem [resolvable:$true] %s85
      %91 = dma.hbm_to_vmem [thread:$0]  %s5, 65536, %s86, [#allocation12], 512, 512, 32
    $region25: #{tpu_custom_call.1} parent=1 // pred_fallthru
      _
    // Predicated region
    $region26: #{tpu_custom_call.1} parent=1 // pred_check
      _
    $region27: #{tpu_custom_call.1} parent=1 // pred_check_branch
      %93 = sbr.rel (0) target = $region29
    $region28: #{tpu_custom_call.1} parent=1 // pred_region
      %s95 = ssub.s32 128, 128
      %96 = vsyncadd [#allocation12], %s95
      %s98 = sshll.u32 [#allocation13], 4
      %s99 = int_to_ptr.vmem [resolvable:$true] %s98
      %101 = dma.hbm_to_vmem [thread:$0]  %s6, 128, %s99, [#allocation12]
    $region29: #{tpu_custom_call.1} parent=1 // pred_fallthru
      _
    // Predicated region
    $region30: #{tpu_custom_call.1} parent=1 // pred_check
      _
    $region31: #{tpu_custom_call.1} parent=1 // pred_check_branch
      %103 = sbr.rel (0) target = $region33
    $region32: #{tpu_custom_call.1} parent=1 // pred_region
      _
    $region33: #{tpu_custom_call.1} parent=1 // pred_fallthru
      _
    // Predicated region
    $region34: #{tpu_custom_call.1} parent=1 // pred_check
      _
    $region35: #{tpu_custom_call.1} parent=1 // pred_check_branch
      %105 = sbr.rel (0) target = $region37
    $region36: #{tpu_custom_call.1} parent=1 // pred_region
      %s107 = ssub.s32 16, 16
      %108 = vsyncadd [#allocation15], %s107
      %s110 = sshll.u32 [#allocation14], 4
      %s111 = int_to_ptr.vmem [resolvable:$true] %s110
      %113 = dma.hbm_to_vmem [thread:$0]  %s8, 16, %s111, [#allocation15]
    $region37: #{tpu_custom_call.1} parent=1 // pred_fallthru
      _
    // Predicated region
    $region38: #{tpu_custom_call.1} parent=1 // pred_check
      _
    $region39: #{tpu_custom_call.1} parent=1 // pred_check_branch
      %115 = sbr.rel (0) target = $region41
    $region40: #{tpu_custom_call.1} parent=1 // pred_region
      %s117 = ssub.s32 128, 128
      %118 = vsyncadd [#allocation15], %s117
      %s120 = sshll.u32 [#allocation16], 4
      %s121 = int_to_ptr.vmem [resolvable:$true] %s120
      %123 = dma.hbm_to_vmem [thread:$0]  %s9, 128, %s121, [#allocation15]
    $region41: #{tpu_custom_call.1} parent=1 // pred_fallthru
      _
    // Predicated region
    $region42: #{tpu_custom_call.1} parent=1 // pred_check
      _
    $region43: #{tpu_custom_call.1} parent=1 // pred_check_branch
      %125 = sbr.rel (0) target = $region45
    $region44: #{tpu_custom_call.1} parent=1 // pred_region
      %s127 = ssub.s32 16, 16
      %128 = vsyncadd [#allocation18], %s127
      %s130 = sshll.u32 [#allocation17], 4
      %s131 = int_to_ptr.vmem [resolvable:$true] %s130
      %133 = dma.hbm_to_vmem [thread:$0]  %s10, 16, %s131, [#allocation18]
    $region45: #{tpu_custom_call.1} parent=1 // pred_fallthru
      _
    // Predicated region
    $region46: #{tpu_custom_call.1} parent=1 // pred_check
      _
    $region47: #{tpu_custom_call.1} parent=1 // pred_check_branch
      %135 = sbr.rel (0) target = $region49
    $region48: #{tpu_custom_call.1} parent=1 // pred_region
      %s137 = ssub.s32 16, 16
      %138 = vsyncadd [#allocation18], %s137
      %s140 = sshll.u32 [#allocation19], 4
      %s141 = int_to_ptr.vmem [resolvable:$true] %s140
      %143 = dma.hbm_to_vmem [thread:$0]  %s11, 16, %s141, [#allocation18]
    $region49: #{tpu_custom_call.1} parent=1 // pred_fallthru
      _
    // Predicated region
    $region50: #{tpu_custom_call.1} parent=1 // pred_check
      _
    $region51: #{tpu_custom_call.1} parent=1 // pred_check_branch
      %145 = sbr.rel (0) target = $region53
    $region52: #{tpu_custom_call.1} parent=1 // pred_region
      %146 = dma.done [#allocation3], 384
    $region53: #{tpu_custom_call.1} parent=1 // pred_fallthru
      _
    // Predicated region
    $region54: #{tpu_custom_call.1} parent=1 // pred_check
      _
    $region55: #{tpu_custom_call.1} parent=1 // pred_check_branch
      %148 = sbr.rel (0) target = $region57
    $region56: #{tpu_custom_call.1} parent=1 // pred_region
      %149 = dma.done [#allocation6], 128
    $region57: #{tpu_custom_call.1} parent=1 // pred_fallthru
      _
    // Predicated region
    $region58: #{tpu_custom_call.1} parent=1 // pred_check
      _
    $region59: #{tpu_custom_call.1} parent=1 // pred_check_branch
      %151 = sbr.rel (0) target = $region61
    $region60: #{tpu_custom_call.1} parent=1 // pred_region
      %152 = dma.done [#allocation6], 13824
    $region61: #{tpu_custom_call.1} parent=1 // pred_fallthru
      _
    // Predicated region
    $region62: #{tpu_custom_call.1} parent=1 // pred_check
      _
    $region63: #{tpu_custom_call.1} parent=1 // pred_check_branch
      %154 = sbr.rel (0) target = $region65
    $region64: #{tpu_custom_call.1} parent=1 // pred_region
      %155 = dma.done [#allocation9], 128
    $region65: #{tpu_custom_call.1} parent=1 // pred_fallthru
      _
    // Predicated region
    $region66: #{tpu_custom_call.1} parent=1 // pred_check
      _
    $region67: #{tpu_custom_call.1} parent=1 // pred_check_branch
      %157 = sbr.rel (0) target = $region69
    $region68: #{tpu_custom_call.1} parent=1 // pred_region
      %158 = dma.done [#allocation9], 3456
    $region69: #{tpu_custom_call.1} parent=1 // pred_fallthru
      _
    // Predicated region
    $region70: #{tpu_custom_call.1} parent=1 // pred_check
      _
    $region71: #{tpu_custom_call.1} parent=1 // pred_check_branch
      %160 = sbr.rel (0) target = $region73
    $region72: #{tpu_custom_call.1} parent=1 // pred_region
      %161 = dma.done [#allocation12], 65536
    $region73: #{tpu_custom_call.1} parent=1 // pred_fallthru
      _
    // Predicated region
    $region74: #{tpu_custom_call.1} parent=1 // pred_check
      _
    $region75: #{tpu_custom_call.1} parent=1 // pred_check_branch
      %163 = sbr.rel (0) target = $region77
    $region76: #{tpu_custom_call.1} parent=1 // pred_region
      %164 = dma.done [#allocation12], 128
    $region77: #{tpu_custom_call.1} parent=1 // pred_fallthru
      _
    // Predicated region
    $region78: #{tpu_custom_call.1} parent=1 // pred_check
      _
    $region79: #{tpu_custom_call.1} parent=1 // pred_check_branch
      %166 = sbr.rel (0) target = $region81
    $region80: #{tpu_custom_call.1} parent=1 // pred_region
      %167 = dma.done [#allocation15], 16
    $region81: #{tpu_custom_call.1} parent=1 // pred_fallthru
      _
    // Predicated region
    $region82: #{tpu_custom_call.1} parent=1 // pred_check
      _
    $region83: #{tpu_custom_call.1} parent=1 // pred_check_branch
      %169 = sbr.rel (0) target = $region85
    $region84: #{tpu_custom_call.1} parent=1 // pred_region
      %170 = dma.done [#allocation15], 128
    $region85: #{tpu_custom_call.1} parent=1 // pred_fallthru
      _
    // Predicated region
    $region86: #{tpu_custom_call.1} parent=1 // pred_check
      _
    $region87: #{tpu_custom_call.1} parent=1 // pred_check_branch
      %172 = sbr.rel (0) target = $region89
    $region88: #{tpu_custom_call.1} parent=1 // pred_region
      %173 = dma.done [#allocation18], 16
    $region89: #{tpu_custom_call.1} parent=1 // pred_fallthru
      _
    // Predicated region
    $region90: #{tpu_custom_call.1} parent=1 // pred_check
      _
    $region91: #{tpu_custom_call.1} parent=1 // pred_check_branch
      %175 = sbr.rel (0) target = $region93
    $region92: #{tpu_custom_call.1} parent=1 // pred_region
      %176 = dma.done [#allocation18], 16
    $region93: #{tpu_custom_call.1} parent=1 // pred_fallthru
      _
    %v178 = vld [vmem:[#allocation2] sm:$0xff]
    %s179 = scalar_lea.vmem [#allocation2], 8
    %v180 = vld [vmem:[%s179] sm:$0xff]
    %s181 = scalar_lea.vmem [#allocation2], 16
    %v182 = vld [vmem:[%s181] sm:$0xff]
    %v183 = vadd.f32 %v178, 1e-08
    %v184 = vmul.f32 %v183, %v183
    %v185 = vadd.f32 %v180, 1e-08
    %v186 = vmul.f32 %v185, %v185
    %v187 = vadd.f32 %v184, %v186
    %v188 = vadd.f32 %v182, 1e-08
    %v189 = vmul.f32 %v188, %v188
    %v190 = vadd.f32 %v187, %v189
    %v191 = vrsqrt.pop %v190
    %v192 = vmul.f32 %v190, %v191
    %vm193 = vcmp.eq.f32.partialorder %v190, inf
    %v194 = vsel %vm193, %v190, %v192
    %vm195 = vcmp.eq.f32.partialorder %v190, 0.0
    %v196 = vand.u32 %v190, 2147483648
    %v197 = vsel %vm195, %v196, %v194
    %v198 = vrcp.pop %v197
    %v199 = vmul.f32 1.0, %v198
    %v200 = vmul.f32 %v178, %v199
    %v201 = vmul.f32 %v180, %v199
    %v202 = vmul.f32 %v182, %v199
    %v203 = vmul.f32 %v197, 0.5
    %v204 = vand.u32 2147483647, %v203
    %vm205 = vcmp.le.f32.partialorder %v204, 0.7853982
    %vm206 = vcmp.lt.s32.totalorder %v203, 0
    %v207 = vand.u32 %v203, 2139095040
    %v208 = vshrl.u32 %v207, 23
    %v209 = vsub.s32 %v208, 127
    %v210 = vand.u32 2147483647, %v203
    %v211 = vand.u32 %v210, 8388607
    %v212 = vor.u32 %v211, 8388608
    %v213 = vsub.s32 0, %v212
    %v214 = vadd.s32 %v209, 1
    %vm215 = vcmp.gt.s32.totalorder %v214, 0
    %v216 = vsel %vm215, %v214, 0
    %v217 = vshrl.u32 %v216, 5
    %v218 = vand.u32 %v216, 31
    %v219 = vsub.s32 32, %v218
    %v220 = vshrl.u32 683565275, %v219
    %v221 = vshll.u32 683565275, %v218
    %v222 = vshrl.u32 2475754826, %v219
    %v223 = vor.u32 %v221, %v222
    %v224 = vshll.u32 2475754826, %v218
    %v225 = vshrl.u32 2131351028, %v219
    %v226 = vor.u32 %v224, %v225
    %v227 = vshll.u32 2131351028, %v218
    %v228 = vshrl.u32 2102212464, %v219
    %v229 = vor.u32 %v227, %v228
    %v230 = vshll.u32 2102212464, %v218
    %v231 = vshrl.u32 920167782, %v219
    %v232 = vor.u32 %v230, %v231
    %v233 = vshll.u32 920167782, %v218
    %v234 = vshrl.u32 1326507024, %v219
    %v235 = vor.u32 %v233, %v234
    %vm236 = vcmp.lt.s32.totalorder %v217, 1
    %vm237 = vcmp.lt.s32.totalorder %v217, 2
    %vm238 = vcmp.lt.s32.totalorder %v217, 3
    %vm239 = vcmp.lt.s32.totalorder %v217, 4
    %v240 = vsel %vm236, %v220, %v223
    %v241 = vsel %vm239, %v229, 2102212464
    %v242 = vsel %vm238, %v226, %v241
    %v243 = vsel %vm237, %v240, %v242
    %v244 = vsel %vm236, %v223, %v226
    %v245 = vsel %vm239, %v232, 920167782
    %v246 = vsel %vm238, %v229, %v245
    %v247 = vsel %vm237, %v244, %v246
    %v248 = vsel %vm236, %v226, %v229
    %v249 = vsel %vm239, %v235, 1326507024
    %v250 = vsel %vm238, %v232, %v249
    %v251 = vsel %vm237, %v248, %v250
    %v252 = vshll.u32 %v212, 8
    %v253 = vmul.u32.u64.compose %v252, %v251
    %v254 = vextract.low.u32 %v253
    %v255 = vextract.high.u32 %v253
    %v256 = vmul.u32.u64.compose %v252, %v247
    %v257 = vextract.low.u32 %v256
    %v258 = vextract.high.u32 %v256
    %v259 = vmul.u32 %v252, %v243
    %v260 = vadd.s32 %v255, %v257
    %vm261 = vc.u32 %v255, %v257
    %v262 = vadd.s32 %v258, 1
    %v263 = vsel %vm261, %v262, %v258
    %v264 = vadd.s32 %v259, %v263
    %v265 = vadd.s32 %v264, 536870912
    %v266 = vshrl.u32 %v265, 30
    %v267 = vshll.u32 %v266, 30
    %v268 = vsub.s32 %v264, %v267
    %vm269 = vcmp.lt.s32.totalorder %v268, 0
    %v270 = vsub.s32 0, %v268
    %v271 = vsel %vm269, %v270, %v268
    %v272 = vclz %v271
    %v273 = vsub.s32 %v272, 2
    %vm274 = vcmp.gt.s32.totalorder 0, %v273
    %v275 = vsel %vm274, 0, %v273
    %v276 = vsub.s32 32, %v275
    %v277 = vshll.u32 %v268, %v275
    %v278 = vshrl.u32 %v260, %v276
    %v279 = vor.u32 %v277, %v278
    %v280 = vsub.s32 4294967266, %v275
    %v281 = vadd.s32 %v280, 127
    %v282 = vshll.u32 %v281, 23
    %v283 = vor.u32 4788187, %v282
    %v284 = vand.u32 2147483647, %v283
    %v286 = vcvt.s32.f32 %v279
    %v287 = vmul.f32 %v286, %v284
    %v288 = vxor.u32 %v287, 2147483648
    %v289 = vsel %vm206, %v288, %v287
    %v290 = vsub.s32 4, %v266
    %v291 = vsel %vm206, %v290, %v266
    %v292 = vsel %vm205, %v203, %v289
    %v293 = vsel %vm205, 0, %v291
    %v294 = vcosq.f32.pop %v292
    %v295 = vsinq.f32.pop %v292
    %vm296 = vweird.f32 %v203
    %v297 = vand.u32 %v293, 3
    %vm298 = vcmp.lt.s32.totalorder %v297, 2
    %vm299 = vcmp.eq.s32.totalorder %v297, 0
    %v300 = vxor.u32 %v295, 2147483648
    %v301 = vsel %vm299, %v294, %v300
    %vm302 = vcmp.eq.s32.totalorder %v297, 2
    %v303 = vxor.u32 %v294, 2147483648
    %v304 = vsel %vm302, %v303, %v295
    %v305 = vsel %vm298, %v301, %v304
    %v306 = vsel %vm296, nan, %v305
    %v307 = vand.u32 2147483647, %v203
    %vm308 = vcmp.le.f32.partialorder %v307, 0.7853982
    %vm309 = vcmp.lt.s32.totalorder %v203, 0
    %v310 = vand.u32 %v203, 2139095040
    %v311 = vshrl.u32 %v310, 23
    %v312 = vsub.s32 %v311, 127
    %v313 = vand.u32 2147483647, %v203
    %v314 = vand.u32 %v313, 8388607
    %v315 = vor.u32 %v314, 8388608
    %v316 = vsub.s32 0, %v315
    %v317 = vadd.s32 %v312, 1
    %vm318 = vcmp.gt.s32.totalorder %v317, 0
    %v319 = vsel %vm318, %v317, 0
    %v320 = vshrl.u32 %v319, 5
    %v321 = vand.u32 %v319, 31
    %v322 = vsub.s32 32, %v321
    %v323 = vshrl.u32 683565275, %v322
    %v324 = vshll.u32 683565275, %v321
    %v325 = vshrl.u32 2475754826, %v322
    %v326 = vor.u32 %v324, %v325
    %v327 = vshll.u32 2475754826, %v321
    %v328 = vshrl.u32 2131351028, %v322
    %v329 = vor.u32 %v327, %v328
    %v330 = vshll.u32 2131351028, %v321
    %v331 = vshrl.u32 2102212464, %v322
    %v332 = vor.u32 %v330, %v331
    %v333 = vshll.u32 2102212464, %v321
    %v334 = vshrl.u32 920167782, %v322
    %v335 = vor.u32 %v333, %v334
    %v336 = vshll.u32 920167782, %v321
    %v337 = vshrl.u32 1326507024, %v322
    %v338 = vor.u32 %v336, %v337
    %vm339 = vcmp.lt.s32.totalorder %v320, 1
    %vm340 = vcmp.lt.s32.totalorder %v320, 2
    %vm341 = vcmp.lt.s32.totalorder %v320, 3
    %vm342 = vcmp.lt.s32.totalorder %v320, 4
    %v343 = vsel %vm339, %v323, %v326
    %v344 = vsel %vm342, %v332, 2102212464
    %v345 = vsel %vm341, %v329, %v344
    %v346 = vsel %vm340, %v343, %v345
    %v347 = vsel %vm339, %v326, %v329
    %v348 = vsel %vm342, %v335, 920167782
    %v349 = vsel %vm341, %v332, %v348
    %v350 = vsel %vm340, %v347, %v349
    %v351 = vsel %vm339, %v329, %v332
    %v352 = vsel %vm342, %v338, 1326507024
    %v353 = vsel %vm341, %v335, %v352
    %v354 = vsel %vm340, %v351, %v353
    %v355 = vshll.u32 %v315, 8
    %v356 = vmul.u32.u64.compose %v355, %v354
    %v357 = vextract.low.u32 %v356
    %v358 = vextract.high.u32 %v356
    %v359 = vmul.u32.u64.compose %v355, %v350
    %v360 = vextract.low.u32 %v359
    %v361 = vextract.high.u32 %v359
    %v362 = vmul.u32 %v355, %v346
    %v363 = vadd.s32 %v358, %v360
    %vm364 = vc.u32 %v358, %v360
    %v365 = vadd.s32 %v361, 1
    %v366 = vsel %vm364, %v365, %v361
    %v367 = vadd.s32 %v362, %v366
    %v368 = vadd.s32 %v367, 536870912
    %v369 = vshrl.u32 %v368, 30
    %v370 = vshll.u32 %v369, 30
    %v371 = vsub.s32 %v367, %v370
    %vm372 = vcmp.lt.s32.totalorder %v371, 0
    %v373 = vsub.s32 0, %v371
    %v374 = vsel %vm372, %v373, %v371
    %v375 = vclz %v374
    %v376 = vsub.s32 %v375, 2
    %vm377 = vcmp.gt.s32.totalorder 0, %v376
    %v378 = vsel %vm377, 0, %v376
    %v379 = vsub.s32 32, %v378
    %v380 = vshll.u32 %v371, %v378
    %v381 = vshrl.u32 %v363, %v379
    %v382 = vor.u32 %v380, %v381
    %v383 = vsub.s32 4294967266, %v378
    %v384 = vadd.s32 %v383, 127
    %v385 = vshll.u32 %v384, 23
    %v386 = vor.u32 4788187, %v385
    %v387 = vand.u32 2147483647, %v386
    %v389 = vcvt.s32.f32 %v382
    %v390 = vmul.f32 %v389, %v387
    %v391 = vxor.u32 %v390, 2147483648
    %v392 = vsel %vm309, %v391, %v390
    %v393 = vsub.s32 4, %v369
    %v394 = vsel %vm309, %v393, %v369
    %v395 = vsel %vm308, %v203, %v392
    %v396 = vsel %vm308, 0, %v394
    %v397 = vcosq.f32.pop %v395
    %v398 = vsinq.f32.pop %v395
    %vm399 = vweird.f32 %v203
    %v400 = vadd.s32 %v396, 3
    %v401 = vand.u32 %v400, 3
    %vm402 = vcmp.lt.s32.totalorder %v401, 2
    %vm403 = vcmp.eq.s32.totalorder %v401, 0
    %v404 = vxor.u32 %v398, 2147483648
    %v405 = vsel %vm403, %v397, %v404
    %vm406 = vcmp.eq.s32.totalorder %v401, 2
    %v407 = vxor.u32 %v397, 2147483648
    %v408 = vsel %vm406, %v407, %v398
    %v409 = vsel %vm402, %v405, %v408
    %v410 = vsel %vm399, nan, %v409
    %v411 = vmul.f32 %v410, %v200
    %v412 = vmul.f32 %v410, %v201
    %v413 = vmul.f32 %v410, %v202
    %v414 = vmul.f32 %v306, %v306
    %v415 = vmul.f32 %v411, %v411
    %v416 = vadd.f32 %v414, %v415
    %v417 = vmul.f32 %v412, %v412
    %v418 = vadd.f32 %v416, %v417
    %v419 = vmul.f32 %v413, %v413
    %v420 = vadd.f32 %v418, %v419
    %v421 = vrsqrt.pop %v420
    %v422 = vmul.f32 %v420, %v421
    %vm423 = vcmp.eq.f32.partialorder %v420, inf
    %v424 = vsel %vm423, %v420, %v422
    %vm425 = vcmp.eq.f32.partialorder %v420, 0.0
    %v426 = vand.u32 %v420, 2147483648
    %v427 = vsel %vm425, %v426, %v424
    %v428 = vrcp.pop %v427
    %v429 = vmul.f32 1.0, %v428
    %v430 = vmul.f32 %v306, %v429
    %v431 = vmul.f32 %v411, %v429
    %v432 = vmul.f32 %v412, %v429
    %v433 = vmul.f32 %v413, %v429
    %v434 = vmul.f32 %v430, %v430
    %v435 = vmul.f32 %v431, %v431
    %v436 = vmul.f32 %v432, %v432
    %v437 = vmul.f32 %v433, %v433
    %v438 = vmul.f32 %v430, %v431
    %v439 = vmul.f32 %v430, %v432
    %v440 = vmul.f32 %v430, %v433
    %v441 = vmul.f32 %v431, %v432
    %v442 = vmul.f32 %v431, %v433
    %v443 = vmul.f32 %v432, %v433
    %v444 = vadd.f32 %v434, %v435
    %v445 = vsub.f32 %v444, %v436
    %v446 = vsub.f32 %v445, %v437
    %v447 = vmul.f32 %v441, 2.0
    %v448 = vmul.f32 %v440, 2.0
    %v449 = vsub.f32 %v447, %v448
    %v450 = vmul.f32 %v439, 2.0
    %v451 = vmul.f32 %v442, 2.0
    %v452 = vadd.f32 %v450, %v451
    %v453 = vadd.f32 %v448, %v447
    %v454 = vsub.f32 %v434, %v435
    %v455 = vadd.f32 %v454, %v436
    %v456 = vsub.f32 %v455, %v437
    %v457 = vmul.f32 %v443, 2.0
    %v458 = vmul.f32 %v438, 2.0
    %v459 = vsub.f32 %v457, %v458
    %v460 = vsub.f32 %v451, %v450
    %v461 = vadd.f32 %v458, %v457
    %v462 = vsub.f32 %v454, %v436
    %v463 = vadd.f32 %v462, %v437
    %465 = vrot.lane.b32.xlu0 %v449, 24
    %v466 = vpop.permute.xlu0 %465
    %469 = vrot.lane.b32.xlu0 %v452, 48
    %v470 = vpop.permute.xlu0 %469
    %473 = vrot.lane.b32.xlu0 %v453, 72
    %v474 = vpop.permute.xlu0 %473
    %477 = vrot.lane.b32.xlu0 %v456, 96
    %v478 = vpop.permute.xlu0 %477
    %481 = vrot.lane.b32.xlu0 %v459, 120
    %v482 = vpop.permute.xlu0 %481
    %485 = vrot.lane.b32.xlu0 %v460, 16
    %v486 = vpop.permute.xlu0 %485
    %489 = vrot.lane.b32.xlu0 %v461, 40
    %v490 = vpop.permute.xlu0 %489
    %493 = vrot.lane.b32.xlu0 %v463, 64
    %v494 = vpop.permute.xlu0 %493
    %vm496 = vcmask 195584
    %v497 = vsel %vm496, %v446, %v466
    %vm498 = vcmask 392192
    %v499 = vsel %vm498, %v497, %v470
    %vm500 = vcmask 588800
    %v501 = vsel %vm500, %v499, %v474
    %vm502 = vcmask 785408
    %v503 = vsel %vm502, %v501, %v478
    %vm504 = vcmask 982016
    %v505 = vsel %vm504, %v503, %v482
    %vm506 = vcmask 130048
    %v507 = vsel %vm506, %v482, %v486
    %vm508 = vcmask 326656
    %v509 = vsel %vm508, %v507, %v490
    %vm510 = vcmask 523264
    %v511 = vsel %vm510, %v509, %v494
    %v512 = vpack.c.bf16 %v505, %v505
    %v513 = vpack.c.bf16 %v511, %v511
    %v514 = vld [vmem:[#allocation7] sm:$0xff]
    %v515 = vld [vmem:[#allocation7 + $0x8] sm:$0xff]
    %v516 = vld [vmem:[#allocation7 + $0x10] sm:$0xff]
    %v517 = vld [vmem:[#allocation7 + $0x18] sm:$0xff]
    %v518 = vld [vmem:[#allocation7 + $0x20] sm:$0xff]
    %v519 = vld [vmem:[#allocation7 + $0x28] sm:$0xff]
    %v520 = vld [vmem:[#allocation7 + $0x30] sm:$0xff]
    %v521 = vld [vmem:[#allocation7 + $0x38] sm:$0xff]
    %v522 = vld [vmem:[#allocation7 + $0x40] sm:$0xff]
    %v523 = vld [vmem:[#allocation7 + $0x48] sm:$0xff]
    %v524 = vld [vmem:[#allocation7 + $0x50] sm:$0xff]
    %v525 = vld [vmem:[#allocation7 + $0x58] sm:$0xff]
    %v526 = vld [vmem:[#allocation7 + $0x60] sm:$0xff]
    %v527 = vld [vmem:[#allocation7 + $0x68] sm:$0xff]
    %v528 = vld [vmem:[#allocation7 + $0x70] sm:$0xff]
    %v529 = vld [vmem:[#allocation7 + $0x78] sm:$0xff]
    %v530 = vld [vmem:[#allocation7 + $0x80] sm:$0xff]
    %v531 = vld [vmem:[#allocation7 + $0x88] sm:$0xff]
    %v532 = vld [vmem:[#allocation7 + $0x90] sm:$0xff]
    %v533 = vld [vmem:[#allocation7 + $0x98] sm:$0xff]
    %v534 = vld [vmem:[#allocation7 + $0xa0] sm:$0xff]
    %v535 = vld [vmem:[#allocation7 + $0xa8] sm:$0xff]
    %v536 = vld [vmem:[#allocation7 + $0xb0] sm:$0xff]
    %v537 = vld [vmem:[#allocation7 + $0xb8] sm:$0xff]
    %v538 = vld [vmem:[#allocation7 + $0xc0] sm:$0xff]
    %v539 = vld [vmem:[#allocation7 + $0xc8] sm:$0xff]
    %v540 = vld [vmem:[#allocation7 + $0xd0] sm:$0xff]
    %v541 = vld [vmem:[#allocation7 + $0xd8] sm:$0xff]
    %v542 = vld [vmem:[#allocation7 + $0xe0] sm:$0xff]
    %v543 = vld [vmem:[#allocation7 + $0xe8] sm:$0xff]
    %v544 = vld [vmem:[#allocation7 + $0xf0] sm:$0xff]
    %v545 = vld [vmem:[#allocation7 + $0xf8] sm:$0xff]
    %v546 = vld [vmem:[#allocation7 + $0x100] sm:$0xff]
    %v547 = vld [vmem:[#allocation7 + $0x108] sm:$0xff]
    %v548 = vld [vmem:[#allocation7 + $0x110] sm:$0xff]
    %v549 = vld [vmem:[#allocation7 + $0x118] sm:$0xff]
    %v550 = vld [vmem:[#allocation7 + $0x120] sm:$0xff]
    %v551 = vld [vmem:[#allocation7 + $0x128] sm:$0xff]
    %v552 = vld [vmem:[#allocation7 + $0x130] sm:$0xff]
    %v553 = vld [vmem:[#allocation7 + $0x138] sm:$0xff]
    %v554 = vld [vmem:[#allocation7 + $0x140] sm:$0xff]
    %v555 = vld [vmem:[#allocation7 + $0x148] sm:$0xff]
    %v556 = vld [vmem:[#allocation7 + $0x150] sm:$0xff]
    %v557 = vld [vmem:[#allocation7 + $0x158] sm:$0xff]
    %v558 = vld [vmem:[#allocation7 + $0x160] sm:$0xff]
    %v559 = vld [vmem:[#allocation7 + $0x168] sm:$0xff]
    %v560 = vld [vmem:[#allocation7 + $0x170] sm:$0xff]
    %v561 = vld [vmem:[#allocation7 + $0x178] sm:$0xff]
    %v562 = vld [vmem:[#allocation7 + $0x180] sm:$0xff]
    %v563 = vld [vmem:[#allocation7 + $0x188] sm:$0xff]
    %v564 = vld [vmem:[#allocation7 + $0x190] sm:$0xff]
    %v565 = vld [vmem:[#allocation7 + $0x198] sm:$0xff]
    %v566 = vld [vmem:[#allocation7 + $0x1a0] sm:$0xff]
    %v567 = vld [vmem:[#allocation7 + $0x1a8] sm:$0xff]
    %v568 = vld [vmem:[#allocation7 + $0x1b0] sm:$0xff]
    %v569 = vld [vmem:[#allocation7 + $0x1b8] sm:$0xff]
    %v570 = vld [vmem:[#allocation7 + $0x1c0] sm:$0xff]
    %v571 = vld [vmem:[#allocation7 + $0x1c8] sm:$0xff]
    %v572 = vld [vmem:[#allocation7 + $0x1d0] sm:$0xff]
    %v573 = vld [vmem:[#allocation7 + $0x1d8] sm:$0xff]
    %v574 = vld [vmem:[#allocation7 + $0x1e0] sm:$0xff]
    %v575 = vld [vmem:[#allocation7 + $0x1e8] sm:$0xff]
    %v576 = vld [vmem:[#allocation7 + $0x1f0] sm:$0xff]
    %v577 = vld [vmem:[#allocation7 + $0x1f8] sm:$0xff]
    %v578 = vld [vmem:[#allocation7 + $0x200] sm:$0xff]
    %v579 = vld [vmem:[#allocation7 + $0x208] sm:$0xff]
    %v580 = vld [vmem:[#allocation7 + $0x210] sm:$0xff]
    %v581 = vld [vmem:[#allocation7 + $0x218] sm:$0xff]
    %v582 = vld [vmem:[#allocation7 + $0x220] sm:$0xff]
    %v583 = vld [vmem:[#allocation7 + $0x228] sm:$0xff]
    %v584 = vld [vmem:[#allocation7 + $0x230] sm:$0xff]
    %v585 = vld [vmem:[#allocation7 + $0x238] sm:$0xff]
    %v586 = vld [vmem:[#allocation7 + $0x240] sm:$0xff]
    %v587 = vld [vmem:[#allocation7 + $0x248] sm:$0xff]
    %v588 = vld [vmem:[#allocation7 + $0x250] sm:$0xff]
    %v589 = vld [vmem:[#allocation7 + $0x258] sm:$0xff]
    %v590 = vld [vmem:[#allocation7 + $0x260] sm:$0xff]
    %v591 = vld [vmem:[#allocation7 + $0x268] sm:$0xff]
    %v592 = vld [vmem:[#allocation7 + $0x270] sm:$0xff]
    %v593 = vld [vmem:[#allocation7 + $0x278] sm:$0xff]
    %v594 = vld [vmem:[#allocation7 + $0x280] sm:$0xff]
    %v595 = vld [vmem:[#allocation7 + $0x288] sm:$0xff]
    %v596 = vld [vmem:[#allocation7 + $0x290] sm:$0xff]
    %v597 = vld [vmem:[#allocation7 + $0x298] sm:$0xff]
    %v598 = vld [vmem:[#allocation7 + $0x2a0] sm:$0xff]
    %v599 = vld [vmem:[#allocation7 + $0x2a8] sm:$0xff]
    %v600 = vld [vmem:[#allocation7 + $0x2b0] sm:$0xff]
    %v601 = vld [vmem:[#allocation7 + $0x2b8] sm:$0xff]
    %v602 = vld [vmem:[#allocation7 + $0x2c0] sm:$0xff]
    %v603 = vld [vmem:[#allocation7 + $0x2c8] sm:$0xff]
    %v604 = vld [vmem:[#allocation7 + $0x2d0] sm:$0xff]
    %v605 = vld [vmem:[#allocation7 + $0x2d8] sm:$0xff]
    %v606 = vld [vmem:[#allocation7 + $0x2e0] sm:$0xff]
    %v607 = vld [vmem:[#allocation7 + $0x2e8] sm:$0xff]
    %v608 = vld [vmem:[#allocation7 + $0x2f0] sm:$0xff]
    %v609 = vld [vmem:[#allocation7 + $0x2f8] sm:$0xff]
    %v610 = vld [vmem:[#allocation7 + $0x300] sm:$0xff]
    %v611 = vld [vmem:[#allocation7 + $0x308] sm:$0xff]
    %v612 = vld [vmem:[#allocation7 + $0x310] sm:$0xff]
    %v613 = vld [vmem:[#allocation7 + $0x318] sm:$0xff]
    %v614 = vld [vmem:[#allocation7 + $0x320] sm:$0xff]
    %v615 = vld [vmem:[#allocation7 + $0x328] sm:$0xff]
    %v616 = vld [vmem:[#allocation7 + $0x330] sm:$0xff]
    %v617 = vld [vmem:[#allocation7 + $0x338] sm:$0xff]
    %v618 = vld [vmem:[#allocation7 + $0x340] sm:$0xff]
    %v619 = vld [vmem:[#allocation7 + $0x348] sm:$0xff]
    %v620 = vld [vmem:[#allocation7 + $0x350] sm:$0xff]
    %v621 = vld [vmem:[#allocation7 + $0x358] sm:$0xff]
    %v622 = vld [vmem:[#allocation8] sm:$0xff]
    %v624 = vlaneseq
    %v625 = vshrl.u32 %v624, 7
    %v626 = vsub.s32 0, %v625
    %v627 = vrot.slane %v622, %v626
    %v628 = vlaneseq
    %v629 = vshrl.u32 %v628, 7
    %v630 = vsub.s32 1, %v629
    %v631 = vrot.slane %v622, %v630
    %v632 = vlaneseq
    %v633 = vshrl.u32 %v632, 7
    %v634 = vsub.s32 2, %v633
    %v635 = vrot.slane %v622, %v634
    %v636 = vlaneseq
    %v637 = vshrl.u32 %v636, 7
    %v638 = vsub.s32 3, %v637
    %v639 = vrot.slane %v622, %v638
    %v640 = vlaneseq
    %v641 = vshrl.u32 %v640, 7
    %v642 = vsub.s32 4, %v641
    %v643 = vrot.slane %v622, %v642
    %v644 = vlaneseq
    %v645 = vshrl.u32 %v644, 7
    %v646 = vsub.s32 5, %v645
    %v647 = vrot.slane %v622, %v646
    %v648 = vlaneseq
    %v649 = vshrl.u32 %v648, 7
    %v650 = vsub.s32 6, %v649
    %v651 = vrot.slane %v622, %v650
    %v652 = vlaneseq
    %v653 = vshrl.u32 %v652, 7
    %v654 = vsub.s32 7, %v653
    %v655 = vrot.slane %v622, %v654
    %v772 = vunpack.c.l.b16 %v514
    %v773 = vunpack.c.h.b16 %v514
    %v774 = vunpack.c.l.b16 %v515
    %v775 = vunpack.c.h.b16 %v515
    %v776 = vunpack.c.l.b16 %v516
    %v777 = vunpack.c.h.b16 %v516
    %v778 = vunpack.c.l.b16 %v517
    %v779 = vunpack.c.h.b16 %v517
    %v780 = vunpack.c.l.b16 %v518
    %v781 = vunpack.c.h.b16 %v518
    %v782 = vunpack.c.l.b16 %v519
    %v783 = vunpack.c.h.b16 %v519
    %v784 = vunpack.c.l.b16 %v520
    %v785 = vunpack.c.h.b16 %v520
    %v786 = vunpack.c.l.b16 %v521
    %v787 = vunpack.c.h.b16 %v521
    %v788 = vunpack.c.l.b16 %v522
    %v789 = vunpack.c.h.b16 %v522
    %v790 = vunpack.c.l.b16 %v523
    %v791 = vunpack.c.h.b16 %v523
    %v792 = vunpack.c.l.b16 %v524
    %v793 = vunpack.c.h.b16 %v524
    %v794 = vunpack.c.l.b16 %v525
    %v795 = vunpack.c.h.b16 %v525
    %v796 = vunpack.c.l.b16 %v526
    %v797 = vunpack.c.h.b16 %v526
    %v798 = vunpack.c.l.b16 %v527
    %v799 = vunpack.c.h.b16 %v527
    %v800 = vunpack.c.l.b16 %v528
    %v801 = vunpack.c.h.b16 %v528
    %v802 = vunpack.c.l.b16 %v529
    %v803 = vunpack.c.h.b16 %v529
    %v804 = vunpack.c.l.b16 %v530
    %v805 = vunpack.c.h.b16 %v530
    %v806 = vunpack.c.l.b16 %v531
    %v807 = vunpack.c.h.b16 %v531
    %v808 = vunpack.c.l.b16 %v532
    %v809 = vunpack.c.h.b16 %v532
    %v810 = vunpack.c.l.b16 %v533
    %v811 = vunpack.c.h.b16 %v533
    %v812 = vunpack.c.l.b16 %v534
    %v813 = vunpack.c.h.b16 %v534
    %v814 = vunpack.c.l.b16 %v535
    %v815 = vunpack.c.h.b16 %v535
    %v816 = vunpack.c.l.b16 %v536
    %v817 = vunpack.c.h.b16 %v536
    %v818 = vunpack.c.l.b16 %v537
    %v819 = vunpack.c.h.b16 %v537
    %v820 = vunpack.c.l.b16 %v538
    %v821 = vunpack.c.h.b16 %v538
    %v822 = vunpack.c.l.b16 %v539
    %v823 = vunpack.c.h.b16 %v539
    %v824 = vunpack.c.l.b16 %v540
    %v825 = vunpack.c.h.b16 %v540
    %v826 = vunpack.c.l.b16 %v541
    %v827 = vunpack.c.h.b16 %v541
    %v828 = vunpack.c.l.b16 %v542
    %v829 = vunpack.c.h.b16 %v542
    %v830 = vunpack.c.l.b16 %v543
    %v831 = vunpack.c.h.b16 %v543
    %v832 = vunpack.c.l.b16 %v544
    %v833 = vunpack.c.h.b16 %v544
    %v834 = vunpack.c.l.b16 %v545
    %v835 = vunpack.c.h.b16 %v545
    %v836 = vunpack.c.l.b16 %v546
    %v837 = vunpack.c.h.b16 %v546
    %v838 = vunpack.c.l.b16 %v547
    %v839 = vunpack.c.h.b16 %v547
    %v840 = vunpack.c.l.b16 %v548
    %v841 = vunpack.c.h.b16 %v548
    %v842 = vunpack.c.l.b16 %v549
    %v843 = vunpack.c.h.b16 %v549
    %v844 = vunpack.c.l.b16 %v550
    %v845 = vunpack.c.h.b16 %v550
    %v846 = vunpack.c.l.b16 %v551
    %v847 = vunpack.c.h.b16 %v551
    %v848 = vunpack.c.l.b16 %v552
    %v849 = vunpack.c.h.b16 %v552
    %v850 = vunpack.c.l.b16 %v553
    %v851 = vunpack.c.h.b16 %v553
    %v852 = vunpack.c.l.b16 %v554
    %v853 = vunpack.c.h.b16 %v554
    %v854 = vunpack.c.l.b16 %v555
    %v855 = vunpack.c.h.b16 %v555
    %v856 = vunpack.c.l.b16 %v556
    %v857 = vunpack.c.h.b16 %v556
    %v858 = vunpack.c.l.b16 %v557
    %v859 = vunpack.c.h.b16 %v557
    %v860 = vunpack.c.l.b16 %v558
    %v861 = vunpack.c.h.b16 %v558
    %v862 = vunpack.c.l.b16 %v559
    %v863 = vunpack.c.h.b16 %v559
    %v864 = vunpack.c.l.b16 %v560
    %v865 = vunpack.c.h.b16 %v560
    %v866 = vunpack.c.l.b16 %v561
    %v867 = vunpack.c.h.b16 %v561
    %v868 = vunpack.c.l.b16 %v562
    %v869 = vunpack.c.h.b16 %v562
    %v870 = vunpack.c.l.b16 %v563
    %v871 = vunpack.c.h.b16 %v563
    %v872 = vunpack.c.l.b16 %v564
    %v873 = vunpack.c.h.b16 %v564
    %v874 = vunpack.c.l.b16 %v565
    %v875 = vunpack.c.h.b16 %v565
    %v876 = vunpack.c.l.b16 %v566
    %v877 = vunpack.c.h.b16 %v566
    %v878 = vunpack.c.l.b16 %v567
    %v879 = vunpack.c.h.b16 %v567
    %v880 = vunpack.c.l.b16 %v568
    %v881 = vunpack.c.h.b16 %v568
    %v882 = vunpack.c.l.b16 %v569
    %v883 = vunpack.c.h.b16 %v569
    %v884 = vunpack.c.l.b16 %v570
    %v885 = vunpack.c.h.b16 %v570
    %v886 = vunpack.c.l.b16 %v571
    %v887 = vunpack.c.h.b16 %v571
    %v888 = vunpack.c.l.b16 %v572
    %v889 = vunpack.c.h.b16 %v572
    %v890 = vunpack.c.l.b16 %v573
    %v891 = vunpack.c.h.b16 %v573
    %v892 = vunpack.c.l.b16 %v574
    %v893 = vunpack.c.h.b16 %v574
    %v894 = vunpack.c.l.b16 %v575
    %v895 = vunpack.c.h.b16 %v575
    %v896 = vunpack.c.l.b16 %v576
    %v897 = vunpack.c.h.b16 %v576
    %v898 = vunpack.c.l.b16 %v577
    %v899 = vunpack.c.h.b16 %v577
    %v900 = vunpack.c.l.b16 %v578
    %v901 = vunpack.c.h.b16 %v578
    %v902 = vunpack.c.l.b16 %v579
    %v903 = vunpack.c.h.b16 %v579
    %v904 = vunpack.c.l.b16 %v580
    %v905 = vunpack.c.h.b16 %v580
    %v906 = vunpack.c.l.b16 %v581
    %v907 = vunpack.c.h.b16 %v581
    %v908 = vunpack.c.l.b16 %v582
    %v909 = vunpack.c.h.b16 %v582
    %v910 = vunpack.c.l.b16 %v583
    %v911 = vunpack.c.h.b16 %v583
    %v912 = vunpack.c.l.b16 %v584
    %v913 = vunpack.c.h.b16 %v584
    %v914 = vunpack.c.l.b16 %v585
    %v915 = vunpack.c.h.b16 %v585
    %v916 = vunpack.c.l.b16 %v586
    %v917 = vunpack.c.h.b16 %v586
    %v918 = vunpack.c.l.b16 %v587
    %v919 = vunpack.c.h.b16 %v587
    %v920 = vunpack.c.l.b16 %v588
    %v921 = vunpack.c.h.b16 %v588
    %v922 = vunpack.c.l.b16 %v589
    %v923 = vunpack.c.h.b16 %v589
    %v924 = vunpack.c.l.b16 %v590
    %v925 = vunpack.c.h.b16 %v590
    %v926 = vunpack.c.l.b16 %v591
    %v927 = vunpack.c.h.b16 %v591
    %v928 = vunpack.c.l.b16 %v592
    %v929 = vunpack.c.h.b16 %v592
    %v930 = vunpack.c.l.b16 %v593
    %v931 = vunpack.c.h.b16 %v593
    %v932 = vunpack.c.l.b16 %v594
    %v933 = vunpack.c.h.b16 %v594
    %v934 = vunpack.c.l.b16 %v595
    %v935 = vunpack.c.h.b16 %v595
    %v936 = vunpack.c.l.b16 %v596
    %v937 = vunpack.c.h.b16 %v596
    %v938 = vunpack.c.l.b16 %v597
    %v939 = vunpack.c.h.b16 %v597
    %v940 = vunpack.c.l.b16 %v598
    %v941 = vunpack.c.h.b16 %v598
    %v942 = vunpack.c.l.b16 %v599
    %v943 = vunpack.c.h.b16 %v599
    %v944 = vunpack.c.l.b16 %v600
    %v945 = vunpack.c.h.b16 %v600
    %v946 = vunpack.c.l.b16 %v601
    %v947 = vunpack.c.h.b16 %v601
    %v948 = vunpack.c.l.b16 %v602
    %v949 = vunpack.c.h.b16 %v602
    %v950 = vunpack.c.l.b16 %v603
    %v951 = vunpack.c.h.b16 %v603
    %v952 = vunpack.c.l.b16 %v604
    %v953 = vunpack.c.h.b16 %v604
    %v954 = vunpack.c.l.b16 %v605
    %v955 = vunpack.c.h.b16 %v605
    %v956 = vunpack.c.l.b16 %v606
    %v957 = vunpack.c.h.b16 %v606
    %v958 = vunpack.c.l.b16 %v607
    %v959 = vunpack.c.h.b16 %v607
    %v960 = vunpack.c.l.b16 %v608
    %v961 = vunpack.c.h.b16 %v608
    %v962 = vunpack.c.l.b16 %v609
    %v963 = vunpack.c.h.b16 %v609
    %v964 = vunpack.c.l.b16 %v610
    %v965 = vunpack.c.h.b16 %v610
    %v966 = vunpack.c.l.b16 %v611
    %v967 = vunpack.c.h.b16 %v611
    %v968 = vunpack.c.l.b16 %v612
    %v969 = vunpack.c.h.b16 %v612
    %v970 = vunpack.c.l.b16 %v613
    %v971 = vunpack.c.h.b16 %v613
    %v972 = vunpack.c.l.b16 %v614
    %v973 = vunpack.c.h.b16 %v614
    %v974 = vunpack.c.l.b16 %v615
    %v975 = vunpack.c.h.b16 %v615
    %v976 = vunpack.c.l.b16 %v616
    %v977 = vunpack.c.h.b16 %v616
    %v978 = vunpack.c.l.b16 %v617
    %v979 = vunpack.c.h.b16 %v617
    %v980 = vunpack.c.l.b16 %v618
    %v981 = vunpack.c.h.b16 %v618
    %v982 = vunpack.c.l.b16 %v619
    %v983 = vunpack.c.h.b16 %v619
    %v984 = vunpack.c.l.b16 %v620
    %v985 = vunpack.c.h.b16 %v620
    %v986 = vunpack.c.l.b16 %v621
    %v987 = vunpack.c.h.b16 %v621
    %v988 = vpack.c.b16 %v780, %v772
    %v989 = vpack.c.b16 %v781, %v773
    %v990 = vpack.c.b16 %v782, %v774
    %v991 = vpack.c.b16 %v783, %v775
    %v992 = vpack.c.b16 %v784, %v776
    %v993 = vpack.c.b16 %v785, %v777
    %v994 = vpack.c.b16 %v786, %v778
    %v995 = vpack.c.b16 %v787, %v779
    %v996 = vpack.c.b16 %v796, %v788
    %v997 = vpack.c.b16 %v797, %v789
    %v998 = vpack.c.b16 %v798, %v790
    %v999 = vpack.c.b16 %v799, %v791
    %v1000 = vpack.c.b16 %v800, %v792
    %v1001 = vpack.c.b16 %v801, %v793
    %v1002 = vpack.c.b16 %v802, %v794
    %v1003 = vpack.c.b16 %v803, %v795
    %v1004 = vpack.c.b16 %v812, %v804
    %v1005 = vpack.c.b16 %v813, %v805
    %v1006 = vpack.c.b16 %v814, %v806
    %v1007 = vpack.c.b16 %v815, %v807
    %v1008 = vpack.c.b16 %v816, %v808
    %v1009 = vpack.c.b16 %v817, %v809
    %v1010 = vpack.c.b16 %v818, %v810
    %v1011 = vpack.c.b16 %v819, %v811
    %v1012 = vpack.c.b16 %v828, %v820
    %v1013 = vpack.c.b16 %v829, %v821
    %v1014 = vpack.c.b16 %v830, %v822
    %v1015 = vpack.c.b16 %v831, %v823
    %v1016 = vpack.c.b16 %v832, %v824
    %v1017 = vpack.c.b16 %v833, %v825
    %v1018 = vpack.c.b16 %v834, %v826
    %v1019 = vpack.c.b16 %v835, %v827
    %v1020 = vpack.c.b16 %v844, %v836
    %v1021 = vpack.c.b16 %v845, %v837
    %v1022 = vpack.c.b16 %v846, %v838
    %v1023 = vpack.c.b16 %v847, %v839
    %v1024 = vpack.c.b16 %v848, %v840
    %v1025 = vpack.c.b16 %v849, %v841
    %v1026 = vpack.c.b16 %v850, %v842
    %v1027 = vpack.c.b16 %v851, %v843
    %v1028 = vpack.c.b16 %v860, %v852
    %v1029 = vpack.c.b16 %v861, %v853
    %v1030 = vpack.c.b16 %v862, %v854
    %v1031 = vpack.c.b16 %v863, %v855
    %v1032 = vpack.c.b16 %v864, %v856
    %v1033 = vpack.c.b16 %v865, %v857
    %v1034 = vpack.c.b16 %v866, %v858
    %v1035 = vpack.c.b16 %v867, %v859
    %v1036 = vpack.c.b16 %v876, %v868
    %v1037 = vpack.c.b16 %v877, %v869
    %v1038 = vpack.c.b16 %v878, %v870
    %v1039 = vpack.c.b16 %v879, %v871
    %v1040 = vpack.c.b16 %v880, %v872
    %v1041 = vpack.c.b16 %v881, %v873
    %v1042 = vpack.c.b16 %v882, %v874
    %v1043 = vpack.c.b16 %v883, %v875
    %v1044 = vpack.c.b16 %v892, %v884
    %v1045 = vpack.c.b16 %v893, %v885
    %v1046 = vpack.c.b16 %v894, %v886
    %v1047 = vpack.c.b16 %v895, %v887
    %v1048 = vpack.c.b16 %v896, %v888
    %v1049 = vpack.c.b16 %v897, %v889
    %v1050 = vpack.c.b16 %v898, %v890
    %v1051 = vpack.c.b16 %v899, %v891
    %v1052 = vpack.c.b16 %v908, %v900
    %v1053 = vpack.c.b16 %v909, %v901
    %v1054 = vpack.c.b16 %v910, %v902
    %v1055 = vpack.c.b16 %v911, %v903
    %v1056 = vpack.c.b16 %v912, %v904
    %v1057 = vpack.c.b16 %v913, %v905
    %v1058 = vpack.c.b16 %v914, %v906
    %v1059 = vpack.c.b16 %v915, %v907
    %v1060 = vpack.c.b16 %v924, %v916
    %v1061 = vpack.c.b16 %v925, %v917
    %v1062 = vpack.c.b16 %v926, %v918
    %v1063 = vpack.c.b16 %v927, %v919
    %v1064 = vpack.c.b16 %v928, %v920
    %v1065 = vpack.c.b16 %v929, %v921
    %v1066 = vpack.c.b16 %v930, %v922
    %v1067 = vpack.c.b16 %v931, %v923
    %v1068 = vpack.c.b16 %v940, %v932
    %v1069 = vpack.c.b16 %v941, %v933
    %v1070 = vpack.c.b16 %v942, %v934
    %v1071 = vpack.c.b16 %v943, %v935
    %v1072 = vpack.c.b16 %v944, %v936
    %v1073 = vpack.c.b16 %v945, %v937
    %v1074 = vpack.c.b16 %v946, %v938
    %v1075 = vpack.c.b16 %v947, %v939
    %v1076 = vpack.c.b16 %v956, %v948
    %v1077 = vpack.c.b16 %v957, %v949
    %v1078 = vpack.c.b16 %v958, %v950
    %v1079 = vpack.c.b16 %v959, %v951
    %v1080 = vpack.c.b16 %v960, %v952
    %v1081 = vpack.c.b16 %v961, %v953
    %v1082 = vpack.c.b16 %v962, %v954
    %v1083 = vpack.c.b16 %v963, %v955
    %v1084 = vpack.c.b16 %v972, %v964
    %v1085 = vpack.c.b16 %v973, %v965
    %v1086 = vpack.c.b16 %v974, %v966
    %v1087 = vpack.c.b16 %v975, %v967
    %v1088 = vpack.c.b16 %v976, %v968
    %v1089 = vpack.c.b16 %v977, %v969
    %v1090 = vpack.c.b16 %v978, %v970
    %v1091 = vpack.c.b16 %v979, %v971
    %v1092 = vpack.c.b16 %v980, %v980
    %v1093 = vpack.c.b16 %v981, %v981
    %v1094 = vpack.c.b16 %v982, %v982
    %v1095 = vpack.c.b16 %v983, %v983
    %v1096 = vpack.c.b16 %v984, %v984
    %v1097 = vpack.c.b16 %v985, %v985
    %v1098 = vpack.c.b16 %v986, %v986
    %v1099 = vpack.c.b16 %v987, %v987
    %vm1204 = vcmask 719872
    %v1206 = vsel %vm1204, %v513, 0
    %vm1208 = vcmask 1043456
    %v1210 = vsel %vm1208, %v1092, 0
    %v1213 = vsel %vm1208, %v1093, 0
    %v1216 = vsel %vm1208, %v1094, 0
    %v1219 = vsel %vm1208, %v1095, 0
    %v1222 = vsel %vm1208, %v1096, 0
    %v1225 = vsel %vm1208, %v1097, 0
    %v1228 = vsel %vm1208, %v1098, 0
    %v1231 = vsel %vm1208, %v1099, 0
    %1233 = vmatprep.subr.bf16.mxu0 %v1045
    %1234 = vmatpush1.bf16.msra.mxu0 %v1044
    %1235 = vmatprep.subr.bf16.mxu0 %v1037
    %1236 = vmatpush1.bf16.msra.mxu0 %v1036
    %1237 = vmatprep.subr.bf16.mxu0 %v1029
    %1238 = vmatpush1.bf16.msra.mxu0 %v1028
    %1239 = vmatprep.subr.bf16.mxu0 %v1021
    %1240 = vmatpush1.bf16.msra.mxu0 %v1020
    %1241 = vmatprep.subr.bf16.mxu0 %v1013
    %1242 = vmatpush1.bf16.msra.mxu0 %v1012
    %1243 = vmatprep.subr.bf16.mxu0 %v1005
    %1244 = vmatpush1.bf16.msra.mxu0 %v1004
    %1245 = vmatprep.subr.bf16.mxu0 %v997
    %1246 = vmatpush1.bf16.msra.mxu0 %v996
    %1247 = vmatprep.subr.bf16.mxu0 %v989
    %1248 = vmatpush1.bf16.msra.mxu0 %v988
    %1249 = vmatprep.subr.bf16.mxu0 0
    %1250 = vmatpush2.bf16.msra.mxu0 0
    %1251 = vmatprep.subr.bf16.mxu0 0
    %1252 = vmatpush2.bf16.msra.mxu0 0
    %1253 = vmatprep.subr.bf16.mxu0 %v1213
    %1254 = vmatpush2.bf16.msra.mxu0 %v1210
    %1255 = vmatprep.subr.bf16.mxu0 %v1085
    %1256 = vmatpush2.bf16.msra.mxu0 %v1084
    %1257 = vmatprep.subr.bf16.mxu0 %v1077
    %1258 = vmatpush2.bf16.msra.mxu0 %v1076
    %1259 = vmatprep.subr.bf16.mxu0 %v1069
    %1260 = vmatpush2.bf16.msra.mxu0 %v1068
    %1261 = vmatprep.subr.bf16.mxu0 %v1061
    %1262 = vmatpush2.bf16.msra.mxu0 %v1060
    %1263 = vmatprep.subr.bf16.mxu0 %v1053
    %1264 = vmatpush2.bf16.msra.mxu0 %v1052
    %1265 = vmatprep.mubr.bf16.mxu0 %v1206
    %1266 = vmatmul.mubr.bf16.gmra.mxu0 %v512
    %v1267 = vpop.f32.mrf.mxu0
    %v1268 = vadd.f32 %v627, %v1267
    %v1269 = vpop.f32.mrf.mxu0
    %v1270 = vadd.f32 %v631, %v1269
    %v1271 = vpop.f32.mrf.mxu0
    %v1272 = vpop.f32.mrf.mxu0
    %1273 = vdwg.mxu0
    %1274 = vmatprep.subr.bf16.mxu0 %v1047
    %1275 = vmatpush1.bf16.msra.mxu0 %v1046
    %1276 = vmatprep.subr.bf16.mxu0 %v1039
    %1277 = vmatpush1.bf16.msra.mxu0 %v1038
    %1278 = vmatprep.subr.bf16.mxu0 %v1031
    %1279 = vmatpush1.bf16.msra.mxu0 %v1030
    %1280 = vmatprep.subr.bf16.mxu0 %v1023
    %1281 = vmatpush1.bf16.msra.mxu0 %v1022
    %1282 = vmatprep.subr.bf16.mxu0 %v1015
    %1283 = vmatpush1.bf16.msra.mxu0 %v1014
    %1284 = vmatprep.subr.bf16.mxu0 %v1007
    %1285 = vmatpush1.bf16.msra.mxu0 %v1006
    %1286 = vmatprep.subr.bf16.mxu0 %v999
    %1287 = vmatpush1.bf16.msra.mxu0 %v998
    %1288 = vmatprep.subr.bf16.mxu0 %v991
    %1289 = vmatpush1.bf16.msra.mxu0 %v990
    %1290 = vmatprep.subr.bf16.mxu0 0
    %1291 = vmatpush2.bf16.msra.mxu0 0
    %1292 = vmatprep.subr.bf16.mxu0 0
    %1293 = vmatpush2.bf16.msra.mxu0 0
    %1294 = vmatprep.subr.bf16.mxu0 %v1219
    %1295 = vmatpush2.bf16.msra.mxu0 %v1216
    %1296 = vmatprep.subr.bf16.mxu0 %v1087
    %1297 = vmatpush2.bf16.msra.mxu0 %v1086
    %1298 = vmatprep.subr.bf16.mxu0 %v1079
    %1299 = vmatpush2.bf16.msra.mxu0 %v1078
    %1300 = vmatprep.subr.bf16.mxu0 %v1071
    %1301 = vmatpush2.bf16.msra.mxu0 %v1070
    %1302 = vmatprep.subr.bf16.mxu0 %v1063
    %1303 = vmatpush2.bf16.msra.mxu0 %v1062
    %1304 = vmatprep.subr.bf16.mxu0 %v1055
    %1305 = vmatpush2.bf16.msra.mxu0 %v1054
    %1306 = vmatprep.mubr.bf16.mxu0 %v1206
    %1307 = vmatmul.mubr.bf16.gmra.mxu0 %v512
    %v1308 = vpop.f32.mrf.mxu0
    %v1309 = vadd.f32 %v635, %v1308
    %v1310 = vpop.f32.mrf.mxu0
    %v1311 = vadd.f32 %v639, %v1310
    %v1312 = vpop.f32.mrf.mxu0
    %v1313 = vpop.f32.mrf.mxu0
    %1314 = vdwg.mxu0
    %1315 = vmatprep.subr.bf16.mxu0 %v1049
    %1316 = vmatpush1.bf16.msra.mxu0 %v1048
    %1317 = vmatprep.subr.bf16.mxu0 %v1041
    %1318 = vmatpush1.bf16.msra.mxu0 %v1040
    %1319 = vmatprep.subr.bf16.mxu0 %v1033
    %1320 = vmatpush1.bf16.msra.mxu0 %v1032
    %1321 = vmatprep.subr.bf16.mxu0 %v1025
    %1322 = vmatpush1.bf16.msra.mxu0 %v1024
    %1323 = vmatprep.subr.bf16.mxu0 %v1017
    %1324 = vmatpush1.bf16.msra.mxu0 %v1016
    %1325 = vmatprep.subr.bf16.mxu0 %v1009
    %1326 = vmatpush1.bf16.msra.mxu0 %v1008
    %1327 = vmatprep.subr.bf16.mxu0 %v1001
    %1328 = vmatpush1.bf16.msra.mxu0 %v1000
    %1329 = vmatprep.subr.bf16.mxu0 %v993
    %1330 = vmatpush1.bf16.msra.mxu0 %v992
    %1331 = vmatprep.subr.bf16.mxu0 0
    %1332 = vmatpush2.bf16.msra.mxu0 0
    %1333 = vmatprep.subr.bf16.mxu0 0
    %1334 = vmatpush2.bf16.msra.mxu0 0
    %1335 = vmatprep.subr.bf16.mxu0 %v1225
    %1336 = vmatpush2.bf16.msra.mxu0 %v1222
    %1337 = vmatprep.subr.bf16.mxu0 %v1089
    %1338 = vmatpush2.bf16.msra.mxu0 %v1088
    %1339 = vmatprep.subr.bf16.mxu0 %v1081
    %1340 = vmatpush2.bf16.msra.mxu0 %v1080
    %1341 = vmatprep.subr.bf16.mxu0 %v1073
    %1342 = vmatpush2.bf16.msra.mxu0 %v1072
    %1343 = vmatprep.subr.bf16.mxu0 %v1065
    %1344 = vmatpush2.bf16.msra.mxu0 %v1064
    %1345 = vmatprep.subr.bf16.mxu0 %v1057
    %1346 = vmatpush2.bf16.msra.mxu0 %v1056
    %1347 = vmatprep.mubr.bf16.mxu0 %v1206
    %1348 = vmatmul.mubr.bf16.gmra.mxu0 %v512
    %v1349 = vpop.f32.mrf.mxu0
    %v1350 = vadd.f32 %v643, %v1349
    %v1351 = vpop.f32.mrf.mxu0
    %v1352 = vadd.f32 %v647, %v1351
    %v1353 = vpop.f32.mrf.mxu0
    %v1354 = vpop.f32.mrf.mxu0
    %1355 = vdwg.mxu0
    %1356 = vmatprep.subr.bf16.mxu0 %v1051
    %1357 = vmatpush1.bf16.msra.mxu0 %v1050
    %1358 = vmatprep.subr.bf16.mxu0 %v1043
    %1359 = vmatpush1.bf16.msra.mxu0 %v1042
    %1360 = vmatprep.subr.bf16.mxu0 %v1035
    %1361 = vmatpush1.bf16.msra.mxu0 %v1034
    %1362 = vmatprep.subr.bf16.mxu0 %v1027
    %1363 = vmatpush1.bf16.msra.mxu0 %v1026
    %1364 = vmatprep.subr.bf16.mxu0 %v1019
    %1365 = vmatpush1.bf16.msra.mxu0 %v1018
    %1366 = vmatprep.subr.bf16.mxu0 %v1011
    %1367 = vmatpush1.bf16.msra.mxu0 %v1010
    %1368 = vmatprep.subr.bf16.mxu0 %v1003
    %1369 = vmatpush1.bf16.msra.mxu0 %v1002
    %1370 = vmatprep.subr.bf16.mxu0 %v995
    %1371 = vmatpush1.bf16.msra.mxu0 %v994
    %1372 = vmatprep.subr.bf16.mxu0 0
    %1373 = vmatpush2.bf16.msra.mxu0 0
    %1374 = vmatprep.subr.bf16.mxu0 0
    %1375 = vmatpush2.bf16.msra.mxu0 0
    %1376 = vmatprep.subr.bf16.mxu0 %v1231
    %1377 = vmatpush2.bf16.msra.mxu0 %v1228
    %1378 = vmatprep.subr.bf16.mxu0 %v1091
    %1379 = vmatpush2.bf16.msra.mxu0 %v1090
    %1380 = vmatprep.subr.bf16.mxu0 %v1083
    %1381 = vmatpush2.bf16.msra.mxu0 %v1082
    %1382 = vmatprep.subr.bf16.mxu0 %v1075
    %1383 = vmatpush2.bf16.msra.mxu0 %v1074
    %1384 = vmatprep.subr.bf16.mxu0 %v1067
    %1385 = vmatpush2.bf16.msra.mxu0 %v1066
    %1386 = vmatprep.subr.bf16.mxu0 %v1059
    %1387 = vmatpush2.bf16.msra.mxu0 %v1058
    %1388 = vmatprep.mubr.bf16.mxu0 %v1206
    %1389 = vmatmul.mubr.bf16.gmra.mxu0 %v512
    %v1390 = vpop.f32.mrf.mxu0
    %v1391 = vadd.f32 %v651, %v1390
    %v1392 = vpop.f32.mrf.mxu0
    %v1393 = vadd.f32 %v655, %v1392
    %v1394 = vpop.f32.mrf.mxu0
    %v1395 = vpop.f32.mrf.mxu0
    %1396 = vdwg.mxu0
    %v1397 = vmax.f32 %v1268, 0.0
    %v1398 = vmax.f32 %v1270, 0.0
    %v1399 = vmax.f32 %v1309, 0.0
    %v1400 = vmax.f32 %v1311, 0.0
    %v1401 = vmax.f32 %v1350, 0.0
    %v1402 = vmax.f32 %v1352, 0.0
    %v1403 = vmax.f32 %v1391, 0.0
    %v1404 = vmax.f32 %v1393, 0.0
    %v1405 = vpack.c.bf16 %v1397, %v1397
    %v1406 = vpack.c.bf16 %v1398, %v1398
    %v1407 = vpack.c.bf16 %v1399, %v1399
    %v1408 = vpack.c.bf16 %v1400, %v1400
    %v1409 = vpack.c.bf16 %v1401, %v1401
    %v1410 = vpack.c.bf16 %v1402, %v1402
    %v1411 = vpack.c.bf16 %v1403, %v1403
    %v1412 = vpack.c.bf16 %v1404, %v1404
    %v1413 = vld [vmem:[#allocation11] sm:$0xff]
    %v1414 = vld [vmem:[#allocation11 + $0x8] sm:$0xff]
    %v1415 = vld [vmem:[#allocation11 + $0x10] sm:$0xff]
    %v1416 = vld [vmem:[#allocation11 + $0x18] sm:$0xff]
    %v1417 = vld [vmem:[#allocation11 + $0x20] sm:$0xff]
    %v1418 = vld [vmem:[#allocation11 + $0x28] sm:$0xff]
    %v1419 = vld [vmem:[#allocation11 + $0x30] sm:$0xff]
    %v1420 = vld [vmem:[#allocation11 + $0x38] sm:$0xff]
    %v1421 = vld [vmem:[#allocation11 + $0x40] sm:$0xff]
    %v1422 = vld [vmem:[#allocation11 + $0x48] sm:$0xff]
    %v1423 = vld [vmem:[#allocation11 + $0x50] sm:$0xff]
    %v1424 = vld [vmem:[#allocation11 + $0x58] sm:$0xff]
    %v1425 = vld [vmem:[#allocation11 + $0x60] sm:$0xff]
    %v1426 = vld [vmem:[#allocation11 + $0x68] sm:$0xff]
    %v1427 = vld [vmem:[#allocation11 + $0x70] sm:$0xff]
    %v1428 = vld [vmem:[#allocation11 + $0x78] sm:$0xff]
    %v1429 = vld [vmem:[#allocation11 + $0x80] sm:$0xff]
    %v1430 = vld [vmem:[#allocation11 + $0x88] sm:$0xff]
    %v1431 = vld [vmem:[#allocation11 + $0x90] sm:$0xff]
    %v1432 = vld [vmem:[#allocation11 + $0x98] sm:$0xff]
    %v1433 = vld [vmem:[#allocation11 + $0xa0] sm:$0xff]
    %v1434 = vld [vmem:[#allocation11 + $0xa8] sm:$0xff]
    %v1435 = vld [vmem:[#allocation11 + $0xb0] sm:$0xff]
    %v1436 = vld [vmem:[#allocation11 + $0xb8] sm:$0xff]
    %v1437 = vld [vmem:[#allocation11 + $0xc0] sm:$0xff]
    %v1438 = vld [vmem:[#allocation11 + $0xc8] sm:$0xff]
    %v1439 = vld [vmem:[#allocation11 + $0xd0] sm:$0xff]
    %v1440 = vld [vmem:[#allocation11 + $0xd8] sm:$0xff]
    %v1441 = vld [vmem:[#allocation11 + $0xe0] sm:$0xff]
    %v1442 = vld [vmem:[#allocation11 + $0xe8] sm:$0xff]
    %v1443 = vld [vmem:[#allocation11 + $0xf0] sm:$0xff]
    %v1444 = vld [vmem:[#allocation11 + $0xf8] sm:$0xff]
    %v1445 = vld [vmem:[#allocation11 + $0x100] sm:$0xff]
    %v1446 = vld [vmem:[#allocation11 + $0x108] sm:$0xff]
    %v1447 = vld [vmem:[#allocation11 + $0x110] sm:$0xff]
    %v1448 = vld [vmem:[#allocation11 + $0x118] sm:$0xff]
    %v1449 = vld [vmem:[#allocation11 + $0x120] sm:$0xff]
    %v1450 = vld [vmem:[#allocation11 + $0x128] sm:$0xff]
    %v1451 = vld [vmem:[#allocation11 + $0x130] sm:$0xff]
    %v1452 = vld [vmem:[#allocation11 + $0x138] sm:$0xff]
    %v1453 = vld [vmem:[#allocation11 + $0x140] sm:$0xff]
    %v1454 = vld [vmem:[#allocation11 + $0x148] sm:$0xff]
    %v1455 = vld [vmem:[#allocation11 + $0x150] sm:$0xff]
    %v1456 = vld [vmem:[#allocation11 + $0x158] sm:$0xff]
    %v1457 = vld [vmem:[#allocation11 + $0x160] sm:$0xff]
    %v1458 = vld [vmem:[#allocation11 + $0x168] sm:$0xff]
    %v1459 = vld [vmem:[#allocation11 + $0x170] sm:$0xff]
    %v1460 = vld [vmem:[#allocation11 + $0x178] sm:$0xff]
    %v1461 = vld [vmem:[#allocation11 + $0x180] sm:$0xff]
    %v1462 = vld [vmem:[#allocation11 + $0x188] sm:$0xff]
    %v1463 = vld [vmem:[#allocation11 + $0x190] sm:$0xff]
    %v1464 = vld [vmem:[#allocation11 + $0x198] sm:$0xff]
    %v1465 = vld [vmem:[#allocation11 + $0x1a0] sm:$0xff]
    %v1466 = vld [vmem:[#allocation11 + $0x1a8] sm:$0xff]
    %v1467 = vld [vmem:[#allocation11 + $0x1b0] sm:$0xff]
    %v1468 = vld [vmem:[#allocation11 + $0x1b8] sm:$0xff]
    %v1469 = vld [vmem:[#allocation11 + $0x1c0] sm:$0xff]
    %v1470 = vld [vmem:[#allocation11 + $0x1c8] sm:$0xff]
    %v1471 = vld [vmem:[#allocation11 + $0x1d0] sm:$0xff]
    %v1472 = vld [vmem:[#allocation11 + $0x1d8] sm:$0xff]
    %v1473 = vld [vmem:[#allocation11 + $0x1e0] sm:$0xff]
    %v1474 = vld [vmem:[#allocation11 + $0x1e8] sm:$0xff]
    %v1475 = vld [vmem:[#allocation11 + $0x1f0] sm:$0xff]
    %v1476 = vld [vmem:[#allocation11 + $0x1f8] sm:$0xff]
    %v1477 = vld [vmem:[#allocation11 + $0x200] sm:$0xff]
    %v1478 = vld [vmem:[#allocation11 + $0x208] sm:$0xff]
    %v1479 = vld [vmem:[#allocation11 + $0x210] sm:$0xff]
    %v1480 = vld [vmem:[#allocation11 + $0x218] sm:$0xff]
    %v1481 = vld [vmem:[#allocation11 + $0x220] sm:$0xff]
    %v1482 = vld [vmem:[#allocation11 + $0x228] sm:$0xff]
    %v1483 = vld [vmem:[#allocation11 + $0x230] sm:$0xff]
    %v1484 = vld [vmem:[#allocation11 + $0x238] sm:$0xff]
    %v1485 = vld [vmem:[#allocation11 + $0x240] sm:$0xff]
    %v1486 = vld [vmem:[#allocation11 + $0x248] sm:$0xff]
    %v1487 = vld [vmem:[#allocation11 + $0x250] sm:$0xff]
    %v1488 = vld [vmem:[#allocation11 + $0x258] sm:$0xff]
    %v1489 = vld [vmem:[#allocation11 + $0x260] sm:$0xff]
    %v1490 = vld [vmem:[#allocation11 + $0x268] sm:$0xff]
    %v1491 = vld [vmem:[#allocation11 + $0x270] sm:$0xff]
    %v1492 = vld [vmem:[#allocation11 + $0x278] sm:$0xff]
    %v1493 = vld [vmem:[#allocation11 + $0x280] sm:$0xff]
    %v1494 = vld [vmem:[#allocation11 + $0x288] sm:$0xff]
    %v1495 = vld [vmem:[#allocation11 + $0x290] sm:$0xff]
    %v1496 = vld [vmem:[#allocation11 + $0x298] sm:$0xff]
    %v1497 = vld [vmem:[#allocation11 + $0x2a0] sm:$0xff]
    %v1498 = vld [vmem:[#allocation11 + $0x2a8] sm:$0xff]
    %v1499 = vld [vmem:[#allocation11 + $0x2b0] sm:$0xff]
    %v1500 = vld [vmem:[#allocation11 + $0x2b8] sm:$0xff]
    %v1501 = vld [vmem:[#allocation11 + $0x2c0] sm:$0xff]
    %v1502 = vld [vmem:[#allocation11 + $0x2c8] sm:$0xff]
    %v1503 = vld [vmem:[#allocation11 + $0x2d0] sm:$0xff]
    %v1504 = vld [vmem:[#allocation11 + $0x2d8] sm:$0xff]
    %v1505 = vld [vmem:[#allocation11 + $0x2e0] sm:$0xff]
    %v1506 = vld [vmem:[#allocation11 + $0x2e8] sm:$0xff]
    %v1507 = vld [vmem:[#allocation11 + $0x2f0] sm:$0xff]
    %v1508 = vld [vmem:[#allocation11 + $0x2f8] sm:$0xff]
    %v1509 = vld [vmem:[#allocation11 + $0x300] sm:$0xff]
    %v1510 = vld [vmem:[#allocation11 + $0x308] sm:$0xff]
    %v1511 = vld [vmem:[#allocation11 + $0x310] sm:$0xff]
    %v1512 = vld [vmem:[#allocation11 + $0x318] sm:$0xff]
    %v1513 = vld [vmem:[#allocation11 + $0x320] sm:$0xff]
    %v1514 = vld [vmem:[#allocation11 + $0x328] sm:$0xff]
    %v1515 = vld [vmem:[#allocation11 + $0x330] sm:$0xff]
    %v1516 = vld [vmem:[#allocation11 + $0x338] sm:$0xff]
    %v1517 = vld [vmem:[#allocation11 + $0x340] sm:$0xff]
    %v1518 = vld [vmem:[#allocation11 + $0x348] sm:$0xff]
    %v1519 = vld [vmem:[#allocation11 + $0x350] sm:$0xff]
    %v1520 = vld [vmem:[#allocation11 + $0x358] sm:$0xff]
    %v1521 = vld [vmem:[#allocation11 + $0x360] sm:$0xff]
    %v1522 = vld [vmem:[#allocation11 + $0x368] sm:$0xff]
    %v1523 = vld [vmem:[#allocation11 + $0x370] sm:$0xff]
    %v1524 = vld [vmem:[#allocation11 + $0x378] sm:$0xff]
    %v1525 = vld [vmem:[#allocation11 + $0x380] sm:$0xff]
    %v1526 = vld [vmem:[#allocation11 + $0x388] sm:$0xff]
    %v1527 = vld [vmem:[#allocation11 + $0x390] sm:$0xff]
    %v1528 = vld [vmem:[#allocation11 + $0x398] sm:$0xff]
    %v1529 = vld [vmem:[#allocation11 + $0x3a0] sm:$0xff]
    %v1530 = vld [vmem:[#allocation11 + $0x3a8] sm:$0xff]
    %v1531 = vld [vmem:[#allocation11 + $0x3b0] sm:$0xff]
    %v1532 = vld [vmem:[#allocation11 + $0x3b8] sm:$0xff]
    %v1533 = vld [vmem:[#allocation11 + $0x3c0] sm:$0xff]
    %v1534 = vld [vmem:[#allocation11 + $0x3c8] sm:$0xff]
    %v1535 = vld [vmem:[#allocation11 + $0x3d0] sm:$0xff]
    %v1536 = vld [vmem:[#allocation11 + $0x3d8] sm:$0xff]
    %v1537 = vld [vmem:[#allocation11 + $0x3e0] sm:$0xff]
    %v1538 = vld [vmem:[#allocation11 + $0x3e8] sm:$0xff]
    %v1539 = vld [vmem:[#allocation11 + $0x3f0] sm:$0xff]
    %v1540 = vld [vmem:[#allocation11 + $0x3f8] sm:$0xff]
    %v1541 = vld [vmem:[#allocation11 + $0x400] sm:$0xff]
    %v1542 = vld [vmem:[#allocation11 + $0x408] sm:$0xff]
    %v1543 = vld [vmem:[#allocation11 + $0x410] sm:$0xff]
    %v1544 = vld [vmem:[#allocation11 + $0x418] sm:$0xff]
    %v1545 = vld [vmem:[#allocation11 + $0x420] sm:$0xff]
    %v1546 = vld [vmem:[#allocation11 + $0x428] sm:$0xff]
    %v1547 = vld [vmem:[#allocation11 + $0x430] sm:$0xff]
    %v1548 = vld [vmem:[#allocation11 + $0x438] sm:$0xff]
    %v1549 = vld [vmem:[#allocation11 + $0x440] sm:$0xff]
    %v1550 = vld [vmem:[#allocation11 + $0x448] sm:$0xff]
    %v1551 = vld [vmem:[#allocation11 + $0x450] sm:$0xff]
    %v1552 = vld [vmem:[#allocation11 + $0x458] sm:$0xff]
    %v1553 = vld [vmem:[#allocation11 + $0x460] sm:$0xff]
    %v1554 = vld [vmem:[#allocation11 + $0x468] sm:$0xff]
    %v1555 = vld [vmem:[#allocation11 + $0x470] sm:$0xff]
    %v1556 = vld [vmem:[#allocation11 + $0x478] sm:$0xff]
    %v1557 = vld [vmem:[#allocation11 + $0x480] sm:$0xff]
    %v1558 = vld [vmem:[#allocation11 + $0x488] sm:$0xff]
    %v1559 = vld [vmem:[#allocation11 + $0x490] sm:$0xff]
    %v1560 = vld [vmem:[#allocation11 + $0x498] sm:$0xff]
    %v1561 = vld [vmem:[#allocation11 + $0x4a0] sm:$0xff]
    %v1562 = vld [vmem:[#allocation11 + $0x4a8] sm:$0xff]
    %v1563 = vld [vmem:[#allocation11 + $0x4b0] sm:$0xff]
    %v1564 = vld [vmem:[#allocation11 + $0x4b8] sm:$0xff]
    %v1565 = vld [vmem:[#allocation11 + $0x4c0] sm:$0xff]
    %v1566 = vld [vmem:[#allocation11 + $0x4c8] sm:$0xff]
    %v1567 = vld [vmem:[#allocation11 + $0x4d0] sm:$0xff]
    %v1568 = vld [vmem:[#allocation11 + $0x4d8] sm:$0xff]
    %v1569 = vld [vmem:[#allocation11 + $0x4e0] sm:$0xff]
    %v1570 = vld [vmem:[#allocation11 + $0x4e8] sm:$0xff]
    %v1571 = vld [vmem:[#allocation11 + $0x4f0] sm:$0xff]
    %v1572 = vld [vmem:[#allocation11 + $0x4f8] sm:$0xff]
    %v1573 = vld [vmem:[#allocation11 + $0x500] sm:$0xff]
    %v1574 = vld [vmem:[#allocation11 + $0x508] sm:$0xff]
    %v1575 = vld [vmem:[#allocation11 + $0x510] sm:$0xff]
    %v1576 = vld [vmem:[#allocation11 + $0x518] sm:$0xff]
    %v1577 = vld [vmem:[#allocation11 + $0x520] sm:$0xff]
    %v1578 = vld [vmem:[#allocation11 + $0x528] sm:$0xff]
    %v1579 = vld [vmem:[#allocation11 + $0x530] sm:$0xff]
    %v1580 = vld [vmem:[#allocation11 + $0x538] sm:$0xff]
    %v1581 = vld [vmem:[#allocation11 + $0x540] sm:$0xff]
    %v1582 = vld [vmem:[#allocation11 + $0x548] sm:$0xff]
    %v1583 = vld [vmem:[#allocation11 + $0x550] sm:$0xff]
    %v1584 = vld [vmem:[#allocation11 + $0x558] sm:$0xff]
    %v1585 = vld [vmem:[#allocation11 + $0x560] sm:$0xff]
    %v1586 = vld [vmem:[#allocation11 + $0x568] sm:$0xff]
    %v1587 = vld [vmem:[#allocation11 + $0x570] sm:$0xff]
    %v1588 = vld [vmem:[#allocation11 + $0x578] sm:$0xff]
    %v1589 = vld [vmem:[#allocation11 + $0x580] sm:$0xff]
    %v1590 = vld [vmem:[#allocation11 + $0x588] sm:$0xff]
    %v1591 = vld [vmem:[#allocation11 + $0x590] sm:$0xff]
    %v1592 = vld [vmem:[#allocation11 + $0x598] sm:$0xff]
    %v1593 = vld [vmem:[#allocation11 + $0x5a0] sm:$0xff]
    %v1594 = vld [vmem:[#allocation11 + $0x5a8] sm:$0xff]
    %v1595 = vld [vmem:[#allocation11 + $0x5b0] sm:$0xff]
    %v1596 = vld [vmem:[#allocation11 + $0x5b8] sm:$0xff]
    %v1597 = vld [vmem:[#allocation11 + $0x5c0] sm:$0xff]
    %v1598 = vld [vmem:[#allocation11 + $0x5c8] sm:$0xff]
    %v1599 = vld [vmem:[#allocation11 + $0x5d0] sm:$0xff]
    %v1600 = vld [vmem:[#allocation11 + $0x5d8] sm:$0xff]
    %v1601 = vld [vmem:[#allocation11 + $0x5e0] sm:$0xff]
    %v1602 = vld [vmem:[#allocation11 + $0x5e8] sm:$0xff]
    %v1603 = vld [vmem:[#allocation11 + $0x5f0] sm:$0xff]
    %v1604 = vld [vmem:[#allocation11 + $0x5f8] sm:$0xff]
    %v1605 = vld [vmem:[#allocation11 + $0x600] sm:$0xff]
    %v1606 = vld [vmem:[#allocation11 + $0x608] sm:$0xff]
    %v1607 = vld [vmem:[#allocation11 + $0x610] sm:$0xff]
    %v1608 = vld [vmem:[#allocation11 + $0x618] sm:$0xff]
    %v1609 = vld [vmem:[#allocation11 + $0x620] sm:$0xff]
    %v1610 = vld [vmem:[#allocation11 + $0x628] sm:$0xff]
    %v1611 = vld [vmem:[#allocation11 + $0x630] sm:$0xff]
    %v1612 = vld [vmem:[#allocation11 + $0x638] sm:$0xff]
    %v1613 = vld [vmem:[#allocation11 + $0x640] sm:$0xff]
    %v1614 = vld [vmem:[#allocation11 + $0x648] sm:$0xff]
    %v1615 = vld [vmem:[#allocation11 + $0x650] sm:$0xff]
    %v1616 = vld [vmem:[#allocation11 + $0x658] sm:$0xff]
    %v1617 = vld [vmem:[#allocation11 + $0x660] sm:$0xff]
    %v1618 = vld [vmem:[#allocation11 + $0x668] sm:$0xff]
    %v1619 = vld [vmem:[#allocation11 + $0x670] sm:$0xff]
    %v1620 = vld [vmem:[#allocation11 + $0x678] sm:$0xff]
    %v1621 = vld [vmem:[#allocation11 + $0x680] sm:$0xff]
    %v1622 = vld [vmem:[#allocation11 + $0x688] sm:$0xff]
    %v1623 = vld [vmem:[#allocation11 + $0x690] sm:$0xff]
    %v1624 = vld [vmem:[#allocation11 + $0x698] sm:$0xff]
    %v1625 = vld [vmem:[#allocation11 + $0x6a0] sm:$0xff]
    %v1626 = vld [vmem:[#allocation11 + $0x6a8] sm:$0xff]
    %v1627 = vld [vmem:[#allocation11 + $0x6b0] sm:$0xff]
    %v1628 = vld [vmem:[#allocation11 + $0x6b8] sm:$0xff]
    %v1629 = vld [vmem:[#allocation11 + $0x6c0] sm:$0xff]
    %v1630 = vld [vmem:[#allocation11 + $0x6c8] sm:$0xff]
    %v1631 = vld [vmem:[#allocation11 + $0x6d0] sm:$0xff]
    %v1632 = vld [vmem:[#allocation11 + $0x6d8] sm:$0xff]
    %v1633 = vld [vmem:[#allocation11 + $0x6e0] sm:$0xff]
    %v1634 = vld [vmem:[#allocation11 + $0x6e8] sm:$0xff]
    %v1635 = vld [vmem:[#allocation11 + $0x6f0] sm:$0xff]
    %v1636 = vld [vmem:[#allocation11 + $0x6f8] sm:$0xff]
    %v1637 = vld [vmem:[#allocation11 + $0x700] sm:$0xff]
    %v1638 = vld [vmem:[#allocation11 + $0x708] sm:$0xff]
    %v1639 = vld [vmem:[#allocation11 + $0x710] sm:$0xff]
    %v1640 = vld [vmem:[#allocation11 + $0x718] sm:$0xff]
    %v1641 = vld [vmem:[#allocation11 + $0x720] sm:$0xff]
    %v1642 = vld [vmem:[#allocation11 + $0x728] sm:$0xff]
    %v1643 = vld [vmem:[#allocation11 + $0x730] sm:$0xff]
    %v1644 = vld [vmem:[#allocation11 + $0x738] sm:$0xff]
    %v1645 = vld [vmem:[#allocation11 + $0x740] sm:$0xff]
    %v1646 = vld [vmem:[#allocation11 + $0x748] sm:$0xff]
    %v1647 = vld [vmem:[#allocation11 + $0x750] sm:$0xff]
    %v1648 = vld [vmem:[#allocation11 + $0x758] sm:$0xff]
    %v1649 = vld [vmem:[#allocation11 + $0x760] sm:$0xff]
    %v1650 = vld [vmem:[#allocation11 + $0x768] sm:$0xff]
    %v1651 = vld [vmem:[#allocation11 + $0x770] sm:$0xff]
    %v1652 = vld [vmem:[#allocation11 + $0x778] sm:$0xff]
    %v1653 = vld [vmem:[#allocation11 + $0x780] sm:$0xff]
    %v1654 = vld [vmem:[#allocation11 + $0x788] sm:$0xff]
    %v1655 = vld [vmem:[#allocation11 + $0x790] sm:$0xff]
    %v1656 = vld [vmem:[#allocation11 + $0x798] sm:$0xff]
    %v1657 = vld [vmem:[#allocation11 + $0x7a0] sm:$0xff]
    %v1658 = vld [vmem:[#allocation11 + $0x7a8] sm:$0xff]
    %v1659 = vld [vmem:[#allocation11 + $0x7b0] sm:$0xff]
    %v1660 = vld [vmem:[#allocation11 + $0x7b8] sm:$0xff]
    %v1661 = vld [vmem:[#allocation11 + $0x7c0] sm:$0xff]
    %v1662 = vld [vmem:[#allocation11 + $0x7c8] sm:$0xff]
    %v1663 = vld [vmem:[#allocation11 + $0x7d0] sm:$0xff]
    %v1664 = vld [vmem:[#allocation11 + $0x7d8] sm:$0xff]
    %v1665 = vld [vmem:[#allocation11 + $0x7e0] sm:$0xff]
    %v1666 = vld [vmem:[#allocation11 + $0x7e8] sm:$0xff]
    %v1667 = vld [vmem:[#allocation11 + $0x7f0] sm:$0xff]
    %v1668 = vld [vmem:[#allocation11 + $0x7f8] sm:$0xff]
    %v1669 = vld [vmem:[#allocation11 + $0x800] sm:$0xff]
    %v1670 = vld [vmem:[#allocation11 + $0x808] sm:$0xff]
    %v1671 = vld [vmem:[#allocation11 + $0x810] sm:$0xff]
    %v1672 = vld [vmem:[#allocation11 + $0x818] sm:$0xff]
    %v1673 = vld [vmem:[#allocation11 + $0x820] sm:$0xff]
    %v1674 = vld [vmem:[#allocation11 + $0x828] sm:$0xff]
    %v1675 = vld [vmem:[#allocation11 + $0x830] sm:$0xff]
    %v1676 = vld [vmem:[#allocation11 + $0x838] sm:$0xff]
    %v1677 = vld [vmem:[#allocation11 + $0x840] sm:$0xff]
    %v1678 = vld [vmem:[#allocation11 + $0x848] sm:$0xff]
    %v1679 = vld [vmem:[#allocation11 + $0x850] sm:$0xff]
    %v1680 = vld [vmem:[#allocation11 + $0x858] sm:$0xff]
    %v1681 = vld [vmem:[#allocation11 + $0x860] sm:$0xff]
    %v1682 = vld [vmem:[#allocation11 + $0x868] sm:$0xff]
    %v1683 = vld [vmem:[#allocation11 + $0x870] sm:$0xff]
    %v1684 = vld [vmem:[#allocation11 + $0x878] sm:$0xff]
    %v1685 = vld [vmem:[#allocation11 + $0x880] sm:$0xff]
    %v1686 = vld [vmem:[#allocation11 + $0x888] sm:$0xff]
    %v1687 = vld [vmem:[#allocation11 + $0x890] sm:$0xff]
    %v1688 = vld [vmem:[#allocation11 + $0x898] sm:$0xff]
    %v1689 = vld [vmem:[#allocation11 + $0x8a0] sm:$0xff]
    %v1690 = vld [vmem:[#allocation11 + $0x8a8] sm:$0xff]
    %v1691 = vld [vmem:[#allocation11 + $0x8b0] sm:$0xff]
    %v1692 = vld [vmem:[#allocation11 + $0x8b8] sm:$0xff]
    %v1693 = vld [vmem:[#allocation11 + $0x8c0] sm:$0xff]
    %v1694 = vld [vmem:[#allocation11 + $0x8c8] sm:$0xff]
    %v1695 = vld [vmem:[#allocation11 + $0x8d0] sm:$0xff]
    %v1696 = vld [vmem:[#allocation11 + $0x8d8] sm:$0xff]
    %v1697 = vld [vmem:[#allocation11 + $0x8e0] sm:$0xff]
    %v1698 = vld [vmem:[#allocation11 + $0x8e8] sm:$0xff]
    %v1699 = vld [vmem:[#allocation11 + $0x8f0] sm:$0xff]
    %v1700 = vld [vmem:[#allocation11 + $0x8f8] sm:$0xff]
    %v1701 = vld [vmem:[#allocation11 + $0x900] sm:$0xff]
    %v1702 = vld [vmem:[#allocation11 + $0x908] sm:$0xff]
    %v1703 = vld [vmem:[#allocation11 + $0x910] sm:$0xff]
    %v1704 = vld [vmem:[#allocation11 + $0x918] sm:$0xff]
    %v1705 = vld [vmem:[#allocation11 + $0x920] sm:$0xff]
    %v1706 = vld [vmem:[#allocation11 + $0x928] sm:$0xff]
    %v1707 = vld [vmem:[#allocation11 + $0x930] sm:$0xff]
    %v1708 = vld [vmem:[#allocation11 + $0x938] sm:$0xff]
    %v1709 = vld [vmem:[#allocation11 + $0x940] sm:$0xff]
    %v1710 = vld [vmem:[#allocation11 + $0x948] sm:$0xff]
    %v1711 = vld [vmem:[#allocation11 + $0x950] sm:$0xff]
    %v1712 = vld [vmem:[#allocation11 + $0x958] sm:$0xff]
    %v1713 = vld [vmem:[#allocation11 + $0x960] sm:$0xff]
    %v1714 = vld [vmem:[#allocation11 + $0x968] sm:$0xff]
    %v1715 = vld [vmem:[#allocation11 + $0x970] sm:$0xff]
    %v1716 = vld [vmem:[#allocation11 + $0x978] sm:$0xff]
    %v1717 = vld [vmem:[#allocation11 + $0x980] sm:$0xff]
    %v1718 = vld [vmem:[#allocation11 + $0x988] sm:$0xff]
    %v1719 = vld [vmem:[#allocation11 + $0x990] sm:$0xff]
    %v1720 = vld [vmem:[#allocation11 + $0x998] sm:$0xff]
    %v1721 = vld [vmem:[#allocation11 + $0x9a0] sm:$0xff]
    %v1722 = vld [vmem:[#allocation11 + $0x9a8] sm:$0xff]
    %v1723 = vld [vmem:[#allocation11 + $0x9b0] sm:$0xff]
    %v1724 = vld [vmem:[#allocation11 + $0x9b8] sm:$0xff]
    %v1725 = vld [vmem:[#allocation11 + $0x9c0] sm:$0xff]
    %v1726 = vld [vmem:[#allocation11 + $0x9c8] sm:$0xff]
    %v1727 = vld [vmem:[#allocation11 + $0x9d0] sm:$0xff]
    %v1728 = vld [vmem:[#allocation11 + $0x9d8] sm:$0xff]
    %v1729 = vld [vmem:[#allocation11 + $0x9e0] sm:$0xff]
    %v1730 = vld [vmem:[#allocation11 + $0x9e8] sm:$0xff]
    %v1731 = vld [vmem:[#allocation11 + $0x9f0] sm:$0xff]
    %v1732 = vld [vmem:[#allocation11 + $0x9f8] sm:$0xff]
    %v1733 = vld [vmem:[#allocation11 + $0xa00] sm:$0xff]
    %v1734 = vld [vmem:[#allocation11 + $0xa08] sm:$0xff]
    %v1735 = vld [vmem:[#allocation11 + $0xa10] sm:$0xff]
    %v1736 = vld [vmem:[#allocation11 + $0xa18] sm:$0xff]
    %v1737 = vld [vmem:[#allocation11 + $0xa20] sm:$0xff]
    %v1738 = vld [vmem:[#allocation11 + $0xa28] sm:$0xff]
    %v1739 = vld [vmem:[#allocation11 + $0xa30] sm:$0xff]
    %v1740 = vld [vmem:[#allocation11 + $0xa38] sm:$0xff]
    %v1741 = vld [vmem:[#allocation11 + $0xa40] sm:$0xff]
    %v1742 = vld [vmem:[#allocation11 + $0xa48] sm:$0xff]
    %v1743 = vld [vmem:[#allocation11 + $0xa50] sm:$0xff]
    %v1744 = vld [vmem:[#allocation11 + $0xa58] sm:$0xff]
    %v1745 = vld [vmem:[#allocation11 + $0xa60] sm:$0xff]
    %v1746 = vld [vmem:[#allocation11 + $0xa68] sm:$0xff]
    %v1747 = vld [vmem:[#allocation11 + $0xa70] sm:$0xff]
    %v1748 = vld [vmem:[#allocation11 + $0xa78] sm:$0xff]
    %v1749 = vld [vmem:[#allocation11 + $0xa80] sm:$0xff]
    %v1750 = vld [vmem:[#allocation11 + $0xa88] sm:$0xff]
    %v1751 = vld [vmem:[#allocation11 + $0xa90] sm:$0xff]
    %v1752 = vld [vmem:[#allocation11 + $0xa98] sm:$0xff]
    %v1753 = vld [vmem:[#allocation11 + $0xaa0] sm:$0xff]
    %v1754 = vld [vmem:[#allocation11 + $0xaa8] sm:$0xff]
    %v1755 = vld [vmem:[#allocation11 + $0xab0] sm:$0xff]
    %v1756 = vld [vmem:[#allocation11 + $0xab8] sm:$0xff]
    %v1757 = vld [vmem:[#allocation11 + $0xac0] sm:$0xff]
    %v1758 = vld [vmem:[#allocation11 + $0xac8] sm:$0xff]
    %v1759 = vld [vmem:[#allocation11 + $0xad0] sm:$0xff]
    %v1760 = vld [vmem:[#allocation11 + $0xad8] sm:$0xff]
    %v1761 = vld [vmem:[#allocation11 + $0xae0] sm:$0xff]
    %v1762 = vld [vmem:[#allocation11 + $0xae8] sm:$0xff]
    %v1763 = vld [vmem:[#allocation11 + $0xaf0] sm:$0xff]
    %v1764 = vld [vmem:[#allocation11 + $0xaf8] sm:$0xff]
    %v1765 = vld [vmem:[#allocation11 + $0xb00] sm:$0xff]
    %v1766 = vld [vmem:[#allocation11 + $0xb08] sm:$0xff]
    %v1767 = vld [vmem:[#allocation11 + $0xb10] sm:$0xff]
    %v1768 = vld [vmem:[#allocation11 + $0xb18] sm:$0xff]
    %v1769 = vld [vmem:[#allocation11 + $0xb20] sm:$0xff]
    %v1770 = vld [vmem:[#allocation11 + $0xb28] sm:$0xff]
    %v1771 = vld [vmem:[#allocation11 + $0xb30] sm:$0xff]
    %v1772 = vld [vmem:[#allocation11 + $0xb38] sm:$0xff]
    %v1773 = vld [vmem:[#allocation11 + $0xb40] sm:$0xff]
    %v1774 = vld [vmem:[#allocation11 + $0xb48] sm:$0xff]
    %v1775 = vld [vmem:[#allocation11 + $0xb50] sm:$0xff]
    %v1776 = vld [vmem:[#allocation11 + $0xb58] sm:$0xff]
    %v1777 = vld [vmem:[#allocation11 + $0xb60] sm:$0xff]
    %v1778 = vld [vmem:[#allocation11 + $0xb68] sm:$0xff]
    %v1779 = vld [vmem:[#allocation11 + $0xb70] sm:$0xff]
    %v1780 = vld [vmem:[#allocation11 + $0xb78] sm:$0xff]
    %v1781 = vld [vmem:[#allocation11 + $0xb80] sm:$0xff]
    %v1782 = vld [vmem:[#allocation11 + $0xb88] sm:$0xff]
    %v1783 = vld [vmem:[#allocation11 + $0xb90] sm:$0xff]
    %v1784 = vld [vmem:[#allocation11 + $0xb98] sm:$0xff]
    %v1785 = vld [vmem:[#allocation11 + $0xba0] sm:$0xff]
    %v1786 = vld [vmem:[#allocation11 + $0xba8] sm:$0xff]
    %v1787 = vld [vmem:[#allocation11 + $0xbb0] sm:$0xff]
    %v1788 = vld [vmem:[#allocation11 + $0xbb8] sm:$0xff]
    %v1789 = vld [vmem:[#allocation11 + $0xbc0] sm:$0xff]
    %v1790 = vld [vmem:[#allocation11 + $0xbc8] sm:$0xff]
    %v1791 = vld [vmem:[#allocation11 + $0xbd0] sm:$0xff]
    %v1792 = vld [vmem:[#allocation11 + $0xbd8] sm:$0xff]
    %v1793 = vld [vmem:[#allocation11 + $0xbe0] sm:$0xff]
    %v1794 = vld [vmem:[#allocation11 + $0xbe8] sm:$0xff]
    %v1795 = vld [vmem:[#allocation11 + $0xbf0] sm:$0xff]
    %v1796 = vld [vmem:[#allocation11 + $0xbf8] sm:$0xff]
    %v1797 = vld [vmem:[#allocation11 + $0xc00] sm:$0xff]
    %v1798 = vld [vmem:[#allocation11 + $0xc08] sm:$0xff]
    %v1799 = vld [vmem:[#allocation11 + $0xc10] sm:$0xff]
    %v1800 = vld [vmem:[#allocation11 + $0xc18] sm:$0xff]
    %v1801 = vld [vmem:[#allocation11 + $0xc20] sm:$0xff]
    %v1802 = vld [vmem:[#allocation11 + $0xc28] sm:$0xff]
    %v1803 = vld [vmem:[#allocation11 + $0xc30] sm:$0xff]
    %v1804 = vld [vmem:[#allocation11 + $0xc38] sm:$0xff]
    %v1805 = vld [vmem:[#allocation11 + $0xc40] sm:$0xff]
    %v1806 = vld [vmem:[#allocation11 + $0xc48] sm:$0xff]
    %v1807 = vld [vmem:[#allocation11 + $0xc50] sm:$0xff]
    %v1808 = vld [vmem:[#allocation11 + $0xc58] sm:$0xff]
    %v1809 = vld [vmem:[#allocation11 + $0xc60] sm:$0xff]
    %v1810 = vld [vmem:[#allocation11 + $0xc68] sm:$0xff]
    %v1811 = vld [vmem:[#allocation11 + $0xc70] sm:$0xff]
    %v1812 = vld [vmem:[#allocation11 + $0xc78] sm:$0xff]
    %v1813 = vld [vmem:[#allocation11 + $0xc80] sm:$0xff]
    %v1814 = vld [vmem:[#allocation11 + $0xc88] sm:$0xff]
    %v1815 = vld [vmem:[#allocation11 + $0xc90] sm:$0xff]
    %v1816 = vld [vmem:[#allocation11 + $0xc98] sm:$0xff]
    %v1817 = vld [vmem:[#allocation11 + $0xca0] sm:$0xff]
    %v1818 = vld [vmem:[#allocation11 + $0xca8] sm:$0xff]
    %v1819 = vld [vmem:[#allocation11 + $0xcb0] sm:$0xff]
    %v1820 = vld [vmem:[#allocation11 + $0xcb8] sm:$0xff]
    %v1821 = vld [vmem:[#allocation11 + $0xcc0] sm:$0xff]
    %v1822 = vld [vmem:[#allocation11 + $0xcc8] sm:$0xff]
    %v1823 = vld [vmem:[#allocation11 + $0xcd0] sm:$0xff]
    %v1824 = vld [vmem:[#allocation11 + $0xcd8] sm:$0xff]
    %v1825 = vld [vmem:[#allocation11 + $0xce0] sm:$0xff]
    %v1826 = vld [vmem:[#allocation11 + $0xce8] sm:$0xff]
    %v1827 = vld [vmem:[#allocation11 + $0xcf0] sm:$0xff]
    %v1828 = vld [vmem:[#allocation11 + $0xcf8] sm:$0xff]
    %v1829 = vld [vmem:[#allocation11 + $0xd00] sm:$0xff]
    %v1830 = vld [vmem:[#allocation11 + $0xd08] sm:$0xff]
    %v1831 = vld [vmem:[#allocation11 + $0xd10] sm:$0xff]
    %v1832 = vld [vmem:[#allocation11 + $0xd18] sm:$0xff]
    %v1833 = vld [vmem:[#allocation11 + $0xd20] sm:$0xff]
    %v1834 = vld [vmem:[#allocation11 + $0xd28] sm:$0xff]
    %v1835 = vld [vmem:[#allocation11 + $0xd30] sm:$0xff]
    %v1836 = vld [vmem:[#allocation11 + $0xd38] sm:$0xff]
    %v1837 = vld [vmem:[#allocation11 + $0xd40] sm:$0xff]
    %v1838 = vld [vmem:[#allocation11 + $0xd48] sm:$0xff]
    %v1839 = vld [vmem:[#allocation11 + $0xd50] sm:$0xff]
    %v1840 = vld [vmem:[#allocation11 + $0xd58] sm:$0xff]
    %v1841 = vld [vmem:[#allocation11 + $0xd60] sm:$0xff]
    %v1842 = vld [vmem:[#allocation11 + $0xd68] sm:$0xff]
    %v1843 = vld [vmem:[#allocation11 + $0xd70] sm:$0xff]
    %v1844 = vld [vmem:[#allocation11 + $0xd78] sm:$0xff]
    %v1845 = vld [vmem:[#allocation11 + $0xd80] sm:$0xff]
    %v1846 = vld [vmem:[#allocation11 + $0xd88] sm:$0xff]
    %v1847 = vld [vmem:[#allocation11 + $0xd90] sm:$0xff]
    %v1848 = vld [vmem:[#allocation11 + $0xd98] sm:$0xff]
    %v1849 = vld [vmem:[#allocation11 + $0xda0] sm:$0xff]
    %v1850 = vld [vmem:[#allocation11 + $0xda8] sm:$0xff]
    %v1851 = vld [vmem:[#allocation11 + $0xdb0] sm:$0xff]
    %v1852 = vld [vmem:[#allocation11 + $0xdb8] sm:$0xff]
    %v1853 = vld [vmem:[#allocation11 + $0xdc0] sm:$0xff]
    %v1854 = vld [vmem:[#allocation11 + $0xdc8] sm:$0xff]
    %v1855 = vld [vmem:[#allocation11 + $0xdd0] sm:$0xff]
    %v1856 = vld [vmem:[#allocation11 + $0xdd8] sm:$0xff]
    %v1857 = vld [vmem:[#allocation11 + $0xde0] sm:$0xff]
    %v1858 = vld [vmem:[#allocation11 + $0xde8] sm:$0xff]
    %v1859 = vld [vmem:[#allocation11 + $0xdf0] sm:$0xff]
    %v1860 = vld [vmem:[#allocation11 + $0xdf8] sm:$0xff]
    %v1861 = vld [vmem:[#allocation11 + $0xe00] sm:$0xff]
    %v1862 = vld [vmem:[#allocation11 + $0xe08] sm:$0xff]
    %v1863 = vld [vmem:[#allocation11 + $0xe10] sm:$0xff]
    %v1864 = vld [vmem:[#allocation11 + $0xe18] sm:$0xff]
    %v1865 = vld [vmem:[#allocation11 + $0xe20] sm:$0xff]
    %v1866 = vld [vmem:[#allocation11 + $0xe28] sm:$0xff]
    %v1867 = vld [vmem:[#allocation11 + $0xe30] sm:$0xff]
    %v1868 = vld [vmem:[#allocation11 + $0xe38] sm:$0xff]
    %v1869 = vld [vmem:[#allocation11 + $0xe40] sm:$0xff]
    %v1870 = vld [vmem:[#allocation11 + $0xe48] sm:$0xff]
    %v1871 = vld [vmem:[#allocation11 + $0xe50] sm:$0xff]
    %v1872 = vld [vmem:[#allocation11 + $0xe58] sm:$0xff]
    %v1873 = vld [vmem:[#allocation11 + $0xe60] sm:$0xff]
    %v1874 = vld [vmem:[#allocation11 + $0xe68] sm:$0xff]
    %v1875 = vld [vmem:[#allocation11 + $0xe70] sm:$0xff]
    %v1876 = vld [vmem:[#allocation11 + $0xe78] sm:$0xff]
    %v1877 = vld [vmem:[#allocation11 + $0xe80] sm:$0xff]
    %v1878 = vld [vmem:[#allocation11 + $0xe88] sm:$0xff]
    %v1879 = vld [vmem:[#allocation11 + $0xe90] sm:$0xff]
    %v1880 = vld [vmem:[#allocation11 + $0xe98] sm:$0xff]
    %v1881 = vld [vmem:[#allocation11 + $0xea0] sm:$0xff]
    %v1882 = vld [vmem:[#allocation11 + $0xea8] sm:$0xff]
    %v1883 = vld [vmem:[#allocation11 + $0xeb0] sm:$0xff]
    %v1884 = vld [vmem:[#allocation11 + $0xeb8] sm:$0xff]
    %v1885 = vld [vmem:[#allocation11 + $0xec0] sm:$0xff]
    %v1886 = vld [vmem:[#allocation11 + $0xec8] sm:$0xff]
    %v1887 = vld [vmem:[#allocation11 + $0xed0] sm:$0xff]
    %v1888 = vld [vmem:[#allocation11 + $0xed8] sm:$0xff]
    %v1889 = vld [vmem:[#allocation11 + $0xee0] sm:$0xff]
    %v1890 = vld [vmem:[#allocation11 + $0xee8] sm:$0xff]
    %v1891 = vld [vmem:[#allocation11 + $0xef0] sm:$0xff]
    %v1892 = vld [vmem:[#allocation11 + $0xef8] sm:$0xff]
    %v1893 = vld [vmem:[#allocation11 + $0xf00] sm:$0xff]
    %v1894 = vld [vmem:[#allocation11 + $0xf08] sm:$0xff]
    %v1895 = vld [vmem:[#allocation11 + $0xf10] sm:$0xff]
    %v1896 = vld [vmem:[#allocation11 + $0xf18] sm:$0xff]
    %v1897 = vld [vmem:[#allocation11 + $0xf20] sm:$0xff]
    %v1898 = vld [vmem:[#allocation11 + $0xf28] sm:$0xff]
    %v1899 = vld [vmem:[#allocation11 + $0xf30] sm:$0xff]
    %v1900 = vld [vmem:[#allocation11 + $0xf38] sm:$0xff]
    %v1901 = vld [vmem:[#allocation11 + $0xf40] sm:$0xff]
    %v1902 = vld [vmem:[#allocation11 + $0xf48] sm:$0xff]
    %v1903 = vld [vmem:[#allocation11 + $0xf50] sm:$0xff]
    %v1904 = vld [vmem:[#allocation11 + $0xf58] sm:$0xff]
    %v1905 = vld [vmem:[#allocation11 + $0xf60] sm:$0xff]
    %v1906 = vld [vmem:[#allocation11 + $0xf68] sm:$0xff]
    %v1907 = vld [vmem:[#allocation11 + $0xf70] sm:$0xff]
    %v1908 = vld [vmem:[#allocation11 + $0xf78] sm:$0xff]
    %v1909 = vld [vmem:[#allocation11 + $0xf80] sm:$0xff]
    %v1910 = vld [vmem:[#allocation11 + $0xf88] sm:$0xff]
    %v1911 = vld [vmem:[#allocation11 + $0xf90] sm:$0xff]
    %v1912 = vld [vmem:[#allocation11 + $0xf98] sm:$0xff]
    %v1913 = vld [vmem:[#allocation11 + $0xfa0] sm:$0xff]
    %v1914 = vld [vmem:[#allocation11 + $0xfa8] sm:$0xff]
    %v1915 = vld [vmem:[#allocation11 + $0xfb0] sm:$0xff]
    %v1916 = vld [vmem:[#allocation11 + $0xfb8] sm:$0xff]
    %v1917 = vld [vmem:[#allocation11 + $0xfc0] sm:$0xff]
    %v1918 = vld [vmem:[#allocation11 + $0xfc8] sm:$0xff]
    %v1919 = vld [vmem:[#allocation11 + $0xfd0] sm:$0xff]
    %v1920 = vld [vmem:[#allocation11 + $0xfd8] sm:$0xff]
    %v1921 = vld [vmem:[#allocation11 + $0xfe0] sm:$0xff]
    %v1922 = vld [vmem:[#allocation11 + $0xfe8] sm:$0xff]
    %v1923 = vld [vmem:[#allocation11 + $0xff0] sm:$0xff]
    %v1924 = vld [vmem:[#allocation11 + $0xff8] sm:$0xff]
    %v1925 = vld [vmem:[#allocation13] sm:$0xff]
    %v1927 = vlaneseq
    %v1928 = vshrl.u32 %v1927, 7
    %v1929 = vsub.s32 0, %v1928
    %v1930 = vrot.slane %v1925, %v1929
    %v1931 = vlaneseq
    %v1932 = vshrl.u32 %v1931, 7
    %v1933 = vsub.s32 1, %v1932
    %v1934 = vrot.slane %v1925, %v1933
    %v1935 = vlaneseq
    %v1936 = vshrl.u32 %v1935, 7
    %v1937 = vsub.s32 2, %v1936
    %v1938 = vrot.slane %v1925, %v1937
    %v1939 = vlaneseq
    %v1940 = vshrl.u32 %v1939, 7
    %v1941 = vsub.s32 3, %v1940
    %v1942 = vrot.slane %v1925, %v1941
    %v1943 = vlaneseq
    %v1944 = vshrl.u32 %v1943, 7
    %v1945 = vsub.s32 4, %v1944
    %v1946 = vrot.slane %v1925, %v1945
    %v1947 = vlaneseq
    %v1948 = vshrl.u32 %v1947, 7
    %v1949 = vsub.s32 5, %v1948
    %v1950 = vrot.slane %v1925, %v1949
    %v1951 = vlaneseq
    %v1952 = vshrl.u32 %v1951, 7
    %v1953 = vsub.s32 6, %v1952
    %v1954 = vrot.slane %v1925, %v1953
    %v1955 = vlaneseq
    %v1956 = vshrl.u32 %v1955, 7
    %v1957 = vsub.s32 7, %v1956
    %v1958 = vrot.slane %v1925, %v1957
    %v2479 = vunpack.c.l.b16 %v1413
    %v2480 = vunpack.c.h.b16 %v1413
    %v2481 = vunpack.c.l.b16 %v1414
    %v2482 = vunpack.c.h.b16 %v1414
    %v2483 = vunpack.c.l.b16 %v1415
    %v2484 = vunpack.c.h.b16 %v1415
    %v2485 = vunpack.c.l.b16 %v1416
    %v2486 = vunpack.c.h.b16 %v1416
    %v2487 = vunpack.c.l.b16 %v1417
    %v2488 = vunpack.c.h.b16 %v1417
    %v2489 = vunpack.c.l.b16 %v1418
    %v2490 = vunpack.c.h.b16 %v1418
    %v2491 = vunpack.c.l.b16 %v1419
    %v2492 = vunpack.c.h.b16 %v1419
    %v2493 = vunpack.c.l.b16 %v1420
    %v2494 = vunpack.c.h.b16 %v1420
    %v2495 = vunpack.c.l.b16 %v1421
    %v2496 = vunpack.c.h.b16 %v1421
    %v2497 = vunpack.c.l.b16 %v1422
    %v2498 = vunpack.c.h.b16 %v1422
    %v2499 = vunpack.c.l.b16 %v1423
    %v2500 = vunpack.c.h.b16 %v1423
    %v2501 = vunpack.c.l.b16 %v1424
    %v2502 = vunpack.c.h.b16 %v1424
    %v2503 = vunpack.c.l.b16 %v1425
    %v2504 = vunpack.c.h.b16 %v1425
    %v2505 = vunpack.c.l.b16 %v1426
    %v2506 = vunpack.c.h.b16 %v1426
    %v2507 = vunpack.c.l.b16 %v1427
    %v2508 = vunpack.c.h.b16 %v1427
    %v2509 = vunpack.c.l.b16 %v1428
    %v2510 = vunpack.c.h.b16 %v1428
    %v2511 = vunpack.c.l.b16 %v1429
    %v2512 = vunpack.c.h.b16 %v1429
    %v2513 = vunpack.c.l.b16 %v1430
    %v2514 = vunpack.c.h.b16 %v1430
    %v2515 = vunpack.c.l.b16 %v1431
    %v2516 = vunpack.c.h.b16 %v1431
    %v2517 = vunpack.c.l.b16 %v1432
    %v2518 = vunpack.c.h.b16 %v1432
    %v2519 = vunpack.c.l.b16 %v1433
    %v2520 = vunpack.c.h.b16 %v1433
    %v2521 = vunpack.c.l.b16 %v1434
    %v2522 = vunpack.c.h.b16 %v1434
    %v2523 = vunpack.c.l.b16 %v1435
    %v2524 = vunpack.c.h.b16 %v1435
    %v2525 = vunpack.c.l.b16 %v1436
    %v2526 = vunpack.c.h.b16 %v1436
    %v2527 = vunpack.c.l.b16 %v1437
    %v2528 = vunpack.c.h.b16 %v1437
    %v2529 = vunpack.c.l.b16 %v1438
    %v2530 = vunpack.c.h.b16 %v1438
    %v2531 = vunpack.c.l.b16 %v1439
    %v2532 = vunpack.c.h.b16 %v1439
    %v2533 = vunpack.c.l.b16 %v1440
    %v2534 = vunpack.c.h.b16 %v1440
    %v2535 = vunpack.c.l.b16 %v1441
    %v2536 = vunpack.c.h.b16 %v1441
    %v2537 = vunpack.c.l.b16 %v1442
    %v2538 = vunpack.c.h.b16 %v1442
    %v2539 = vunpack.c.l.b16 %v1443
    %v2540 = vunpack.c.h.b16 %v1443
    %v2541 = vunpack.c.l.b16 %v1444
    %v2542 = vunpack.c.h.b16 %v1444
    %v2543 = vunpack.c.l.b16 %v1445
    %v2544 = vunpack.c.h.b16 %v1445
    %v2545 = vunpack.c.l.b16 %v1446
    %v2546 = vunpack.c.h.b16 %v1446
    %v2547 = vunpack.c.l.b16 %v1447
    %v2548 = vunpack.c.h.b16 %v1447
    %v2549 = vunpack.c.l.b16 %v1448
    %v2550 = vunpack.c.h.b16 %v1448
    %v2551 = vunpack.c.l.b16 %v1449
    %v2552 = vunpack.c.h.b16 %v1449
    %v2553 = vunpack.c.l.b16 %v1450
    %v2554 = vunpack.c.h.b16 %v1450
    %v2555 = vunpack.c.l.b16 %v1451
    %v2556 = vunpack.c.h.b16 %v1451
    %v2557 = vunpack.c.l.b16 %v1452
    %v2558 = vunpack.c.h.b16 %v1452
    %v2559 = vunpack.c.l.b16 %v1453
    %v2560 = vunpack.c.h.b16 %v1453
    %v2561 = vunpack.c.l.b16 %v1454
    %v2562 = vunpack.c.h.b16 %v1454
    %v2563 = vunpack.c.l.b16 %v1455
    %v2564 = vunpack.c.h.b16 %v1455
    %v2565 = vunpack.c.l.b16 %v1456
    %v2566 = vunpack.c.h.b16 %v1456
    %v2567 = vunpack.c.l.b16 %v1457
    %v2568 = vunpack.c.h.b16 %v1457
    %v2569 = vunpack.c.l.b16 %v1458
    %v2570 = vunpack.c.h.b16 %v1458
    %v2571 = vunpack.c.l.b16 %v1459
    %v2572 = vunpack.c.h.b16 %v1459
    %v2573 = vunpack.c.l.b16 %v1460
    %v2574 = vunpack.c.h.b16 %v1460
    %v2575 = vunpack.c.l.b16 %v1461
    %v2576 = vunpack.c.h.b16 %v1461
    %v2577 = vunpack.c.l.b16 %v1462
    %v2578 = vunpack.c.h.b16 %v1462
    %v2579 = vunpack.c.l.b16 %v1463
    %v2580 = vunpack.c.h.b16 %v1463
    %v2581 = vunpack.c.l.b16 %v1464
    %v2582 = vunpack.c.h.b16 %v1464
    %v2583 = vunpack.c.l.b16 %v1465
    %v2584 = vunpack.c.h.b16 %v1465
    %v2585 = vunpack.c.l.b16 %v1466
    %v2586 = vunpack.c.h.b16 %v1466
    %v2587 = vunpack.c.l.b16 %v1467
    %v2588 = vunpack.c.h.b16 %v1467
    %v2589 = vunpack.c.l.b16 %v1468
    %v2590 = vunpack.c.h.b16 %v1468
    %v2591 = vunpack.c.l.b16 %v1469
    %v2592 = vunpack.c.h.b16 %v1469
    %v2593 = vunpack.c.l.b16 %v1470
    %v2594 = vunpack.c.h.b16 %v1470
    %v2595 = vunpack.c.l.b16 %v1471
    %v2596 = vunpack.c.h.b16 %v1471
    %v2597 = vunpack.c.l.b16 %v1472
    %v2598 = vunpack.c.h.b16 %v1472
    %v2599 = vunpack.c.l.b16 %v1473
    %v2600 = vunpack.c.h.b16 %v1473
    %v2601 = vunpack.c.l.b16 %v1474
    %v2602 = vunpack.c.h.b16 %v1474
    %v2603 = vunpack.c.l.b16 %v1475
    %v2604 = vunpack.c.h.b16 %v1475
    %v2605 = vunpack.c.l.b16 %v1476
    %v2606 = vunpack.c.h.b16 %v1476
    %v2607 = vunpack.c.l.b16 %v1477
    %v2608 = vunpack.c.h.b16 %v1477
    %v2609 = vunpack.c.l.b16 %v1478
    %v2610 = vunpack.c.h.b16 %v1478
    %v2611 = vunpack.c.l.b16 %v1479
    %v2612 = vunpack.c.h.b16 %v1479
    %v2613 = vunpack.c.l.b16 %v1480
    %v2614 = vunpack.c.h.b16 %v1480
    %v2615 = vunpack.c.l.b16 %v1481
    %v2616 = vunpack.c.h.b16 %v1481
    %v2617 = vunpack.c.l.b16 %v1482
    %v2618 = vunpack.c.h.b16 %v1482
    %v2619 = vunpack.c.l.b16 %v1483
    %v2620 = vunpack.c.h.b16 %v1483
    %v2621 = vunpack.c.l.b16 %v1484
    %v2622 = vunpack.c.h.b16 %v1484
    %v2623 = vunpack.c.l.b16 %v1485
    %v2624 = vunpack.c.h.b16 %v1485
    %v2625 = vunpack.c.l.b16 %v1486
    %v2626 = vunpack.c.h.b16 %v1486
    %v2627 = vunpack.c.l.b16 %v1487
    %v2628 = vunpack.c.h.b16 %v1487
    %v2629 = vunpack.c.l.b16 %v1488
    %v2630 = vunpack.c.h.b16 %v1488
    %v2631 = vunpack.c.l.b16 %v1489
    %v2632 = vunpack.c.h.b16 %v1489
    %v2633 = vunpack.c.l.b16 %v1490
    %v2634 = vunpack.c.h.b16 %v1490
    %v2635 = vunpack.c.l.b16 %v1491
    %v2636 = vunpack.c.h.b16 %v1491
    %v2637 = vunpack.c.l.b16 %v1492
    %v2638 = vunpack.c.h.b16 %v1492
    %v2639 = vunpack.c.l.b16 %v1493
    %v2640 = vunpack.c.h.b16 %v1493
    %v2641 = vunpack.c.l.b16 %v1494
    %v2642 = vunpack.c.h.b16 %v1494
    %v2643 = vunpack.c.l.b16 %v1495
    %v2644 = vunpack.c.h.b16 %v1495
    %v2645 = vunpack.c.l.b16 %v1496
    %v2646 = vunpack.c.h.b16 %v1496
    %v2647 = vunpack.c.l.b16 %v1497
    %v2648 = vunpack.c.h.b16 %v1497
    %v2649 = vunpack.c.l.b16 %v1498
    %v2650 = vunpack.c.h.b16 %v1498
    %v2651 = vunpack.c.l.b16 %v1499
    %v2652 = vunpack.c.h.b16 %v1499
    %v2653 = vunpack.c.l.b16 %v1500
    %v2654 = vunpack.c.h.b16 %v1500
    %v2655 = vunpack.c.l.b16 %v1501
    %v2656 = vunpack.c.h.b16 %v1501
    %v2657 = vunpack.c.l.b16 %v1502
    %v2658 = vunpack.c.h.b16 %v1502
    %v2659 = vunpack.c.l.b16 %v1503
    %v2660 = vunpack.c.h.b16 %v1503
    %v2661 = vunpack.c.l.b16 %v1504
    %v2662 = vunpack.c.h.b16 %v1504
    %v2663 = vunpack.c.l.b16 %v1505
    %v2664 = vunpack.c.h.b16 %v1505
    %v2665 = vunpack.c.l.b16 %v1506
    %v2666 = vunpack.c.h.b16 %v1506
    %v2667 = vunpack.c.l.b16 %v1507
    %v2668 = vunpack.c.h.b16 %v1507
    %v2669 = vunpack.c.l.b16 %v1508
    %v2670 = vunpack.c.h.b16 %v1508
    %v2671 = vunpack.c.l.b16 %v1509
    %v2672 = vunpack.c.h.b16 %v1509
    %v2673 = vunpack.c.l.b16 %v1510
    %v2674 = vunpack.c.h.b16 %v1510
    %v2675 = vunpack.c.l.b16 %v1511
    %v2676 = vunpack.c.h.b16 %v1511
    %v2677 = vunpack.c.l.b16 %v1512
    %v2678 = vunpack.c.h.b16 %v1512
    %v2679 = vunpack.c.l.b16 %v1513
    %v2680 = vunpack.c.h.b16 %v1513
    %v2681 = vunpack.c.l.b16 %v1514
    %v2682 = vunpack.c.h.b16 %v1514
    %v2683 = vunpack.c.l.b16 %v1515
    %v2684 = vunpack.c.h.b16 %v1515
    %v2685 = vunpack.c.l.b16 %v1516
    %v2686 = vunpack.c.h.b16 %v1516
    %v2687 = vunpack.c.l.b16 %v1517
    %v2688 = vunpack.c.h.b16 %v1517
    %v2689 = vunpack.c.l.b16 %v1518
    %v2690 = vunpack.c.h.b16 %v1518
    %v2691 = vunpack.c.l.b16 %v1519
    %v2692 = vunpack.c.h.b16 %v1519
    %v2693 = vunpack.c.l.b16 %v1520
    %v2694 = vunpack.c.h.b16 %v1520
    %v2695 = vunpack.c.l.b16 %v1521
    %v2696 = vunpack.c.h.b16 %v1521
    %v2697 = vunpack.c.l.b16 %v1522
    %v2698 = vunpack.c.h.b16 %v1522
    %v2699 = vunpack.c.l.b16 %v1523
    %v2700 = vunpack.c.h.b16 %v1523
    %v2701 = vunpack.c.l.b16 %v1524
    %v2702 = vunpack.c.h.b16 %v1524
    %v2703 = vunpack.c.l.b16 %v1525
    %v2704 = vunpack.c.h.b16 %v1525
    %v2705 = vunpack.c.l.b16 %v1526
    %v2706 = vunpack.c.h.b16 %v1526
    %v2707 = vunpack.c.l.b16 %v1527
    %v2708 = vunpack.c.h.b16 %v1527
    %v2709 = vunpack.c.l.b16 %v1528
    %v2710 = vunpack.c.h.b16 %v1528
    %v2711 = vunpack.c.l.b16 %v1529
    %v2712 = vunpack.c.h.b16 %v1529
    %v2713 = vunpack.c.l.b16 %v1530
    %v2714 = vunpack.c.h.b16 %v1530
    %v2715 = vunpack.c.l.b16 %v1531
    %v2716 = vunpack.c.h.b16 %v1531
    %v2717 = vunpack.c.l.b16 %v1532
    %v2718 = vunpack.c.h.b16 %v1532
    %v2719 = vunpack.c.l.b16 %v1533
    %v2720 = vunpack.c.h.b16 %v1533
    %v2721 = vunpack.c.l.b16 %v1534
    %v2722 = vunpack.c.h.b16 %v1534
    %v2723 = vunpack.c.l.b16 %v1535
    %v2724 = vunpack.c.h.b16 %v1535
    %v2725 = vunpack.c.l.b16 %v1536
    %v2726 = vunpack.c.h.b16 %v1536
    %v2727 = vunpack.c.l.b16 %v1537
    %v2728 = vunpack.c.h.b16 %v1537
    %v2729 = vunpack.c.l.b16 %v1538
    %v2730 = vunpack.c.h.b16 %v1538
    %v2731 = vunpack.c.l.b16 %v1539
    %v2732 = vunpack.c.h.b16 %v1539
    %v2733 = vunpack.c.l.b16 %v1540
    %v2734 = vunpack.c.h.b16 %v1540
    %v2735 = vunpack.c.l.b16 %v1541
    %v2736 = vunpack.c.h.b16 %v1541
    %v2737 = vunpack.c.l.b16 %v1542
    %v2738 = vunpack.c.h.b16 %v1542
    %v2739 = vunpack.c.l.b16 %v1543
    %v2740 = vunpack.c.h.b16 %v1543
    %v2741 = vunpack.c.l.b16 %v1544
    %v2742 = vunpack.c.h.b16 %v1544
    %v2743 = vunpack.c.l.b16 %v1545
    %v2744 = vunpack.c.h.b16 %v1545
    %v2745 = vunpack.c.l.b16 %v1546
    %v2746 = vunpack.c.h.b16 %v1546
    %v2747 = vunpack.c.l.b16 %v1547
    %v2748 = vunpack.c.h.b16 %v1547
    %v2749 = vunpack.c.l.b16 %v1548
    %v2750 = vunpack.c.h.b16 %v1548
    %v2751 = vunpack.c.l.b16 %v1549
    %v2752 = vunpack.c.h.b16 %v1549
    %v2753 = vunpack.c.l.b16 %v1550
    %v2754 = vunpack.c.h.b16 %v1550
    %v2755 = vunpack.c.l.b16 %v1551
    %v2756 = vunpack.c.h.b16 %v1551
    %v2757 = vunpack.c.l.b16 %v1552
    %v2758 = vunpack.c.h.b16 %v1552
    %v2759 = vunpack.c.l.b16 %v1553
    %v2760 = vunpack.c.h.b16 %v1553
    %v2761 = vunpack.c.l.b16 %v1554
    %v2762 = vunpack.c.h.b16 %v1554
    %v2763 = vunpack.c.l.b16 %v1555
    %v2764 = vunpack.c.h.b16 %v1555
    %v2765 = vunpack.c.l.b16 %v1556
    %v2766 = vunpack.c.h.b16 %v1556
    %v2767 = vunpack.c.l.b16 %v1557
    %v2768 = vunpack.c.h.b16 %v1557
    %v2769 = vunpack.c.l.b16 %v1558
    %v2770 = vunpack.c.h.b16 %v1558
    %v2771 = vunpack.c.l.b16 %v1559
    %v2772 = vunpack.c.h.b16 %v1559
    %v2773 = vunpack.c.l.b16 %v1560
    %v2774 = vunpack.c.h.b16 %v1560
    %v2775 = vunpack.c.l.b16 %v1561
    %v2776 = vunpack.c.h.b16 %v1561
    %v2777 = vunpack.c.l.b16 %v1562
    %v2778 = vunpack.c.h.b16 %v1562
    %v2779 = vunpack.c.l.b16 %v1563
    %v2780 = vunpack.c.h.b16 %v1563
    %v2781 = vunpack.c.l.b16 %v1564
    %v2782 = vunpack.c.h.b16 %v1564
    %v2783 = vunpack.c.l.b16 %v1565
    %v2784 = vunpack.c.h.b16 %v1565
    %v2785 = vunpack.c.l.b16 %v1566
    %v2786 = vunpack.c.h.b16 %v1566
    %v2787 = vunpack.c.l.b16 %v1567
    %v2788 = vunpack.c.h.b16 %v1567
    %v2789 = vunpack.c.l.b16 %v1568
    %v2790 = vunpack.c.h.b16 %v1568
    %v2791 = vunpack.c.l.b16 %v1569
    %v2792 = vunpack.c.h.b16 %v1569
    %v2793 = vunpack.c.l.b16 %v1570
    %v2794 = vunpack.c.h.b16 %v1570
    %v2795 = vunpack.c.l.b16 %v1571
    %v2796 = vunpack.c.h.b16 %v1571
    %v2797 = vunpack.c.l.b16 %v1572
    %v2798 = vunpack.c.h.b16 %v1572
    %v2799 = vunpack.c.l.b16 %v1573
    %v2800 = vunpack.c.h.b16 %v1573
    %v2801 = vunpack.c.l.b16 %v1574
    %v2802 = vunpack.c.h.b16 %v1574
    %v2803 = vunpack.c.l.b16 %v1575
    %v2804 = vunpack.c.h.b16 %v1575
    %v2805 = vunpack.c.l.b16 %v1576
    %v2806 = vunpack.c.h.b16 %v1576
    %v2807 = vunpack.c.l.b16 %v1577
    %v2808 = vunpack.c.h.b16 %v1577
    %v2809 = vunpack.c.l.b16 %v1578
    %v2810 = vunpack.c.h.b16 %v1578
    %v2811 = vunpack.c.l.b16 %v1579
    %v2812 = vunpack.c.h.b16 %v1579
    %v2813 = vunpack.c.l.b16 %v1580
    %v2814 = vunpack.c.h.b16 %v1580
    %v2815 = vunpack.c.l.b16 %v1581
    %v2816 = vunpack.c.h.b16 %v1581
    %v2817 = vunpack.c.l.b16 %v1582
    %v2818 = vunpack.c.h.b16 %v1582
    %v2819 = vunpack.c.l.b16 %v1583
    %v2820 = vunpack.c.h.b16 %v1583
    %v2821 = vunpack.c.l.b16 %v1584
    %v2822 = vunpack.c.h.b16 %v1584
    %v2823 = vunpack.c.l.b16 %v1585
    %v2824 = vunpack.c.h.b16 %v1585
    %v2825 = vunpack.c.l.b16 %v1586
    %v2826 = vunpack.c.h.b16 %v1586
    %v2827 = vunpack.c.l.b16 %v1587
    %v2828 = vunpack.c.h.b16 %v1587
    %v2829 = vunpack.c.l.b16 %v1588
    %v2830 = vunpack.c.h.b16 %v1588
    %v2831 = vunpack.c.l.b16 %v1589
    %v2832 = vunpack.c.h.b16 %v1589
    %v2833 = vunpack.c.l.b16 %v1590
    %v2834 = vunpack.c.h.b16 %v1590
    %v2835 = vunpack.c.l.b16 %v1591
    %v2836 = vunpack.c.h.b16 %v1591
    %v2837 = vunpack.c.l.b16 %v1592
    %v2838 = vunpack.c.h.b16 %v1592
    %v2839 = vunpack.c.l.b16 %v1593
    %v2840 = vunpack.c.h.b16 %v1593
    %v2841 = vunpack.c.l.b16 %v1594
    %v2842 = vunpack.c.h.b16 %v1594
    %v2843 = vunpack.c.l.b16 %v1595
    %v2844 = vunpack.c.h.b16 %v1595
    %v2845 = vunpack.c.l.b16 %v1596
    %v2846 = vunpack.c.h.b16 %v1596
    %v2847 = vunpack.c.l.b16 %v1597
    %v2848 = vunpack.c.h.b16 %v1597
    %v2849 = vunpack.c.l.b16 %v1598
    %v2850 = vunpack.c.h.b16 %v1598
    %v2851 = vunpack.c.l.b16 %v1599
    %v2852 = vunpack.c.h.b16 %v1599
    %v2853 = vunpack.c.l.b16 %v1600
    %v2854 = vunpack.c.h.b16 %v1600
    %v2855 = vunpack.c.l.b16 %v1601
    %v2856 = vunpack.c.h.b16 %v1601
    %v2857 = vunpack.c.l.b16 %v1602
    %v2858 = vunpack.c.h.b16 %v1602
    %v2859 = vunpack.c.l.b16 %v1603
    %v2860 = vunpack.c.h.b16 %v1603
    %v2861 = vunpack.c.l.b16 %v1604
    %v2862 = vunpack.c.h.b16 %v1604
    %v2863 = vunpack.c.l.b16 %v1605
    %v2864 = vunpack.c.h.b16 %v1605
    %v2865 = vunpack.c.l.b16 %v1606
    %v2866 = vunpack.c.h.b16 %v1606
    %v2867 = vunpack.c.l.b16 %v1607
    %v2868 = vunpack.c.h.b16 %v1607
    %v2869 = vunpack.c.l.b16 %v1608
    %v2870 = vunpack.c.h.b16 %v1608
    %v2871 = vunpack.c.l.b16 %v1609
    %v2872 = vunpack.c.h.b16 %v1609
    %v2873 = vunpack.c.l.b16 %v1610
    %v2874 = vunpack.c.h.b16 %v1610
    %v2875 = vunpack.c.l.b16 %v1611
    %v2876 = vunpack.c.h.b16 %v1611
    %v2877 = vunpack.c.l.b16 %v1612
    %v2878 = vunpack.c.h.b16 %v1612
    %v2879 = vunpack.c.l.b16 %v1613
    %v2880 = vunpack.c.h.b16 %v1613
    %v2881 = vunpack.c.l.b16 %v1614
    %v2882 = vunpack.c.h.b16 %v1614
    %v2883 = vunpack.c.l.b16 %v1615
    %v2884 = vunpack.c.h.b16 %v1615
    %v2885 = vunpack.c.l.b16 %v1616
    %v2886 = vunpack.c.h.b16 %v1616
    %v2887 = vunpack.c.l.b16 %v1617
    %v2888 = vunpack.c.h.b16 %v1617
    %v2889 = vunpack.c.l.b16 %v1618
    %v2890 = vunpack.c.h.b16 %v1618
    %v2891 = vunpack.c.l.b16 %v1619
    %v2892 = vunpack.c.h.b16 %v1619
    %v2893 = vunpack.c.l.b16 %v1620
    %v2894 = vunpack.c.h.b16 %v1620
    %v2895 = vunpack.c.l.b16 %v1621
    %v2896 = vunpack.c.h.b16 %v1621
    %v2897 = vunpack.c.l.b16 %v1622
    %v2898 = vunpack.c.h.b16 %v1622
    %v2899 = vunpack.c.l.b16 %v1623
    %v2900 = vunpack.c.h.b16 %v1623
    %v2901 = vunpack.c.l.b16 %v1624
    %v2902 = vunpack.c.h.b16 %v1624
    %v2903 = vunpack.c.l.b16 %v1625
    %v2904 = vunpack.c.h.b16 %v1625
    %v2905 = vunpack.c.l.b16 %v1626
    %v2906 = vunpack.c.h.b16 %v1626
    %v2907 = vunpack.c.l.b16 %v1627
    %v2908 = vunpack.c.h.b16 %v1627
    %v2909 = vunpack.c.l.b16 %v1628
    %v2910 = vunpack.c.h.b16 %v1628
    %v2911 = vunpack.c.l.b16 %v1629
    %v2912 = vunpack.c.h.b16 %v1629
    %v2913 = vunpack.c.l.b16 %v1630
    %v2914 = vunpack.c.h.b16 %v1630
    %v2915 = vunpack.c.l.b16 %v1631
    %v2916 = vunpack.c.h.b16 %v1631
    %v2917 = vunpack.c.l.b16 %v1632
    %v2918 = vunpack.c.h.b16 %v1632
    %v2919 = vunpack.c.l.b16 %v1633
    %v2920 = vunpack.c.h.b16 %v1633
    %v2921 = vunpack.c.l.b16 %v1634
    %v2922 = vunpack.c.h.b16 %v1634
    %v2923 = vunpack.c.l.b16 %v1635
    %v2924 = vunpack.c.h.b16 %v1635
    %v2925 = vunpack.c.l.b16 %v1636
    %v2926 = vunpack.c.h.b16 %v1636
    %v2927 = vunpack.c.l.b16 %v1637
    %v2928 = vunpack.c.h.b16 %v1637
    %v2929 = vunpack.c.l.b16 %v1638
    %v2930 = vunpack.c.h.b16 %v1638
    %v2931 = vunpack.c.l.b16 %v1639
    %v2932 = vunpack.c.h.b16 %v1639
    %v2933 = vunpack.c.l.b16 %v1640
    %v2934 = vunpack.c.h.b16 %v1640
    %v2935 = vunpack.c.l.b16 %v1641
    %v2936 = vunpack.c.h.b16 %v1641
    %v2937 = vunpack.c.l.b16 %v1642
    %v2938 = vunpack.c.h.b16 %v1642
    %v2939 = vunpack.c.l.b16 %v1643
    %v2940 = vunpack.c.h.b16 %v1643
    %v2941 = vunpack.c.l.b16 %v1644
    %v2942 = vunpack.c.h.b16 %v1644
    %v2943 = vunpack.c.l.b16 %v1645
    %v2944 = vunpack.c.h.b16 %v1645
    %v2945 = vunpack.c.l.b16 %v1646
    %v2946 = vunpack.c.h.b16 %v1646
    %v2947 = vunpack.c.l.b16 %v1647
    %v2948 = vunpack.c.h.b16 %v1647
    %v2949 = vunpack.c.l.b16 %v1648
    %v2950 = vunpack.c.h.b16 %v1648
    %v2951 = vunpack.c.l.b16 %v1649
    %v2952 = vunpack.c.h.b16 %v1649
    %v2953 = vunpack.c.l.b16 %v1650
    %v2954 = vunpack.c.h.b16 %v1650
    %v2955 = vunpack.c.l.b16 %v1651
    %v2956 = vunpack.c.h.b16 %v1651
    %v2957 = vunpack.c.l.b16 %v1652
    %v2958 = vunpack.c.h.b16 %v1652
    %v2959 = vunpack.c.l.b16 %v1653
    %v2960 = vunpack.c.h.b16 %v1653
    %v2961 = vunpack.c.l.b16 %v1654
    %v2962 = vunpack.c.h.b16 %v1654
    %v2963 = vunpack.c.l.b16 %v1655
    %v2964 = vunpack.c.h.b16 %v1655
    %v2965 = vunpack.c.l.b16 %v1656
    %v2966 = vunpack.c.h.b16 %v1656
    %v2967 = vunpack.c.l.b16 %v1657
    %v2968 = vunpack.c.h.b16 %v1657
    %v2969 = vunpack.c.l.b16 %v1658
    %v2970 = vunpack.c.h.b16 %v1658
    %v2971 = vunpack.c.l.b16 %v1659
    %v2972 = vunpack.c.h.b16 %v1659
    %v2973 = vunpack.c.l.b16 %v1660
    %v2974 = vunpack.c.h.b16 %v1660
    %v2975 = vunpack.c.l.b16 %v1661
    %v2976 = vunpack.c.h.b16 %v1661
    %v2977 = vunpack.c.l.b16 %v1662
    %v2978 = vunpack.c.h.b16 %v1662
    %v2979 = vunpack.c.l.b16 %v1663
    %v2980 = vunpack.c.h.b16 %v1663
    %v2981 = vunpack.c.l.b16 %v1664
    %v2982 = vunpack.c.h.b16 %v1664
    %v2983 = vunpack.c.l.b16 %v1665
    %v2984 = vunpack.c.h.b16 %v1665
    %v2985 = vunpack.c.l.b16 %v1666
    %v2986 = vunpack.c.h.b16 %v1666
    %v2987 = vunpack.c.l.b16 %v1667
    %v2988 = vunpack.c.h.b16 %v1667
    %v2989 = vunpack.c.l.b16 %v1668
    %v2990 = vunpack.c.h.b16 %v1668
    %v2991 = vunpack.c.l.b16 %v1669
    %v2992 = vunpack.c.h.b16 %v1669
    %v2993 = vunpack.c.l.b16 %v1670
    %v2994 = vunpack.c.h.b16 %v1670
    %v2995 = vunpack.c.l.b16 %v1671
    %v2996 = vunpack.c.h.b16 %v1671
    %v2997 = vunpack.c.l.b16 %v1672
    %v2998 = vunpack.c.h.b16 %v1672
    %v2999 = vunpack.c.l.b16 %v1673
    %v3000 = vunpack.c.h.b16 %v1673
    %v3001 = vunpack.c.l.b16 %v1674
    %v3002 = vunpack.c.h.b16 %v1674
    %v3003 = vunpack.c.l.b16 %v1675
    %v3004 = vunpack.c.h.b16 %v1675
    %v3005 = vunpack.c.l.b16 %v1676
    %v3006 = vunpack.c.h.b16 %v1676
    %v3007 = vunpack.c.l.b16 %v1677
    %v3008 = vunpack.c.h.b16 %v1677
    %v3009 = vunpack.c.l.b16 %v1678
    %v3010 = vunpack.c.h.b16 %v1678
    %v3011 = vunpack.c.l.b16 %v1679
    %v3012 = vunpack.c.h.b16 %v1679
    %v3013 = vunpack.c.l.b16 %v1680
    %v3014 = vunpack.c.h.b16 %v1680
    %v3015 = vunpack.c.l.b16 %v1681
    %v3016 = vunpack.c.h.b16 %v1681
    %v3017 = vunpack.c.l.b16 %v1682
    %v3018 = vunpack.c.h.b16 %v1682
    %v3019 = vunpack.c.l.b16 %v1683
    %v3020 = vunpack.c.h.b16 %v1683
    %v3021 = vunpack.c.l.b16 %v1684
    %v3022 = vunpack.c.h.b16 %v1684
    %v3023 = vunpack.c.l.b16 %v1685
    %v3024 = vunpack.c.h.b16 %v1685
    %v3025 = vunpack.c.l.b16 %v1686
    %v3026 = vunpack.c.h.b16 %v1686
    %v3027 = vunpack.c.l.b16 %v1687
    %v3028 = vunpack.c.h.b16 %v1687
    %v3029 = vunpack.c.l.b16 %v1688
    %v3030 = vunpack.c.h.b16 %v1688
    %v3031 = vunpack.c.l.b16 %v1689
    %v3032 = vunpack.c.h.b16 %v1689
    %v3033 = vunpack.c.l.b16 %v1690
    %v3034 = vunpack.c.h.b16 %v1690
    %v3035 = vunpack.c.l.b16 %v1691
    %v3036 = vunpack.c.h.b16 %v1691
    %v3037 = vunpack.c.l.b16 %v1692
    %v3038 = vunpack.c.h.b16 %v1692
    %v3039 = vunpack.c.l.b16 %v1693
    %v3040 = vunpack.c.h.b16 %v1693
    %v3041 = vunpack.c.l.b16 %v1694
    %v3042 = vunpack.c.h.b16 %v1694
    %v3043 = vunpack.c.l.b16 %v1695
    %v3044 = vunpack.c.h.b16 %v1695
    %v3045 = vunpack.c.l.b16 %v1696
    %v3046 = vunpack.c.h.b16 %v1696
    %v3047 = vunpack.c.l.b16 %v1697
    %v3048 = vunpack.c.h.b16 %v1697
    %v3049 = vunpack.c.l.b16 %v1698
    %v3050 = vunpack.c.h.b16 %v1698
    %v3051 = vunpack.c.l.b16 %v1699
    %v3052 = vunpack.c.h.b16 %v1699
    %v3053 = vunpack.c.l.b16 %v1700
    %v3054 = vunpack.c.h.b16 %v1700
    %v3055 = vunpack.c.l.b16 %v1701
    %v3056 = vunpack.c.h.b16 %v1701
    %v3057 = vunpack.c.l.b16 %v1702
    %v3058 = vunpack.c.h.b16 %v1702
    %v3059 = vunpack.c.l.b16 %v1703
    %v3060 = vunpack.c.h.b16 %v1703
    %v3061 = vunpack.c.l.b16 %v1704
    %v3062 = vunpack.c.h.b16 %v1704
    %v3063 = vunpack.c.l.b16 %v1705
    %v3064 = vunpack.c.h.b16 %v1705
    %v3065 = vunpack.c.l.b16 %v1706
    %v3066 = vunpack.c.h.b16 %v1706
    %v3067 = vunpack.c.l.b16 %v1707
    %v3068 = vunpack.c.h.b16 %v1707
    %v3069 = vunpack.c.l.b16 %v1708
    %v3070 = vunpack.c.h.b16 %v1708
    %v3071 = vunpack.c.l.b16 %v1709
    %v3072 = vunpack.c.h.b16 %v1709
    %v3073 = vunpack.c.l.b16 %v1710
    %v3074 = vunpack.c.h.b16 %v1710
    %v3075 = vunpack.c.l.b16 %v1711
    %v3076 = vunpack.c.h.b16 %v1711
    %v3077 = vunpack.c.l.b16 %v1712
    %v3078 = vunpack.c.h.b16 %v1712
    %v3079 = vunpack.c.l.b16 %v1713
    %v3080 = vunpack.c.h.b16 %v1713
    %v3081 = vunpack.c.l.b16 %v1714
    %v3082 = vunpack.c.h.b16 %v1714
    %v3083 = vunpack.c.l.b16 %v1715
    %v3084 = vunpack.c.h.b16 %v1715
    %v3085 = vunpack.c.l.b16 %v1716
    %v3086 = vunpack.c.h.b16 %v1716
    %v3087 = vunpack.c.l.b16 %v1717
    %v3088 = vunpack.c.h.b16 %v1717
    %v3089 = vunpack.c.l.b16 %v1718
    %v3090 = vunpack.c.h.b16 %v1718
    %v3091 = vunpack.c.l.b16 %v1719
    %v3092 = vunpack.c.h.b16 %v1719
    %v3093 = vunpack.c.l.b16 %v1720
    %v3094 = vunpack.c.h.b16 %v1720
    %v3095 = vunpack.c.l.b16 %v1721
    %v3096 = vunpack.c.h.b16 %v1721
    %v3097 = vunpack.c.l.b16 %v1722
    %v3098 = vunpack.c.h.b16 %v1722
    %v3099 = vunpack.c.l.b16 %v1723
    %v3100 = vunpack.c.h.b16 %v1723
    %v3101 = vunpack.c.l.b16 %v1724
    %v3102 = vunpack.c.h.b16 %v1724
    %v3103 = vunpack.c.l.b16 %v1725
    %v3104 = vunpack.c.h.b16 %v1725
    %v3105 = vunpack.c.l.b16 %v1726
    %v3106 = vunpack.c.h.b16 %v1726
    %v3107 = vunpack.c.l.b16 %v1727
    %v3108 = vunpack.c.h.b16 %v1727
    %v3109 = vunpack.c.l.b16 %v1728
    %v3110 = vunpack.c.h.b16 %v1728
    %v3111 = vunpack.c.l.b16 %v1729
    %v3112 = vunpack.c.h.b16 %v1729
    %v3113 = vunpack.c.l.b16 %v1730
    %v3114 = vunpack.c.h.b16 %v1730
    %v3115 = vunpack.c.l.b16 %v1731
    %v3116 = vunpack.c.h.b16 %v1731
    %v3117 = vunpack.c.l.b16 %v1732
    %v3118 = vunpack.c.h.b16 %v1732
    %v3119 = vunpack.c.l.b16 %v1733
    %v3120 = vunpack.c.h.b16 %v1733
    %v3121 = vunpack.c.l.b16 %v1734
    %v3122 = vunpack.c.h.b16 %v1734
    %v3123 = vunpack.c.l.b16 %v1735
    %v3124 = vunpack.c.h.b16 %v1735
    %v3125 = vunpack.c.l.b16 %v1736
    %v3126 = vunpack.c.h.b16 %v1736
    %v3127 = vunpack.c.l.b16 %v1737
    %v3128 = vunpack.c.h.b16 %v1737
    %v3129 = vunpack.c.l.b16 %v1738
    %v3130 = vunpack.c.h.b16 %v1738
    %v3131 = vunpack.c.l.b16 %v1739
    %v3132 = vunpack.c.h.b16 %v1739
    %v3133 = vunpack.c.l.b16 %v1740
    %v3134 = vunpack.c.h.b16 %v1740
    %v3135 = vunpack.c.l.b16 %v1741
    %v3136 = vunpack.c.h.b16 %v1741
    %v3137 = vunpack.c.l.b16 %v1742
    %v3138 = vunpack.c.h.b16 %v1742
    %v3139 = vunpack.c.l.b16 %v1743
    %v3140 = vunpack.c.h.b16 %v1743
    %v3141 = vunpack.c.l.b16 %v1744
    %v3142 = vunpack.c.h.b16 %v1744
    %v3143 = vunpack.c.l.b16 %v1745
    %v3144 = vunpack.c.h.b16 %v1745
    %v3145 = vunpack.c.l.b16 %v1746
    %v3146 = vunpack.c.h.b16 %v1746
    %v3147 = vunpack.c.l.b16 %v1747
    %v3148 = vunpack.c.h.b16 %v1747
    %v3149 = vunpack.c.l.b16 %v1748
    %v3150 = vunpack.c.h.b16 %v1748
    %v3151 = vunpack.c.l.b16 %v1749
    %v3152 = vunpack.c.h.b16 %v1749
    %v3153 = vunpack.c.l.b16 %v1750
    %v3154 = vunpack.c.h.b16 %v1750
    %v3155 = vunpack.c.l.b16 %v1751
    %v3156 = vunpack.c.h.b16 %v1751
    %v3157 = vunpack.c.l.b16 %v1752
    %v3158 = vunpack.c.h.b16 %v1752
    %v3159 = vunpack.c.l.b16 %v1753
    %v3160 = vunpack.c.h.b16 %v1753
    %v3161 = vunpack.c.l.b16 %v1754
    %v3162 = vunpack.c.h.b16 %v1754
    %v3163 = vunpack.c.l.b16 %v1755
    %v3164 = vunpack.c.h.b16 %v1755
    %v3165 = vunpack.c.l.b16 %v1756
    %v3166 = vunpack.c.h.b16 %v1756
    %v3167 = vunpack.c.l.b16 %v1757
    %v3168 = vunpack.c.h.b16 %v1757
    %v3169 = vunpack.c.l.b16 %v1758
    %v3170 = vunpack.c.h.b16 %v1758
    %v3171 = vunpack.c.l.b16 %v1759
    %v3172 = vunpack.c.h.b16 %v1759
    %v3173 = vunpack.c.l.b16 %v1760
    %v3174 = vunpack.c.h.b16 %v1760
    %v3175 = vunpack.c.l.b16 %v1761
    %v3176 = vunpack.c.h.b16 %v1761
    %v3177 = vunpack.c.l.b16 %v1762
    %v3178 = vunpack.c.h.b16 %v1762
    %v3179 = vunpack.c.l.b16 %v1763
    %v3180 = vunpack.c.h.b16 %v1763
    %v3181 = vunpack.c.l.b16 %v1764
    %v3182 = vunpack.c.h.b16 %v1764
    %v3183 = vunpack.c.l.b16 %v1765
    %v3184 = vunpack.c.h.b16 %v1765
    %v3185 = vunpack.c.l.b16 %v1766
    %v3186 = vunpack.c.h.b16 %v1766
    %v3187 = vunpack.c.l.b16 %v1767
    %v3188 = vunpack.c.h.b16 %v1767
    %v3189 = vunpack.c.l.b16 %v1768
    %v3190 = vunpack.c.h.b16 %v1768
    %v3191 = vunpack.c.l.b16 %v1769
    %v3192 = vunpack.c.h.b16 %v1769
    %v3193 = vunpack.c.l.b16 %v1770
    %v3194 = vunpack.c.h.b16 %v1770
    %v3195 = vunpack.c.l.b16 %v1771
    %v3196 = vunpack.c.h.b16 %v1771
    %v3197 = vunpack.c.l.b16 %v1772
    %v3198 = vunpack.c.h.b16 %v1772
    %v3199 = vunpack.c.l.b16 %v1773
    %v3200 = vunpack.c.h.b16 %v1773
    %v3201 = vunpack.c.l.b16 %v1774
    %v3202 = vunpack.c.h.b16 %v1774
    %v3203 = vunpack.c.l.b16 %v1775
    %v3204 = vunpack.c.h.b16 %v1775
    %v3205 = vunpack.c.l.b16 %v1776
    %v3206 = vunpack.c.h.b16 %v1776
    %v3207 = vunpack.c.l.b16 %v1777
    %v3208 = vunpack.c.h.b16 %v1777
    %v3209 = vunpack.c.l.b16 %v1778
    %v3210 = vunpack.c.h.b16 %v1778
    %v3211 = vunpack.c.l.b16 %v1779
    %v3212 = vunpack.c.h.b16 %v1779
    %v3213 = vunpack.c.l.b16 %v1780
    %v3214 = vunpack.c.h.b16 %v1780
    %v3215 = vunpack.c.l.b16 %v1781
    %v3216 = vunpack.c.h.b16 %v1781
    %v3217 = vunpack.c.l.b16 %v1782
    %v3218 = vunpack.c.h.b16 %v1782
    %v3219 = vunpack.c.l.b16 %v1783
    %v3220 = vunpack.c.h.b16 %v1783
    %v3221 = vunpack.c.l.b16 %v1784
    %v3222 = vunpack.c.h.b16 %v1784
    %v3223 = vunpack.c.l.b16 %v1785
    %v3224 = vunpack.c.h.b16 %v1785
    %v3225 = vunpack.c.l.b16 %v1786
    %v3226 = vunpack.c.h.b16 %v1786
    %v3227 = vunpack.c.l.b16 %v1787
    %v3228 = vunpack.c.h.b16 %v1787
    %v3229 = vunpack.c.l.b16 %v1788
    %v3230 = vunpack.c.h.b16 %v1788
    %v3231 = vunpack.c.l.b16 %v1789
    %v3232 = vunpack.c.h.b16 %v1789
    %v3233 = vunpack.c.l.b16 %v1790
    %v3234 = vunpack.c.h.b16 %v1790
    %v3235 = vunpack.c.l.b16 %v1791
    %v3236 = vunpack.c.h.b16 %v1791
    %v3237 = vunpack.c.l.b16 %v1792
    %v3238 = vunpack.c.h.b16 %v1792
    %v3239 = vunpack.c.l.b16 %v1793
    %v3240 = vunpack.c.h.b16 %v1793
    %v3241 = vunpack.c.l.b16 %v1794
    %v3242 = vunpack.c.h.b16 %v1794
    %v3243 = vunpack.c.l.b16 %v1795
    %v3244 = vunpack.c.h.b16 %v1795
    %v3245 = vunpack.c.l.b16 %v1796
    %v3246 = vunpack.c.h.b16 %v1796
    %v3247 = vunpack.c.l.b16 %v1797
    %v3248 = vunpack.c.h.b16 %v1797
    %v3249 = vunpack.c.l.b16 %v1798
    %v3250 = vunpack.c.h.b16 %v1798
    %v3251 = vunpack.c.l.b16 %v1799
    %v3252 = vunpack.c.h.b16 %v1799
    %v3253 = vunpack.c.l.b16 %v1800
    %v3254 = vunpack.c.h.b16 %v1800
    %v3255 = vunpack.c.l.b16 %v1801
    %v3256 = vunpack.c.h.b16 %v1801
    %v3257 = vunpack.c.l.b16 %v1802
    %v3258 = vunpack.c.h.b16 %v1802
    %v3259 = vunpack.c.l.b16 %v1803
    %v3260 = vunpack.c.h.b16 %v1803
    %v3261 = vunpack.c.l.b16 %v1804
    %v3262 = vunpack.c.h.b16 %v1804
    %v3263 = vunpack.c.l.b16 %v1805
    %v3264 = vunpack.c.h.b16 %v1805
    %v3265 = vunpack.c.l.b16 %v1806
    %v3266 = vunpack.c.h.b16 %v1806
    %v3267 = vunpack.c.l.b16 %v1807
    %v3268 = vunpack.c.h.b16 %v1807
    %v3269 = vunpack.c.l.b16 %v1808
    %v3270 = vunpack.c.h.b16 %v1808
    %v3271 = vunpack.c.l.b16 %v1809
    %v3272 = vunpack.c.h.b16 %v1809
    %v3273 = vunpack.c.l.b16 %v1810
    %v3274 = vunpack.c.h.b16 %v1810
    %v3275 = vunpack.c.l.b16 %v1811
    %v3276 = vunpack.c.h.b16 %v1811
    %v3277 = vunpack.c.l.b16 %v1812
    %v3278 = vunpack.c.h.b16 %v1812
    %v3279 = vunpack.c.l.b16 %v1813
    %v3280 = vunpack.c.h.b16 %v1813
    %v3281 = vunpack.c.l.b16 %v1814
    %v3282 = vunpack.c.h.b16 %v1814
    %v3283 = vunpack.c.l.b16 %v1815
    %v3284 = vunpack.c.h.b16 %v1815
    %v3285 = vunpack.c.l.b16 %v1816
    %v3286 = vunpack.c.h.b16 %v1816
    %v3287 = vunpack.c.l.b16 %v1817
    %v3288 = vunpack.c.h.b16 %v1817
    %v3289 = vunpack.c.l.b16 %v1818
    %v3290 = vunpack.c.h.b16 %v1818
    %v3291 = vunpack.c.l.b16 %v1819
    %v3292 = vunpack.c.h.b16 %v1819
    %v3293 = vunpack.c.l.b16 %v1820
    %v3294 = vunpack.c.h.b16 %v1820
    %v3295 = vunpack.c.l.b16 %v1821
    %v3296 = vunpack.c.h.b16 %v1821
    %v3297 = vunpack.c.l.b16 %v1822
    %v3298 = vunpack.c.h.b16 %v1822
    %v3299 = vunpack.c.l.b16 %v1823
    %v3300 = vunpack.c.h.b16 %v1823
    %v3301 = vunpack.c.l.b16 %v1824
    %v3302 = vunpack.c.h.b16 %v1824
    %v3303 = vunpack.c.l.b16 %v1825
    %v3304 = vunpack.c.h.b16 %v1825
    %v3305 = vunpack.c.l.b16 %v1826
    %v3306 = vunpack.c.h.b16 %v1826
    %v3307 = vunpack.c.l.b16 %v1827
    %v3308 = vunpack.c.h.b16 %v1827
    %v3309 = vunpack.c.l.b16 %v1828
    %v3310 = vunpack.c.h.b16 %v1828
    %v3311 = vunpack.c.l.b16 %v1829
    %v3312 = vunpack.c.h.b16 %v1829
    %v3313 = vunpack.c.l.b16 %v1830
    %v3314 = vunpack.c.h.b16 %v1830
    %v3315 = vunpack.c.l.b16 %v1831
    %v3316 = vunpack.c.h.b16 %v1831
    %v3317 = vunpack.c.l.b16 %v1832
    %v3318 = vunpack.c.h.b16 %v1832
    %v3319 = vunpack.c.l.b16 %v1833
    %v3320 = vunpack.c.h.b16 %v1833
    %v3321 = vunpack.c.l.b16 %v1834
    %v3322 = vunpack.c.h.b16 %v1834
    %v3323 = vunpack.c.l.b16 %v1835
    %v3324 = vunpack.c.h.b16 %v1835
    %v3325 = vunpack.c.l.b16 %v1836
    %v3326 = vunpack.c.h.b16 %v1836
    %v3327 = vunpack.c.l.b16 %v1837
    %v3328 = vunpack.c.h.b16 %v1837
    %v3329 = vunpack.c.l.b16 %v1838
    %v3330 = vunpack.c.h.b16 %v1838
    %v3331 = vunpack.c.l.b16 %v1839
    %v3332 = vunpack.c.h.b16 %v1839
    %v3333 = vunpack.c.l.b16 %v1840
    %v3334 = vunpack.c.h.b16 %v1840
    %v3335 = vunpack.c.l.b16 %v1841
    %v3336 = vunpack.c.h.b16 %v1841
    %v3337 = vunpack.c.l.b16 %v1842
    %v3338 = vunpack.c.h.b16 %v1842
    %v3339 = vunpack.c.l.b16 %v1843
    %v3340 = vunpack.c.h.b16 %v1843
    %v3341 = vunpack.c.l.b16 %v1844
    %v3342 = vunpack.c.h.b16 %v1844
    %v3343 = vunpack.c.l.b16 %v1845
    %v3344 = vunpack.c.h.b16 %v1845
    %v3345 = vunpack.c.l.b16 %v1846
    %v3346 = vunpack.c.h.b16 %v1846
    %v3347 = vunpack.c.l.b16 %v1847
    %v3348 = vunpack.c.h.b16 %v1847
    %v3349 = vunpack.c.l.b16 %v1848
    %v3350 = vunpack.c.h.b16 %v1848
    %v3351 = vunpack.c.l.b16 %v1849
    %v3352 = vunpack.c.h.b16 %v1849
    %v3353 = vunpack.c.l.b16 %v1850
    %v3354 = vunpack.c.h.b16 %v1850
    %v3355 = vunpack.c.l.b16 %v1851
    %v3356 = vunpack.c.h.b16 %v1851
    %v3357 = vunpack.c.l.b16 %v1852
    %v3358 = vunpack.c.h.b16 %v1852
    %v3359 = vunpack.c.l.b16 %v1853
    %v3360 = vunpack.c.h.b16 %v1853
    %v3361 = vunpack.c.l.b16 %v1854
    %v3362 = vunpack.c.h.b16 %v1854
    %v3363 = vunpack.c.l.b16 %v1855
    %v3364 = vunpack.c.h.b16 %v1855
    %v3365 = vunpack.c.l.b16 %v1856
    %v3366 = vunpack.c.h.b16 %v1856
    %v3367 = vunpack.c.l.b16 %v1857
    %v3368 = vunpack.c.h.b16 %v1857
    %v3369 = vunpack.c.l.b16 %v1858
    %v3370 = vunpack.c.h.b16 %v1858
    %v3371 = vunpack.c.l.b16 %v1859
    %v3372 = vunpack.c.h.b16 %v1859
    %v3373 = vunpack.c.l.b16 %v1860
    %v3374 = vunpack.c.h.b16 %v1860
    %v3375 = vunpack.c.l.b16 %v1861
    %v3376 = vunpack.c.h.b16 %v1861
    %v3377 = vunpack.c.l.b16 %v1862
    %v3378 = vunpack.c.h.b16 %v1862
    %v3379 = vunpack.c.l.b16 %v1863
    %v3380 = vunpack.c.h.b16 %v1863
    %v3381 = vunpack.c.l.b16 %v1864
    %v3382 = vunpack.c.h.b16 %v1864
    %v3383 = vunpack.c.l.b16 %v1865
    %v3384 = vunpack.c.h.b16 %v1865
    %v3385 = vunpack.c.l.b16 %v1866
    %v3386 = vunpack.c.h.b16 %v1866
    %v3387 = vunpack.c.l.b16 %v1867
    %v3388 = vunpack.c.h.b16 %v1867
    %v3389 = vunpack.c.l.b16 %v1868
    %v3390 = vunpack.c.h.b16 %v1868
    %v3391 = vunpack.c.l.b16 %v1869
    %v3392 = vunpack.c.h.b16 %v1869
    %v3393 = vunpack.c.l.b16 %v1870
    %v3394 = vunpack.c.h.b16 %v1870
    %v3395 = vunpack.c.l.b16 %v1871
    %v3396 = vunpack.c.h.b16 %v1871
    %v3397 = vunpack.c.l.b16 %v1872
    %v3398 = vunpack.c.h.b16 %v1872
    %v3399 = vunpack.c.l.b16 %v1873
    %v3400 = vunpack.c.h.b16 %v1873
    %v3401 = vunpack.c.l.b16 %v1874
    %v3402 = vunpack.c.h.b16 %v1874
    %v3403 = vunpack.c.l.b16 %v1875
    %v3404 = vunpack.c.h.b16 %v1875
    %v3405 = vunpack.c.l.b16 %v1876
    %v3406 = vunpack.c.h.b16 %v1876
    %v3407 = vunpack.c.l.b16 %v1877
    %v3408 = vunpack.c.h.b16 %v1877
    %v3409 = vunpack.c.l.b16 %v1878
    %v3410 = vunpack.c.h.b16 %v1878
    %v3411 = vunpack.c.l.b16 %v1879
    %v3412 = vunpack.c.h.b16 %v1879
    %v3413 = vunpack.c.l.b16 %v1880
    %v3414 = vunpack.c.h.b16 %v1880
    %v3415 = vunpack.c.l.b16 %v1881
    %v3416 = vunpack.c.h.b16 %v1881
    %v3417 = vunpack.c.l.b16 %v1882
    %v3418 = vunpack.c.h.b16 %v1882
    %v3419 = vunpack.c.l.b16 %v1883
    %v3420 = vunpack.c.h.b16 %v1883
    %v3421 = vunpack.c.l.b16 %v1884
    %v3422 = vunpack.c.h.b16 %v1884
    %v3423 = vunpack.c.l.b16 %v1885
    %v3424 = vunpack.c.h.b16 %v1885
    %v3425 = vunpack.c.l.b16 %v1886
    %v3426 = vunpack.c.h.b16 %v1886
    %v3427 = vunpack.c.l.b16 %v1887
    %v3428 = vunpack.c.h.b16 %v1887
    %v3429 = vunpack.c.l.b16 %v1888
    %v3430 = vunpack.c.h.b16 %v1888
    %v3431 = vunpack.c.l.b16 %v1889
    %v3432 = vunpack.c.h.b16 %v1889
    %v3433 = vunpack.c.l.b16 %v1890
    %v3434 = vunpack.c.h.b16 %v1890
    %v3435 = vunpack.c.l.b16 %v1891
    %v3436 = vunpack.c.h.b16 %v1891
    %v3437 = vunpack.c.l.b16 %v1892
    %v3438 = vunpack.c.h.b16 %v1892
    %v3439 = vunpack.c.l.b16 %v1893
    %v3440 = vunpack.c.h.b16 %v1893
    %v3441 = vunpack.c.l.b16 %v1894
    %v3442 = vunpack.c.h.b16 %v1894
    %v3443 = vunpack.c.l.b16 %v1895
    %v3444 = vunpack.c.h.b16 %v1895
    %v3445 = vunpack.c.l.b16 %v1896
    %v3446 = vunpack.c.h.b16 %v1896
    %v3447 = vunpack.c.l.b16 %v1897
    %v3448 = vunpack.c.h.b16 %v1897
    %v3449 = vunpack.c.l.b16 %v1898
    %v3450 = vunpack.c.h.b16 %v1898
    %v3451 = vunpack.c.l.b16 %v1899
    %v3452 = vunpack.c.h.b16 %v1899
    %v3453 = vunpack.c.l.b16 %v1900
    %v3454 = vunpack.c.h.b16 %v1900
    %v3455 = vunpack.c.l.b16 %v1901
    %v3456 = vunpack.c.h.b16 %v1901
    %v3457 = vunpack.c.l.b16 %v1902
    %v3458 = vunpack.c.h.b16 %v1902
    %v3459 = vunpack.c.l.b16 %v1903
    %v3460 = vunpack.c.h.b16 %v1903
    %v3461 = vunpack.c.l.b16 %v1904
    %v3462 = vunpack.c.h.b16 %v1904
    %v3463 = vunpack.c.l.b16 %v1905
    %v3464 = vunpack.c.h.b16 %v1905
    %v3465 = vunpack.c.l.b16 %v1906
    %v3466 = vunpack.c.h.b16 %v1906
    %v3467 = vunpack.c.l.b16 %v1907
    %v3468 = vunpack.c.h.b16 %v1907
    %v3469 = vunpack.c.l.b16 %v1908
    %v3470 = vunpack.c.h.b16 %v1908
    %v3471 = vunpack.c.l.b16 %v1909
    %v3472 = vunpack.c.h.b16 %v1909
    %v3473 = vunpack.c.l.b16 %v1910
    %v3474 = vunpack.c.h.b16 %v1910
    %v3475 = vunpack.c.l.b16 %v1911
    %v3476 = vunpack.c.h.b16 %v1911
    %v3477 = vunpack.c.l.b16 %v1912
    %v3478 = vunpack.c.h.b16 %v1912
    %v3479 = vunpack.c.l.b16 %v1913
    %v3480 = vunpack.c.h.b16 %v1913
    %v3481 = vunpack.c.l.b16 %v1914
    %v3482 = vunpack.c.h.b16 %v1914
    %v3483 = vunpack.c.l.b16 %v1915
    %v3484 = vunpack.c.h.b16 %v1915
    %v3485 = vunpack.c.l.b16 %v1916
    %v3486 = vunpack.c.h.b16 %v1916
    %v3487 = vunpack.c.l.b16 %v1917
    %v3488 = vunpack.c.h.b16 %v1917
    %v3489 = vunpack.c.l.b16 %v1918
    %v3490 = vunpack.c.h.b16 %v1918
    %v3491 = vunpack.c.l.b16 %v1919
    %v3492 = vunpack.c.h.b16 %v1919
    %v3493 = vunpack.c.l.b16 %v1920
    %v3494 = vunpack.c.h.b16 %v1920
    %v3495 = vunpack.c.l.b16 %v1921
    %v3496 = vunpack.c.h.b16 %v1921
    %v3497 = vunpack.c.l.b16 %v1922
    %v3498 = vunpack.c.h.b16 %v1922
    %v3499 = vunpack.c.l.b16 %v1923
    %v3500 = vunpack.c.h.b16 %v1923
    %v3501 = vunpack.c.l.b16 %v1924
    %v3502 = vunpack.c.h.b16 %v1924
    %v3503 = vpack.c.b16 %v2487, %v2479
    %v3504 = vpack.c.b16 %v2488, %v2480
    %v3505 = vpack.c.b16 %v2489, %v2481
    %v3506 = vpack.c.b16 %v2490, %v2482
    %v3507 = vpack.c.b16 %v2491, %v2483
    %v3508 = vpack.c.b16 %v2492, %v2484
    %v3509 = vpack.c.b16 %v2493, %v2485
    %v3510 = vpack.c.b16 %v2494, %v2486
    %v3511 = vpack.c.b16 %v2503, %v2495
    %v3512 = vpack.c.b16 %v2504, %v2496
    %v3513 = vpack.c.b16 %v2505, %v2497
    %v3514 = vpack.c.b16 %v2506, %v2498
    %v3515 = vpack.c.b16 %v2507, %v2499
    %v3516 = vpack.c.b16 %v2508, %v2500
    %v3517 = vpack.c.b16 %v2509, %v2501
    %v3518 = vpack.c.b16 %v2510, %v2502
    %v3519 = vpack.c.b16 %v2519, %v2511
    %v3520 = vpack.c.b16 %v2520, %v2512
    %v3521 = vpack.c.b16 %v2521, %v2513
    %v3522 = vpack.c.b16 %v2522, %v2514
    %v3523 = vpack.c.b16 %v2523, %v2515
    %v3524 = vpack.c.b16 %v2524, %v2516
    %v3525 = vpack.c.b16 %v2525, %v2517
    %v3526 = vpack.c.b16 %v2526, %v2518
    %v3527 = vpack.c.b16 %v2535, %v2527
    %v3528 = vpack.c.b16 %v2536, %v2528
    %v3529 = vpack.c.b16 %v2537, %v2529
    %v3530 = vpack.c.b16 %v2538, %v2530
    %v3531 = vpack.c.b16 %v2539, %v2531
    %v3532 = vpack.c.b16 %v2540, %v2532
    %v3533 = vpack.c.b16 %v2541, %v2533
    %v3534 = vpack.c.b16 %v2542, %v2534
    %v3535 = vpack.c.b16 %v2551, %v2543
    %v3536 = vpack.c.b16 %v2552, %v2544
    %v3537 = vpack.c.b16 %v2553, %v2545
    %v3538 = vpack.c.b16 %v2554, %v2546
    %v3539 = vpack.c.b16 %v2555, %v2547
    %v3540 = vpack.c.b16 %v2556, %v2548
    %v3541 = vpack.c.b16 %v2557, %v2549
    %v3542 = vpack.c.b16 %v2558, %v2550
    %v3543 = vpack.c.b16 %v2567, %v2559
    %v3544 = vpack.c.b16 %v2568, %v2560
    %v3545 = vpack.c.b16 %v2569, %v2561
    %v3546 = vpack.c.b16 %v2570, %v2562
    %v3547 = vpack.c.b16 %v2571, %v2563
    %v3548 = vpack.c.b16 %v2572, %v2564
    %v3549 = vpack.c.b16 %v2573, %v2565
    %v3550 = vpack.c.b16 %v2574, %v2566
    %v3551 = vpack.c.b16 %v2583, %v2575
    %v3552 = vpack.c.b16 %v2584, %v2576
    %v3553 = vpack.c.b16 %v2585, %v2577
    %v3554 = vpack.c.b16 %v2586, %v2578
    %v3555 = vpack.c.b16 %v2587, %v2579
    %v3556 = vpack.c.b16 %v2588, %v2580
    %v3557 = vpack.c.b16 %v2589, %v2581
    %v3558 = vpack.c.b16 %v2590, %v2582
    %v3559 = vpack.c.b16 %v2599, %v2591
    %v3560 = vpack.c.b16 %v2600, %v2592
    %v3561 = vpack.c.b16 %v2601, %v2593
    %v3562 = vpack.c.b16 %v2602, %v2594
    %v3563 = vpack.c.b16 %v2603, %v2595
    %v3564 = vpack.c.b16 %v2604, %v2596
    %v3565 = vpack.c.b16 %v2605, %v2597
    %v3566 = vpack.c.b16 %v2606, %v2598
    %v3567 = vpack.c.b16 %v2615, %v2607
    %v3568 = vpack.c.b16 %v2616, %v2608
    %v3569 = vpack.c.b16 %v2617, %v2609
    %v3570 = vpack.c.b16 %v2618, %v2610
    %v3571 = vpack.c.b16 %v2619, %v2611
    %v3572 = vpack.c.b16 %v2620, %v2612
    %v3573 = vpack.c.b16 %v2621, %v2613
    %v3574 = vpack.c.b16 %v2622, %v2614
    %v3575 = vpack.c.b16 %v2631, %v2623
    %v3576 = vpack.c.b16 %v2632, %v2624
    %v3577 = vpack.c.b16 %v2633, %v2625
    %v3578 = vpack.c.b16 %v2634, %v2626
    %v3579 = vpack.c.b16 %v2635, %v2627
    %v3580 = vpack.c.b16 %v2636, %v2628
    %v3581 = vpack.c.b16 %v2637, %v2629
    %v3582 = vpack.c.b16 %v2638, %v2630
    %v3583 = vpack.c.b16 %v2647, %v2639
    %v3584 = vpack.c.b16 %v2648, %v2640
    %v3585 = vpack.c.b16 %v2649, %v2641
    %v3586 = vpack.c.b16 %v2650, %v2642
    %v3587 = vpack.c.b16 %v2651, %v2643
    %v3588 = vpack.c.b16 %v2652, %v2644
    %v3589 = vpack.c.b16 %v2653, %v2645
    %v3590 = vpack.c.b16 %v2654, %v2646
    %v3591 = vpack.c.b16 %v2663, %v2655
    %v3592 = vpack.c.b16 %v2664, %v2656
    %v3593 = vpack.c.b16 %v2665, %v2657
    %v3594 = vpack.c.b16 %v2666, %v2658
    %v3595 = vpack.c.b16 %v2667, %v2659
    %v3596 = vpack.c.b16 %v2668, %v2660
    %v3597 = vpack.c.b16 %v2669, %v2661
    %v3598 = vpack.c.b16 %v2670, %v2662
    %v3599 = vpack.c.b16 %v2679, %v2671
    %v3600 = vpack.c.b16 %v2680, %v2672
    %v3601 = vpack.c.b16 %v2681, %v2673
    %v3602 = vpack.c.b16 %v2682, %v2674
    %v3603 = vpack.c.b16 %v2683, %v2675
    %v3604 = vpack.c.b16 %v2684, %v2676
    %v3605 = vpack.c.b16 %v2685, %v2677
    %v3606 = vpack.c.b16 %v2686, %v2678
    %v3607 = vpack.c.b16 %v2695, %v2687
    %v3608 = vpack.c.b16 %v2696, %v2688
    %v3609 = vpack.c.b16 %v2697, %v2689
    %v3610 = vpack.c.b16 %v2698, %v2690
    %v3611 = vpack.c.b16 %v2699, %v2691
    %v3612 = vpack.c.b16 %v2700, %v2692
    %v3613 = vpack.c.b16 %v2701, %v2693
    %v3614 = vpack.c.b16 %v2702, %v2694
    %v3615 = vpack.c.b16 %v2711, %v2703
    %v3616 = vpack.c.b16 %v2712, %v2704
    %v3617 = vpack.c.b16 %v2713, %v2705
    %v3618 = vpack.c.b16 %v2714, %v2706
    %v3619 = vpack.c.b16 %v2715, %v2707
    %v3620 = vpack.c.b16 %v2716, %v2708
    %v3621 = vpack.c.b16 %v2717, %v2709
    %v3622 = vpack.c.b16 %v2718, %v2710
    %v3623 = vpack.c.b16 %v2727, %v2719
    %v3624 = vpack.c.b16 %v2728, %v2720
    %v3625 = vpack.c.b16 %v2729, %v2721
    %v3626 = vpack.c.b16 %v2730, %v2722
    %v3627 = vpack.c.b16 %v2731, %v2723
    %v3628 = vpack.c.b16 %v2732, %v2724
    %v3629 = vpack.c.b16 %v2733, %v2725
    %v3630 = vpack.c.b16 %v2734, %v2726
    %v3631 = vpack.c.b16 %v2743, %v2735
    %v3632 = vpack.c.b16 %v2744, %v2736
    %v3633 = vpack.c.b16 %v2745, %v2737
    %v3634 = vpack.c.b16 %v2746, %v2738
    %v3635 = vpack.c.b16 %v2747, %v2739
    %v3636 = vpack.c.b16 %v2748, %v2740
    %v3637 = vpack.c.b16 %v2749, %v2741
    %v3638 = vpack.c.b16 %v2750, %v2742
    %v3639 = vpack.c.b16 %v2759, %v2751
    %v3640 = vpack.c.b16 %v2760, %v2752
    %v3641 = vpack.c.b16 %v2761, %v2753
    %v3642 = vpack.c.b16 %v2762, %v2754
    %v3643 = vpack.c.b16 %v2763, %v2755
    %v3644 = vpack.c.b16 %v2764, %v2756
    %v3645 = vpack.c.b16 %v2765, %v2757
    %v3646 = vpack.c.b16 %v2766, %v2758
    %v3647 = vpack.c.b16 %v2775, %v2767
    %v3648 = vpack.c.b16 %v2776, %v2768
    %v3649 = vpack.c.b16 %v2777, %v2769
    %v3650 = vpack.c.b16 %v2778, %v2770
    %v3651 = vpack.c.b16 %v2779, %v2771
    %v3652 = vpack.c.b16 %v2780, %v2772
    %v3653 = vpack.c.b16 %v2781, %v2773
    %v3654 = vpack.c.b16 %v2782, %v2774
    %v3655 = vpack.c.b16 %v2791, %v2783
    %v3656 = vpack.c.b16 %v2792, %v2784
    %v3657 = vpack.c.b16 %v2793, %v2785
    %v3658 = vpack.c.b16 %v2794, %v2786
    %v3659 = vpack.c.b16 %v2795, %v2787
    %v3660 = vpack.c.b16 %v2796, %v2788
    %v3661 = vpack.c.b16 %v2797, %v2789
    %v3662 = vpack.c.b16 %v2798, %v2790
    %v3663 = vpack.c.b16 %v2807, %v2799
    %v3664 = vpack.c.b16 %v2808, %v2800
    %v3665 = vpack.c.b16 %v2809, %v2801
    %v3666 = vpack.c.b16 %v2810, %v2802
    %v3667 = vpack.c.b16 %v2811, %v2803
    %v3668 = vpack.c.b16 %v2812, %v2804
    %v3669 = vpack.c.b16 %v2813, %v2805
    %v3670 = vpack.c.b16 %v2814, %v2806
    %v3671 = vpack.c.b16 %v2823, %v2815
    %v3672 = vpack.c.b16 %v2824, %v2816
    %v3673 = vpack.c.b16 %v2825, %v2817
    %v3674 = vpack.c.b16 %v2826, %v2818
    %v3675 = vpack.c.b16 %v2827, %v2819
    %v3676 = vpack.c.b16 %v2828, %v2820
    %v3677 = vpack.c.b16 %v2829, %v2821
    %v3678 = vpack.c.b16 %v2830, %v2822
    %v3679 = vpack.c.b16 %v2839, %v2831
    %v3680 = vpack.c.b16 %v2840, %v2832
    %v3681 = vpack.c.b16 %v2841, %v2833
    %v3682 = vpack.c.b16 %v2842, %v2834
    %v3683 = vpack.c.b16 %v2843, %v2835
    %v3684 = vpack.c.b16 %v2844, %v2836
    %v3685 = vpack.c.b16 %v2845, %v2837
    %v3686 = vpack.c.b16 %v2846, %v2838
    %v3687 = vpack.c.b16 %v2855, %v2847
    %v3688 = vpack.c.b16 %v2856, %v2848
    %v3689 = vpack.c.b16 %v2857, %v2849
    %v3690 = vpack.c.b16 %v2858, %v2850
    %v3691 = vpack.c.b16 %v2859, %v2851
    %v3692 = vpack.c.b16 %v2860, %v2852
    %v3693 = vpack.c.b16 %v2861, %v2853
    %v3694 = vpack.c.b16 %v2862, %v2854
    %v3695 = vpack.c.b16 %v2871, %v2863
    %v3696 = vpack.c.b16 %v2872, %v2864
    %v3697 = vpack.c.b16 %v2873, %v2865
    %v3698 = vpack.c.b16 %v2874, %v2866
    %v3699 = vpack.c.b16 %v2875, %v2867
    %v3700 = vpack.c.b16 %v2876, %v2868
    %v3701 = vpack.c.b16 %v2877, %v2869
    %v3702 = vpack.c.b16 %v2878, %v2870
    %v3703 = vpack.c.b16 %v2887, %v2879
    %v3704 = vpack.c.b16 %v2888, %v2880
    %v3705 = vpack.c.b16 %v2889, %v2881
    %v3706 = vpack.c.b16 %v2890, %v2882
    %v3707 = vpack.c.b16 %v2891, %v2883
    %v3708 = vpack.c.b16 %v2892, %v2884
    %v3709 = vpack.c.b16 %v2893, %v2885
    %v3710 = vpack.c.b16 %v2894, %v2886
    %v3711 = vpack.c.b16 %v2903, %v2895
    %v3712 = vpack.c.b16 %v2904, %v2896
    %v3713 = vpack.c.b16 %v2905, %v2897
    %v3714 = vpack.c.b16 %v2906, %v2898
    %v3715 = vpack.c.b16 %v2907, %v2899
    %v3716 = vpack.c.b16 %v2908, %v2900
    %v3717 = vpack.c.b16 %v2909, %v2901
    %v3718 = vpack.c.b16 %v2910, %v2902
    %v3719 = vpack.c.b16 %v2919, %v2911
    %v3720 = vpack.c.b16 %v2920, %v2912
    %v3721 = vpack.c.b16 %v2921, %v2913
    %v3722 = vpack.c.b16 %v2922, %v2914
    %v3723 = vpack.c.b16 %v2923, %v2915
    %v3724 = vpack.c.b16 %v2924, %v2916
    %v3725 = vpack.c.b16 %v2925, %v2917
    %v3726 = vpack.c.b16 %v2926, %v2918
    %v3727 = vpack.c.b16 %v2935, %v2927
    %v3728 = vpack.c.b16 %v2936, %v2928
    %v3729 = vpack.c.b16 %v2937, %v2929
    %v3730 = vpack.c.b16 %v2938, %v2930
    %v3731 = vpack.c.b16 %v2939, %v2931
    %v3732 = vpack.c.b16 %v2940, %v2932
    %v3733 = vpack.c.b16 %v2941, %v2933
    %v3734 = vpack.c.b16 %v2942, %v2934
    %v3735 = vpack.c.b16 %v2951, %v2943
    %v3736 = vpack.c.b16 %v2952, %v2944
    %v3737 = vpack.c.b16 %v2953, %v2945
    %v3738 = vpack.c.b16 %v2954, %v2946
    %v3739 = vpack.c.b16 %v2955, %v2947
    %v3740 = vpack.c.b16 %v2956, %v2948
    %v3741 = vpack.c.b16 %v2957, %v2949
    %v3742 = vpack.c.b16 %v2958, %v2950
    %v3743 = vpack.c.b16 %v2967, %v2959
    %v3744 = vpack.c.b16 %v2968, %v2960
    %v3745 = vpack.c.b16 %v2969, %v2961
    %v3746 = vpack.c.b16 %v2970, %v2962
    %v3747 = vpack.c.b16 %v2971, %v2963
    %v3748 = vpack.c.b16 %v2972, %v2964
    %v3749 = vpack.c.b16 %v2973, %v2965
    %v3750 = vpack.c.b16 %v2974, %v2966
    %v3751 = vpack.c.b16 %v2983, %v2975
    %v3752 = vpack.c.b16 %v2984, %v2976
    %v3753 = vpack.c.b16 %v2985, %v2977
    %v3754 = vpack.c.b16 %v2986, %v2978
    %v3755 = vpack.c.b16 %v2987, %v2979
    %v3756 = vpack.c.b16 %v2988, %v2980
    %v3757 = vpack.c.b16 %v2989, %v2981
    %v3758 = vpack.c.b16 %v2990, %v2982
    %v3759 = vpack.c.b16 %v2999, %v2991
    %v3760 = vpack.c.b16 %v3000, %v2992
    %v3761 = vpack.c.b16 %v3001, %v2993
    %v3762 = vpack.c.b16 %v3002, %v2994
    %v3763 = vpack.c.b16 %v3003, %v2995
    %v3764 = vpack.c.b16 %v3004, %v2996
    %v3765 = vpack.c.b16 %v3005, %v2997
    %v3766 = vpack.c.b16 %v3006, %v2998
    %v3767 = vpack.c.b16 %v3015, %v3007
    %v3768 = vpack.c.b16 %v3016, %v3008
    %v3769 = vpack.c.b16 %v3017, %v3009
    %v3770 = vpack.c.b16 %v3018, %v3010
    %v3771 = vpack.c.b16 %v3019, %v3011
    %v3772 = vpack.c.b16 %v3020, %v3012
    %v3773 = vpack.c.b16 %v3021, %v3013
    %v3774 = vpack.c.b16 %v3022, %v3014
    %v3775 = vpack.c.b16 %v3031, %v3023
    %v3776 = vpack.c.b16 %v3032, %v3024
    %v3777 = vpack.c.b16 %v3033, %v3025
    %v3778 = vpack.c.b16 %v3034, %v3026
    %v3779 = vpack.c.b16 %v3035, %v3027
    %v3780 = vpack.c.b16 %v3036, %v3028
    %v3781 = vpack.c.b16 %v3037, %v3029
    %v3782 = vpack.c.b16 %v3038, %v3030
    %v3783 = vpack.c.b16 %v3047, %v3039
    %v3784 = vpack.c.b16 %v3048, %v3040
    %v3785 = vpack.c.b16 %v3049, %v3041
    %v3786 = vpack.c.b16 %v3050, %v3042
    %v3787 = vpack.c.b16 %v3051, %v3043
    %v3788 = vpack.c.b16 %v3052, %v3044
    %v3789 = vpack.c.b16 %v3053, %v3045
    %v3790 = vpack.c.b16 %v3054, %v3046
    %v3791 = vpack.c.b16 %v3063, %v3055
    %v3792 = vpack.c.b16 %v3064, %v3056
    %v3793 = vpack.c.b16 %v3065, %v3057
    %v3794 = vpack.c.b16 %v3066, %v3058
    %v3795 = vpack.c.b16 %v3067, %v3059
    %v3796 = vpack.c.b16 %v3068, %v3060
    %v3797 = vpack.c.b16 %v3069, %v3061
    %v3798 = vpack.c.b16 %v3070, %v3062
    %v3799 = vpack.c.b16 %v3079, %v3071
    %v3800 = vpack.c.b16 %v3080, %v3072
    %v3801 = vpack.c.b16 %v3081, %v3073
    %v3802 = vpack.c.b16 %v3082, %v3074
    %v3803 = vpack.c.b16 %v3083, %v3075
    %v3804 = vpack.c.b16 %v3084, %v3076
    %v3805 = vpack.c.b16 %v3085, %v3077
    %v3806 = vpack.c.b16 %v3086, %v3078
    %v3807 = vpack.c.b16 %v3095, %v3087
    %v3808 = vpack.c.b16 %v3096, %v3088
    %v3809 = vpack.c.b16 %v3097, %v3089
    %v3810 = vpack.c.b16 %v3098, %v3090
    %v3811 = vpack.c.b16 %v3099, %v3091
    %v3812 = vpack.c.b16 %v3100, %v3092
    %v3813 = vpack.c.b16 %v3101, %v3093
    %v3814 = vpack.c.b16 %v3102, %v3094
    %v3815 = vpack.c.b16 %v3111, %v3103
    %v3816 = vpack.c.b16 %v3112, %v3104
    %v3817 = vpack.c.b16 %v3113, %v3105
    %v3818 = vpack.c.b16 %v3114, %v3106
    %v3819 = vpack.c.b16 %v3115, %v3107
    %v3820 = vpack.c.b16 %v3116, %v3108
    %v3821 = vpack.c.b16 %v3117, %v3109
    %v3822 = vpack.c.b16 %v3118, %v3110
    %v3823 = vpack.c.b16 %v3127, %v3119
    %v3824 = vpack.c.b16 %v3128, %v3120
    %v3825 = vpack.c.b16 %v3129, %v3121
    %v3826 = vpack.c.b16 %v3130, %v3122
    %v3827 = vpack.c.b16 %v3131, %v3123
    %v3828 = vpack.c.b16 %v3132, %v3124
    %v3829 = vpack.c.b16 %v3133, %v3125
    %v3830 = vpack.c.b16 %v3134, %v3126
    %v3831 = vpack.c.b16 %v3143, %v3135
    %v3832 = vpack.c.b16 %v3144, %v3136
    %v3833 = vpack.c.b16 %v3145, %v3137
    %v3834 = vpack.c.b16 %v3146, %v3138
    %v3835 = vpack.c.b16 %v3147, %v3139
    %v3836 = vpack.c.b16 %v3148, %v3140
    %v3837 = vpack.c.b16 %v3149, %v3141
    %v3838 = vpack.c.b16 %v3150, %v3142
    %v3839 = vpack.c.b16 %v3159, %v3151
    %v3840 = vpack.c.b16 %v3160, %v3152
    %v3841 = vpack.c.b16 %v3161, %v3153
    %v3842 = vpack.c.b16 %v3162, %v3154
    %v3843 = vpack.c.b16 %v3163, %v3155
    %v3844 = vpack.c.b16 %v3164, %v3156
    %v3845 = vpack.c.b16 %v3165, %v3157
    %v3846 = vpack.c.b16 %v3166, %v3158
    %v3847 = vpack.c.b16 %v3175, %v3167
    %v3848 = vpack.c.b16 %v3176, %v3168
    %v3849 = vpack.c.b16 %v3177, %v3169
    %v3850 = vpack.c.b16 %v3178, %v3170
    %v3851 = vpack.c.b16 %v3179, %v3171
    %v3852 = vpack.c.b16 %v3180, %v3172
    %v3853 = vpack.c.b16 %v3181, %v3173
    %v3854 = vpack.c.b16 %v3182, %v3174
    %v3855 = vpack.c.b16 %v3191, %v3183
    %v3856 = vpack.c.b16 %v3192, %v3184
    %v3857 = vpack.c.b16 %v3193, %v3185
    %v3858 = vpack.c.b16 %v3194, %v3186
    %v3859 = vpack.c.b16 %v3195, %v3187
    %v3860 = vpack.c.b16 %v3196, %v3188
    %v3861 = vpack.c.b16 %v3197, %v3189
    %v3862 = vpack.c.b16 %v3198, %v3190
    %v3863 = vpack.c.b16 %v3207, %v3199
    %v3864 = vpack.c.b16 %v3208, %v3200
    %v3865 = vpack.c.b16 %v3209, %v3201
    %v3866 = vpack.c.b16 %v3210, %v3202
    %v3867 = vpack.c.b16 %v3211, %v3203
    %v3868 = vpack.c.b16 %v3212, %v3204
    %v3869 = vpack.c.b16 %v3213, %v3205
    %v3870 = vpack.c.b16 %v3214, %v3206
    %v3871 = vpack.c.b16 %v3223, %v3215
    %v3872 = vpack.c.b16 %v3224, %v3216
    %v3873 = vpack.c.b16 %v3225, %v3217
    %v3874 = vpack.c.b16 %v3226, %v3218
    %v3875 = vpack.c.b16 %v3227, %v3219
    %v3876 = vpack.c.b16 %v3228, %v3220
    %v3877 = vpack.c.b16 %v3229, %v3221
    %v3878 = vpack.c.b16 %v3230, %v3222
    %v3879 = vpack.c.b16 %v3239, %v3231
    %v3880 = vpack.c.b16 %v3240, %v3232
    %v3881 = vpack.c.b16 %v3241, %v3233
    %v3882 = vpack.c.b16 %v3242, %v3234
    %v3883 = vpack.c.b16 %v3243, %v3235
    %v3884 = vpack.c.b16 %v3244, %v3236
    %v3885 = vpack.c.b16 %v3245, %v3237
    %v3886 = vpack.c.b16 %v3246, %v3238
    %v3887 = vpack.c.b16 %v3255, %v3247
    %v3888 = vpack.c.b16 %v3256, %v3248
    %v3889 = vpack.c.b16 %v3257, %v3249
    %v3890 = vpack.c.b16 %v3258, %v3250
    %v3891 = vpack.c.b16 %v3259, %v3251
    %v3892 = vpack.c.b16 %v3260, %v3252
    %v3893 = vpack.c.b16 %v3261, %v3253
    %v3894 = vpack.c.b16 %v3262, %v3254
    %v3895 = vpack.c.b16 %v3271, %v3263
    %v3896 = vpack.c.b16 %v3272, %v3264
    %v3897 = vpack.c.b16 %v3273, %v3265
    %v3898 = vpack.c.b16 %v3274, %v3266
    %v3899 = vpack.c.b16 %v3275, %v3267
    %v3900 = vpack.c.b16 %v3276, %v3268
    %v3901 = vpack.c.b16 %v3277, %v3269
    %v3902 = vpack.c.b16 %v3278, %v3270
    %v3903 = vpack.c.b16 %v3287, %v3279
    %v3904 = vpack.c.b16 %v3288, %v3280
    %v3905 = vpack.c.b16 %v3289, %v3281
    %v3906 = vpack.c.b16 %v3290, %v3282
    %v3907 = vpack.c.b16 %v3291, %v3283
    %v3908 = vpack.c.b16 %v3292, %v3284
    %v3909 = vpack.c.b16 %v3293, %v3285
    %v3910 = vpack.c.b16 %v3294, %v3286
    %v3911 = vpack.c.b16 %v3303, %v3295
    %v3912 = vpack.c.b16 %v3304, %v3296
    %v3913 = vpack.c.b16 %v3305, %v3297
    %v3914 = vpack.c.b16 %v3306, %v3298
    %v3915 = vpack.c.b16 %v3307, %v3299
    %v3916 = vpack.c.b16 %v3308, %v3300
    %v3917 = vpack.c.b16 %v3309, %v3301
    %v3918 = vpack.c.b16 %v3310, %v3302
    %v3919 = vpack.c.b16 %v3319, %v3311
    %v3920 = vpack.c.b16 %v3320, %v3312
    %v3921 = vpack.c.b16 %v3321, %v3313
    %v3922 = vpack.c.b16 %v3322, %v3314
    %v3923 = vpack.c.b16 %v3323, %v3315
    %v3924 = vpack.c.b16 %v3324, %v3316
    %v3925 = vpack.c.b16 %v3325, %v3317
    %v3926 = vpack.c.b16 %v3326, %v3318
    %v3927 = vpack.c.b16 %v3335, %v3327
    %v3928 = vpack.c.b16 %v3336, %v3328
    %v3929 = vpack.c.b16 %v3337, %v3329
    %v3930 = vpack.c.b16 %v3338, %v3330
    %v3931 = vpack.c.b16 %v3339, %v3331
    %v3932 = vpack.c.b16 %v3340, %v3332
    %v3933 = vpack.c.b16 %v3341, %v3333
    %v3934 = vpack.c.b16 %v3342, %v3334
    %v3935 = vpack.c.b16 %v3351, %v3343
    %v3936 = vpack.c.b16 %v3352, %v3344
    %v3937 = vpack.c.b16 %v3353, %v3345
    %v3938 = vpack.c.b16 %v3354, %v3346
    %v3939 = vpack.c.b16 %v3355, %v3347
    %v3940 = vpack.c.b16 %v3356, %v3348
    %v3941 = vpack.c.b16 %v3357, %v3349
    %v3942 = vpack.c.b16 %v3358, %v3350
    %v3943 = vpack.c.b16 %v3367, %v3359
    %v3944 = vpack.c.b16 %v3368, %v3360
    %v3945 = vpack.c.b16 %v3369, %v3361
    %v3946 = vpack.c.b16 %v3370, %v3362
    %v3947 = vpack.c.b16 %v3371, %v3363
    %v3948 = vpack.c.b16 %v3372, %v3364
    %v3949 = vpack.c.b16 %v3373, %v3365
    %v3950 = vpack.c.b16 %v3374, %v3366
    %v3951 = vpack.c.b16 %v3383, %v3375
    %v3952 = vpack.c.b16 %v3384, %v3376
    %v3953 = vpack.c.b16 %v3385, %v3377
    %v3954 = vpack.c.b16 %v3386, %v3378
    %v3955 = vpack.c.b16 %v3387, %v3379
    %v3956 = vpack.c.b16 %v3388, %v3380
    %v3957 = vpack.c.b16 %v3389, %v3381
    %v3958 = vpack.c.b16 %v3390, %v3382
    %v3959 = vpack.c.b16 %v3399, %v3391
    %v3960 = vpack.c.b16 %v3400, %v3392
    %v3961 = vpack.c.b16 %v3401, %v3393
    %v3962 = vpack.c.b16 %v3402, %v3394
    %v3963 = vpack.c.b16 %v3403, %v3395
    %v3964 = vpack.c.b16 %v3404, %v3396
    %v3965 = vpack.c.b16 %v3405, %v3397
    %v3966 = vpack.c.b16 %v3406, %v3398
    %v3967 = vpack.c.b16 %v3415, %v3407
    %v3968 = vpack.c.b16 %v3416, %v3408
    %v3969 = vpack.c.b16 %v3417, %v3409
    %v3970 = vpack.c.b16 %v3418, %v3410
    %v3971 = vpack.c.b16 %v3419, %v3411
    %v3972 = vpack.c.b16 %v3420, %v3412
    %v3973 = vpack.c.b16 %v3421, %v3413
    %v3974 = vpack.c.b16 %v3422, %v3414
    %v3975 = vpack.c.b16 %v3431, %v3423
    %v3976 = vpack.c.b16 %v3432, %v3424
    %v3977 = vpack.c.b16 %v3433, %v3425
    %v3978 = vpack.c.b16 %v3434, %v3426
    %v3979 = vpack.c.b16 %v3435, %v3427
    %v3980 = vpack.c.b16 %v3436, %v3428
    %v3981 = vpack.c.b16 %v3437, %v3429
    %v3982 = vpack.c.b16 %v3438, %v3430
    %v3983 = vpack.c.b16 %v3447, %v3439
    %v3984 = vpack.c.b16 %v3448, %v3440
    %v3985 = vpack.c.b16 %v3449, %v3441
    %v3986 = vpack.c.b16 %v3450, %v3442
    %v3987 = vpack.c.b16 %v3451, %v3443
    %v3988 = vpack.c.b16 %v3452, %v3444
    %v3989 = vpack.c.b16 %v3453, %v3445
    %v3990 = vpack.c.b16 %v3454, %v3446
    %v3991 = vpack.c.b16 %v3463, %v3455
    %v3992 = vpack.c.b16 %v3464, %v3456
    %v3993 = vpack.c.b16 %v3465, %v3457
    %v3994 = vpack.c.b16 %v3466, %v3458
    %v3995 = vpack.c.b16 %v3467, %v3459
    %v3996 = vpack.c.b16 %v3468, %v3460
    %v3997 = vpack.c.b16 %v3469, %v3461
    %v3998 = vpack.c.b16 %v3470, %v3462
    %v3999 = vpack.c.b16 %v3479, %v3471
    %v4000 = vpack.c.b16 %v3480, %v3472
    %v4001 = vpack.c.b16 %v3481, %v3473
    %v4002 = vpack.c.b16 %v3482, %v3474
    %v4003 = vpack.c.b16 %v3483, %v3475
    %v4004 = vpack.c.b16 %v3484, %v3476
    %v4005 = vpack.c.b16 %v3485, %v3477
    %v4006 = vpack.c.b16 %v3486, %v3478
    %v4007 = vpack.c.b16 %v3495, %v3487
    %v4008 = vpack.c.b16 %v3496, %v3488
    %v4009 = vpack.c.b16 %v3497, %v3489
    %v4010 = vpack.c.b16 %v3498, %v3490
    %v4011 = vpack.c.b16 %v3499, %v3491
    %v4012 = vpack.c.b16 %v3500, %v3492
    %v4013 = vpack.c.b16 %v3501, %v3493
    %v4014 = vpack.c.b16 %v3502, %v3494
    %4527 = vmatprep.subr.bf16.mxu0 %v3560
    %4528 = vmatpush1.bf16.msra.mxu0 %v3559
    %4529 = vmatprep.subr.bf16.mxu0 %v3552
    %4530 = vmatpush1.bf16.msra.mxu0 %v3551
    %4531 = vmatprep.subr.bf16.mxu0 %v3544
    %4532 = vmatpush1.bf16.msra.mxu0 %v3543
    %4533 = vmatprep.subr.bf16.mxu0 %v3536
    %4534 = vmatpush1.bf16.msra.mxu0 %v3535
    %4535 = vmatprep.subr.bf16.mxu0 %v3528
    %4536 = vmatpush1.bf16.msra.mxu0 %v3527
    %4537 = vmatprep.subr.bf16.mxu0 %v3520
    %4538 = vmatpush1.bf16.msra.mxu0 %v3519
    %4539 = vmatprep.subr.bf16.mxu0 %v3512
    %4540 = vmatpush1.bf16.msra.mxu0 %v3511
    %4541 = vmatprep.subr.bf16.mxu0 %v3504
    %4542 = vmatpush1.bf16.msra.mxu0 %v3503
    %4543 = vmatprep.subr.bf16.mxu0 %v3624
    %4544 = vmatpush2.bf16.msra.mxu0 %v3623
    %4545 = vmatprep.subr.bf16.mxu0 %v3616
    %4546 = vmatpush2.bf16.msra.mxu0 %v3615
    %4547 = vmatprep.subr.bf16.mxu0 %v3608
    %4548 = vmatpush2.bf16.msra.mxu0 %v3607
    %4549 = vmatprep.subr.bf16.mxu0 %v3600
    %4550 = vmatpush2.bf16.msra.mxu0 %v3599
    %4551 = vmatprep.subr.bf16.mxu0 %v3592
    %4552 = vmatpush2.bf16.msra.mxu0 %v3591
    %4553 = vmatprep.subr.bf16.mxu0 %v3584
    %4554 = vmatpush2.bf16.msra.mxu0 %v3583
    %4555 = vmatprep.subr.bf16.mxu0 %v3576
    %4556 = vmatpush2.bf16.msra.mxu0 %v3575
    %4557 = vmatprep.subr.bf16.mxu0 %v3568
    %4558 = vmatpush2.bf16.msra.mxu0 %v3567
    %4559 = vmatprep.mubr.bf16.mxu0 %v1406
    %4560 = vmatmul.mubr.bf16.gmra.mxu0 %v1405
    %v4561 = vpop.f32.mrf.mxu0
    %v4562 = vadd.f32 %v1930, %v4561
    %v4563 = vpop.f32.mrf.mxu0
    %v4564 = vadd.f32 %v1934, %v4563
    %v4565 = vpop.f32.mrf.mxu0
    %v4566 = vpop.f32.mrf.mxu0
    %4567 = vdwg.mxu0
    %4568 = vmatprep.subr.bf16.mxu0 %v3688
    %4569 = vmatpush1.bf16.msra.mxu0 %v3687
    %4570 = vmatprep.subr.bf16.mxu0 %v3680
    %4571 = vmatpush1.bf16.msra.mxu0 %v3679
    %4572 = vmatprep.subr.bf16.mxu0 %v3672
    %4573 = vmatpush1.bf16.msra.mxu0 %v3671
    %4574 = vmatprep.subr.bf16.mxu0 %v3664
    %4575 = vmatpush1.bf16.msra.mxu0 %v3663
    %4576 = vmatprep.subr.bf16.mxu0 %v3656
    %4577 = vmatpush1.bf16.msra.mxu0 %v3655
    %4578 = vmatprep.subr.bf16.mxu0 %v3648
    %4579 = vmatpush1.bf16.msra.mxu0 %v3647
    %4580 = vmatprep.subr.bf16.mxu0 %v3640
    %4581 = vmatpush1.bf16.msra.mxu0 %v3639
    %4582 = vmatprep.subr.bf16.mxu0 %v3632
    %4583 = vmatpush1.bf16.msra.mxu0 %v3631
    %4584 = vmatprep.subr.bf16.mxu0 %v3752
    %4585 = vmatpush2.bf16.msra.mxu0 %v3751
    %4586 = vmatprep.subr.bf16.mxu0 %v3744
    %4587 = vmatpush2.bf16.msra.mxu0 %v3743
    %4588 = vmatprep.subr.bf16.mxu0 %v3736
    %4589 = vmatpush2.bf16.msra.mxu0 %v3735
    %4590 = vmatprep.subr.bf16.mxu0 %v3728
    %4591 = vmatpush2.bf16.msra.mxu0 %v3727
    %4592 = vmatprep.subr.bf16.mxu0 %v3720
    %4593 = vmatpush2.bf16.msra.mxu0 %v3719
    %4594 = vmatprep.subr.bf16.mxu0 %v3712
    %4595 = vmatpush2.bf16.msra.mxu0 %v3711
    %4596 = vmatprep.subr.bf16.mxu0 %v3704
    %4597 = vmatpush2.bf16.msra.mxu0 %v3703
    %4598 = vmatprep.subr.bf16.mxu0 %v3696
    %4599 = vmatpush2.bf16.msra.mxu0 %v3695
    %4600 = vmatprep.mubr.bf16.mxu0 %v1408
    %4601 = vmatmul.mubr.bf16.gmra.mxu0 %v1407
    %v4602 = vpop.f32.mrf.mxu0
    %v4603 = vadd.f32 %v4562, %v4602
    %v4604 = vpop.f32.mrf.mxu0
    %v4605 = vadd.f32 %v4564, %v4604
    %v4606 = vpop.f32.mrf.mxu0
    %v4607 = vpop.f32.mrf.mxu0
    %4608 = vdwg.mxu0
    %4609 = vmatprep.subr.bf16.mxu0 %v3816
    %4610 = vmatpush1.bf16.msra.mxu0 %v3815
    %4611 = vmatprep.subr.bf16.mxu0 %v3808
    %4612 = vmatpush1.bf16.msra.mxu0 %v3807
    %4613 = vmatprep.subr.bf16.mxu0 %v3800
    %4614 = vmatpush1.bf16.msra.mxu0 %v3799
    %4615 = vmatprep.subr.bf16.mxu0 %v3792
    %4616 = vmatpush1.bf16.msra.mxu0 %v3791
    %4617 = vmatprep.subr.bf16.mxu0 %v3784
    %4618 = vmatpush1.bf16.msra.mxu0 %v3783
    %4619 = vmatprep.subr.bf16.mxu0 %v3776
    %4620 = vmatpush1.bf16.msra.mxu0 %v3775
    %4621 = vmatprep.subr.bf16.mxu0 %v3768
    %4622 = vmatpush1.bf16.msra.mxu0 %v3767
    %4623 = vmatprep.subr.bf16.mxu0 %v3760
    %4624 = vmatpush1.bf16.msra.mxu0 %v3759
    %4625 = vmatprep.subr.bf16.mxu0 %v3880
    %4626 = vmatpush2.bf16.msra.mxu0 %v3879
    %4627 = vmatprep.subr.bf16.mxu0 %v3872
    %4628 = vmatpush2.bf16.msra.mxu0 %v3871
    %4629 = vmatprep.subr.bf16.mxu0 %v3864
    %4630 = vmatpush2.bf16.msra.mxu0 %v3863
    %4631 = vmatprep.subr.bf16.mxu0 %v3856
    %4632 = vmatpush2.bf16.msra.mxu0 %v3855
    %4633 = vmatprep.subr.bf16.mxu0 %v3848
    %4634 = vmatpush2.bf16.msra.mxu0 %v3847
    %4635 = vmatprep.subr.bf16.mxu0 %v3840
    %4636 = vmatpush2.bf16.msra.mxu0 %v3839
    %4637 = vmatprep.subr.bf16.mxu0 %v3832
    %4638 = vmatpush2.bf16.msra.mxu0 %v3831
    %4639 = vmatprep.subr.bf16.mxu0 %v3824
    %4640 = vmatpush2.bf16.msra.mxu0 %v3823
    %4641 = vmatprep.mubr.bf16.mxu0 %v1410
    %4642 = vmatmul.mubr.bf16.gmra.mxu0 %v1409
    %v4643 = vpop.f32.mrf.mxu0
    %v4644 = vadd.f32 %v4603, %v4643
    %v4645 = vpop.f32.mrf.mxu0
    %v4646 = vadd.f32 %v4605, %v4645
    %v4647 = vpop.f32.mrf.mxu0
    %v4648 = vpop.f32.mrf.mxu0
    %4649 = vdwg.mxu0
    %4650 = vmatprep.subr.bf16.mxu0 %v3944
    %4651 = vmatpush1.bf16.msra.mxu0 %v3943
    %4652 = vmatprep.subr.bf16.mxu0 %v3936
    %4653 = vmatpush1.bf16.msra.mxu0 %v3935
    %4654 = vmatprep.subr.bf16.mxu0 %v3928
    %4655 = vmatpush1.bf16.msra.mxu0 %v3927
    %4656 = vmatprep.subr.bf16.mxu0 %v3920
    %4657 = vmatpush1.bf16.msra.mxu0 %v3919
    %4658 = vmatprep.subr.bf16.mxu0 %v3912
    %4659 = vmatpush1.bf16.msra.mxu0 %v3911
    %4660 = vmatprep.subr.bf16.mxu0 %v3904
    %4661 = vmatpush1.bf16.msra.mxu0 %v3903
    %4662 = vmatprep.subr.bf16.mxu0 %v3896
    %4663 = vmatpush1.bf16.msra.mxu0 %v3895
    %4664 = vmatprep.subr.bf16.mxu0 %v3888
    %4665 = vmatpush1.bf16.msra.mxu0 %v3887
    %4666 = vmatprep.subr.bf16.mxu0 %v4008
    %4667 = vmatpush2.bf16.msra.mxu0 %v4007
    %4668 = vmatprep.subr.bf16.mxu0 %v4000
    %4669 = vmatpush2.bf16.msra.mxu0 %v3999
    %4670 = vmatprep.subr.bf16.mxu0 %v3992
    %4671 = vmatpush2.bf16.msra.mxu0 %v3991
    %4672 = vmatprep.subr.bf16.mxu0 %v3984
    %4673 = vmatpush2.bf16.msra.mxu0 %v3983
    %4674 = vmatprep.subr.bf16.mxu0 %v3976
    %4675 = vmatpush2.bf16.msra.mxu0 %v3975
    %4676 = vmatprep.subr.bf16.mxu0 %v3968
    %4677 = vmatpush2.bf16.msra.mxu0 %v3967
    %4678 = vmatprep.subr.bf16.mxu0 %v3960
    %4679 = vmatpush2.bf16.msra.mxu0 %v3959
    %4680 = vmatprep.subr.bf16.mxu0 %v3952
    %4681 = vmatpush2.bf16.msra.mxu0 %v3951
    %4682 = vmatprep.mubr.bf16.mxu0 %v1412
    %4683 = vmatmul.mubr.bf16.gmra.mxu0 %v1411
    %v4684 = vpop.f32.mrf.mxu0
    %v4685 = vadd.f32 %v4644, %v4684
    %v4686 = vpop.f32.mrf.mxu0
    %v4687 = vadd.f32 %v4646, %v4686
    %v4688 = vpop.f32.mrf.mxu0
    %v4689 = vpop.f32.mrf.mxu0
    %4690 = vdwg.mxu0
    %4691 = vmatprep.subr.bf16.mxu0 %v3562
    %4692 = vmatpush1.bf16.msra.mxu0 %v3561
    %4693 = vmatprep.subr.bf16.mxu0 %v3554
    %4694 = vmatpush1.bf16.msra.mxu0 %v3553
    %4695 = vmatprep.subr.bf16.mxu0 %v3546
    %4696 = vmatpush1.bf16.msra.mxu0 %v3545
    %4697 = vmatprep.subr.bf16.mxu0 %v3538
    %4698 = vmatpush1.bf16.msra.mxu0 %v3537
    %4699 = vmatprep.subr.bf16.mxu0 %v3530
    %4700 = vmatpush1.bf16.msra.mxu0 %v3529
    %4701 = vmatprep.subr.bf16.mxu0 %v3522
    %4702 = vmatpush1.bf16.msra.mxu0 %v3521
    %4703 = vmatprep.subr.bf16.mxu0 %v3514
    %4704 = vmatpush1.bf16.msra.mxu0 %v3513
    %4705 = vmatprep.subr.bf16.mxu0 %v3506
    %4706 = vmatpush1.bf16.msra.mxu0 %v3505
    %4707 = vmatprep.subr.bf16.mxu0 %v3626
    %4708 = vmatpush2.bf16.msra.mxu0 %v3625
    %4709 = vmatprep.subr.bf16.mxu0 %v3618
    %4710 = vmatpush2.bf16.msra.mxu0 %v3617
    %4711 = vmatprep.subr.bf16.mxu0 %v3610
    %4712 = vmatpush2.bf16.msra.mxu0 %v3609
    %4713 = vmatprep.subr.bf16.mxu0 %v3602
    %4714 = vmatpush2.bf16.msra.mxu0 %v3601
    %4715 = vmatprep.subr.bf16.mxu0 %v3594
    %4716 = vmatpush2.bf16.msra.mxu0 %v3593
    %4717 = vmatprep.subr.bf16.mxu0 %v3586
    %4718 = vmatpush2.bf16.msra.mxu0 %v3585
    %4719 = vmatprep.subr.bf16.mxu0 %v3578
    %4720 = vmatpush2.bf16.msra.mxu0 %v3577
    %4721 = vmatprep.subr.bf16.mxu0 %v3570
    %4722 = vmatpush2.bf16.msra.mxu0 %v3569
    %4723 = vmatprep.mubr.bf16.mxu0 %v1406
    %4724 = vmatmul.mubr.bf16.gmra.mxu0 %v1405
    %v4725 = vpop.f32.mrf.mxu0
    %v4726 = vadd.f32 %v1938, %v4725
    %v4727 = vpop.f32.mrf.mxu0
    %v4728 = vadd.f32 %v1942, %v4727
    %v4729 = vpop.f32.mrf.mxu0
    %v4730 = vpop.f32.mrf.mxu0
    %4731 = vdwg.mxu0
    %4732 = vmatprep.subr.bf16.mxu0 %v3690
    %4733 = vmatpush1.bf16.msra.mxu0 %v3689
    %4734 = vmatprep.subr.bf16.mxu0 %v3682
    %4735 = vmatpush1.bf16.msra.mxu0 %v3681
    %4736 = vmatprep.subr.bf16.mxu0 %v3674
    %4737 = vmatpush1.bf16.msra.mxu0 %v3673
    %4738 = vmatprep.subr.bf16.mxu0 %v3666
    %4739 = vmatpush1.bf16.msra.mxu0 %v3665
    %4740 = vmatprep.subr.bf16.mxu0 %v3658
    %4741 = vmatpush1.bf16.msra.mxu0 %v3657
    %4742 = vmatprep.subr.bf16.mxu0 %v3650
    %4743 = vmatpush1.bf16.msra.mxu0 %v3649
    %4744 = vmatprep.subr.bf16.mxu0 %v3642
    %4745 = vmatpush1.bf16.msra.mxu0 %v3641
    %4746 = vmatprep.subr.bf16.mxu0 %v3634
    %4747 = vmatpush1.bf16.msra.mxu0 %v3633
    %4748 = vmatprep.subr.bf16.mxu0 %v3754
    %4749 = vmatpush2.bf16.msra.mxu0 %v3753
    %4750 = vmatprep.subr.bf16.mxu0 %v3746
    %4751 = vmatpush2.bf16.msra.mxu0 %v3745
    %4752 = vmatprep.subr.bf16.mxu0 %v3738
    %4753 = vmatpush2.bf16.msra.mxu0 %v3737
    %4754 = vmatprep.subr.bf16.mxu0 %v3730
    %4755 = vmatpush2.bf16.msra.mxu0 %v3729
    %4756 = vmatprep.subr.bf16.mxu0 %v3722
    %4757 = vmatpush2.bf16.msra.mxu0 %v3721
    %4758 = vmatprep.subr.bf16.mxu0 %v3714
    %4759 = vmatpush2.bf16.msra.mxu0 %v3713
    %4760 = vmatprep.subr.bf16.mxu0 %v3706
    %4761 = vmatpush2.bf16.msra.mxu0 %v3705
    %4762 = vmatprep.subr.bf16.mxu0 %v3698
    %4763 = vmatpush2.bf16.msra.mxu0 %v3697
    %4764 = vmatprep.mubr.bf16.mxu0 %v1408
    %4765 = vmatmul.mubr.bf16.gmra.mxu0 %v1407
    %v4766 = vpop.f32.mrf.mxu0
    %v4767 = vadd.f32 %v4726, %v4766
    %v4768 = vpop.f32.mrf.mxu0
    %v4769 = vadd.f32 %v4728, %v4768
    %v4770 = vpop.f32.mrf.mxu0
    %v4771 = vpop.f32.mrf.mxu0
    %4772 = vdwg.mxu0
    %4773 = vmatprep.subr.bf16.mxu0 %v3818
    %4774 = vmatpush1.bf16.msra.mxu0 %v3817
    %4775 = vmatprep.subr.bf16.mxu0 %v3810
    %4776 = vmatpush1.bf16.msra.mxu0 %v3809
    %4777 = vmatprep.subr.bf16.mxu0 %v3802
    %4778 = vmatpush1.bf16.msra.mxu0 %v3801
    %4779 = vmatprep.subr.bf16.mxu0 %v3794
    %4780 = vmatpush1.bf16.msra.mxu0 %v3793
    %4781 = vmatprep.subr.bf16.mxu0 %v3786
    %4782 = vmatpush1.bf16.msra.mxu0 %v3785
    %4783 = vmatprep.subr.bf16.mxu0 %v3778
    %4784 = vmatpush1.bf16.msra.mxu0 %v3777
    %4785 = vmatprep.subr.bf16.mxu0 %v3770
    %4786 = vmatpush1.bf16.msra.mxu0 %v3769
    %4787 = vmatprep.subr.bf16.mxu0 %v3762
    %4788 = vmatpush1.bf16.msra.mxu0 %v3761
    %4789 = vmatprep.subr.bf16.mxu0 %v3882
    %4790 = vmatpush2.bf16.msra.mxu0 %v3881
    %4791 = vmatprep.subr.bf16.mxu0 %v3874
    %4792 = vmatpush2.bf16.msra.mxu0 %v3873
    %4793 = vmatprep.subr.bf16.mxu0 %v3866
    %4794 = vmatpush2.bf16.msra.mxu0 %v3865
    %4795 = vmatprep.subr.bf16.mxu0 %v3858
    %4796 = vmatpush2.bf16.msra.mxu0 %v3857
    %4797 = vmatprep.subr.bf16.mxu0 %v3850
    %4798 = vmatpush2.bf16.msra.mxu0 %v3849
    %4799 = vmatprep.subr.bf16.mxu0 %v3842
    %4800 = vmatpush2.bf16.msra.mxu0 %v3841
    %4801 = vmatprep.subr.bf16.mxu0 %v3834
    %4802 = vmatpush2.bf16.msra.mxu0 %v3833
    %4803 = vmatprep.subr.bf16.mxu0 %v3826
    %4804 = vmatpush2.bf16.msra.mxu0 %v3825
    %4805 = vmatprep.mubr.bf16.mxu0 %v1410
    %4806 = vmatmul.mubr.bf16.gmra.mxu0 %v1409
    %v4807 = vpop.f32.mrf.mxu0
    %v4808 = vadd.f32 %v4767, %v4807
    %v4809 = vpop.f32.mrf.mxu0
    %v4810 = vadd.f32 %v4769, %v4809
    %v4811 = vpop.f32.mrf.mxu0
    %v4812 = vpop.f32.mrf.mxu0
    %4813 = vdwg.mxu0
    %4814 = vmatprep.subr.bf16.mxu0 %v3946
    %4815 = vmatpush1.bf16.msra.mxu0 %v3945
    %4816 = vmatprep.subr.bf16.mxu0 %v3938
    %4817 = vmatpush1.bf16.msra.mxu0 %v3937
    %4818 = vmatprep.subr.bf16.mxu0 %v3930
    %4819 = vmatpush1.bf16.msra.mxu0 %v3929
    %4820 = vmatprep.subr.bf16.mxu0 %v3922
    %4821 = vmatpush1.bf16.msra.mxu0 %v3921
    %4822 = vmatprep.subr.bf16.mxu0 %v3914
    %4823 = vmatpush1.bf16.msra.mxu0 %v3913
    %4824 = vmatprep.subr.bf16.mxu0 %v3906
    %4825 = vmatpush1.bf16.msra.mxu0 %v3905
    %4826 = vmatprep.subr.bf16.mxu0 %v3898
    %4827 = vmatpush1.bf16.msra.mxu0 %v3897
    %4828 = vmatprep.subr.bf16.mxu0 %v3890
    %4829 = vmatpush1.bf16.msra.mxu0 %v3889
    %4830 = vmatprep.subr.bf16.mxu0 %v4010
    %4831 = vmatpush2.bf16.msra.mxu0 %v4009
    %4832 = vmatprep.subr.bf16.mxu0 %v4002
    %4833 = vmatpush2.bf16.msra.mxu0 %v4001
    %4834 = vmatprep.subr.bf16.mxu0 %v3994
    %4835 = vmatpush2.bf16.msra.mxu0 %v3993
    %4836 = vmatprep.subr.bf16.mxu0 %v3986
    %4837 = vmatpush2.bf16.msra.mxu0 %v3985
    %4838 = vmatprep.subr.bf16.mxu0 %v3978
    %4839 = vmatpush2.bf16.msra.mxu0 %v3977
    %4840 = vmatprep.subr.bf16.mxu0 %v3970
    %4841 = vmatpush2.bf16.msra.mxu0 %v3969
    %4842 = vmatprep.subr.bf16.mxu0 %v3962
    %4843 = vmatpush2.bf16.msra.mxu0 %v3961
    %4844 = vmatprep.subr.bf16.mxu0 %v3954
    %4845 = vmatpush2.bf16.msra.mxu0 %v3953
    %4846 = vmatprep.mubr.bf16.mxu0 %v1412
    %4847 = vmatmul.mubr.bf16.gmra.mxu0 %v1411
    %v4848 = vpop.f32.mrf.mxu0
    %v4849 = vadd.f32 %v4808, %v4848
    %v4850 = vpop.f32.mrf.mxu0
    %v4851 = vadd.f32 %v4810, %v4850
    %v4852 = vpop.f32.mrf.mxu0
    %v4853 = vpop.f32.mrf.mxu0
    %4854 = vdwg.mxu0
    %4855 = vmatprep.subr.bf16.mxu0 %v3564
    %4856 = vmatpush1.bf16.msra.mxu0 %v3563
    %4857 = vmatprep.subr.bf16.mxu0 %v3556
    %4858 = vmatpush1.bf16.msra.mxu0 %v3555
    %4859 = vmatprep.subr.bf16.mxu0 %v3548
    %4860 = vmatpush1.bf16.msra.mxu0 %v3547
    %4861 = vmatprep.subr.bf16.mxu0 %v3540
    %4862 = vmatpush1.bf16.msra.mxu0 %v3539
    %4863 = vmatprep.subr.bf16.mxu0 %v3532
    %4864 = vmatpush1.bf16.msra.mxu0 %v3531
    %4865 = vmatprep.subr.bf16.mxu0 %v3524
    %4866 = vmatpush1.bf16.msra.mxu0 %v3523
    %4867 = vmatprep.subr.bf16.mxu0 %v3516
    %4868 = vmatpush1.bf16.msra.mxu0 %v3515
    %4869 = vmatprep.subr.bf16.mxu0 %v3508
    %4870 = vmatpush1.bf16.msra.mxu0 %v3507
    %4871 = vmatprep.subr.bf16.mxu0 %v3628
    %4872 = vmatpush2.bf16.msra.mxu0 %v3627
    %4873 = vmatprep.subr.bf16.mxu0 %v3620
    %4874 = vmatpush2.bf16.msra.mxu0 %v3619
    %4875 = vmatprep.subr.bf16.mxu0 %v3612
    %4876 = vmatpush2.bf16.msra.mxu0 %v3611
    %4877 = vmatprep.subr.bf16.mxu0 %v3604
    %4878 = vmatpush2.bf16.msra.mxu0 %v3603
    %4879 = vmatprep.subr.bf16.mxu0 %v3596
    %4880 = vmatpush2.bf16.msra.mxu0 %v3595
    %4881 = vmatprep.subr.bf16.mxu0 %v3588
    %4882 = vmatpush2.bf16.msra.mxu0 %v3587
    %4883 = vmatprep.subr.bf16.mxu0 %v3580
    %4884 = vmatpush2.bf16.msra.mxu0 %v3579
    %4885 = vmatprep.subr.bf16.mxu0 %v3572
    %4886 = vmatpush2.bf16.msra.mxu0 %v3571
    %4887 = vmatprep.mubr.bf16.mxu0 %v1406
    %4888 = vmatmul.mubr.bf16.gmra.mxu0 %v1405
    %v4889 = vpop.f32.mrf.mxu0
    %v4890 = vadd.f32 %v1946, %v4889
    %v4891 = vpop.f32.mrf.mxu0
    %v4892 = vadd.f32 %v1950, %v4891
    %v4893 = vpop.f32.mrf.mxu0
    %v4894 = vpop.f32.mrf.mxu0
    %4895 = vdwg.mxu0
    %4896 = vmatprep.subr.bf16.mxu0 %v3692
    %4897 = vmatpush1.bf16.msra.mxu0 %v3691
    %4898 = vmatprep.subr.bf16.mxu0 %v3684
    %4899 = vmatpush1.bf16.msra.mxu0 %v3683
    %4900 = vmatprep.subr.bf16.mxu0 %v3676
    %4901 = vmatpush1.bf16.msra.mxu0 %v3675
    %4902 = vmatprep.subr.bf16.mxu0 %v3668
    %4903 = vmatpush1.bf16.msra.mxu0 %v3667
    %4904 = vmatprep.subr.bf16.mxu0 %v3660
    %4905 = vmatpush1.bf16.msra.mxu0 %v3659
    %4906 = vmatprep.subr.bf16.mxu0 %v3652
    %4907 = vmatpush1.bf16.msra.mxu0 %v3651
    %4908 = vmatprep.subr.bf16.mxu0 %v3644
    %4909 = vmatpush1.bf16.msra.mxu0 %v3643
    %4910 = vmatprep.subr.bf16.mxu0 %v3636
    %4911 = vmatpush1.bf16.msra.mxu0 %v3635
    %4912 = vmatprep.subr.bf16.mxu0 %v3756
    %4913 = vmatpush2.bf16.msra.mxu0 %v3755
    %4914 = vmatprep.subr.bf16.mxu0 %v3748
    %4915 = vmatpush2.bf16.msra.mxu0 %v3747
    %4916 = vmatprep.subr.bf16.mxu0 %v3740
    %4917 = vmatpush2.bf16.msra.mxu0 %v3739
    %4918 = vmatprep.subr.bf16.mxu0 %v3732
    %4919 = vmatpush2.bf16.msra.mxu0 %v3731
    %4920 = vmatprep.subr.bf16.mxu0 %v3724
    %4921 = vmatpush2.bf16.msra.mxu0 %v3723
    %4922 = vmatprep.subr.bf16.mxu0 %v3716
    %4923 = vmatpush2.bf16.msra.mxu0 %v3715
    %4924 = vmatprep.subr.bf16.mxu0 %v3708
    %4925 = vmatpush2.bf16.msra.mxu0 %v3707
    %4926 = vmatprep.subr.bf16.mxu0 %v3700
    %4927 = vmatpush2.bf16.msra.mxu0 %v3699
    %4928 = vmatprep.mubr.bf16.mxu0 %v1408
    %4929 = vmatmul.mubr.bf16.gmra.mxu0 %v1407
    %v4930 = vpop.f32.mrf.mxu0
    %v4931 = vadd.f32 %v4890, %v4930
    %v4932 = vpop.f32.mrf.mxu0
    %v4933 = vadd.f32 %v4892, %v4932
    %v4934 = vpop.f32.mrf.mxu0
    %v4935 = vpop.f32.mrf.mxu0
    %4936 = vdwg.mxu0
    %4937 = vmatprep.subr.bf16.mxu0 %v3820
    %4938 = vmatpush1.bf16.msra.mxu0 %v3819
    %4939 = vmatprep.subr.bf16.mxu0 %v3812
    %4940 = vmatpush1.bf16.msra.mxu0 %v3811
    %4941 = vmatprep.subr.bf16.mxu0 %v3804
    %4942 = vmatpush1.bf16.msra.mxu0 %v3803
    %4943 = vmatprep.subr.bf16.mxu0 %v3796
    %4944 = vmatpush1.bf16.msra.mxu0 %v3795
    %4945 = vmatprep.subr.bf16.mxu0 %v3788
    %4946 = vmatpush1.bf16.msra.mxu0 %v3787
    %4947 = vmatprep.subr.bf16.mxu0 %v3780
    %4948 = vmatpush1.bf16.msra.mxu0 %v3779
    %4949 = vmatprep.subr.bf16.mxu0 %v3772
    %4950 = vmatpush1.bf16.msra.mxu0 %v3771
    %4951 = vmatprep.subr.bf16.mxu0 %v3764
    %4952 = vmatpush1.bf16.msra.mxu0 %v3763
    %4953 = vmatprep.subr.bf16.mxu0 %v3884
    %4954 = vmatpush2.bf16.msra.mxu0 %v3883
    %4955 = vmatprep.subr.bf16.mxu0 %v3876
    %4956 = vmatpush2.bf16.msra.mxu0 %v3875
    %4957 = vmatprep.subr.bf16.mxu0 %v3868
    %4958 = vmatpush2.bf16.msra.mxu0 %v3867
    %4959 = vmatprep.subr.bf16.mxu0 %v3860
    %4960 = vmatpush2.bf16.msra.mxu0 %v3859
    %4961 = vmatprep.subr.bf16.mxu0 %v3852
    %4962 = vmatpush2.bf16.msra.mxu0 %v3851
    %4963 = vmatprep.subr.bf16.mxu0 %v3844
    %4964 = vmatpush2.bf16.msra.mxu0 %v3843
    %4965 = vmatprep.subr.bf16.mxu0 %v3836
    %4966 = vmatpush2.bf16.msra.mxu0 %v3835
    %4967 = vmatprep.subr.bf16.mxu0 %v3828
    %4968 = vmatpush2.bf16.msra.mxu0 %v3827
    %4969 = vmatprep.mubr.bf16.mxu0 %v1410
    %4970 = vmatmul.mubr.bf16.gmra.mxu0 %v1409
    %v4971 = vpop.f32.mrf.mxu0
    %v4972 = vadd.f32 %v4931, %v4971
    %v4973 = vpop.f32.mrf.mxu0
    %v4974 = vadd.f32 %v4933, %v4973
    %v4975 = vpop.f32.mrf.mxu0
    %v4976 = vpop.f32.mrf.mxu0
    %4977 = vdwg.mxu0
    %4978 = vmatprep.subr.bf16.mxu0 %v3948
    %4979 = vmatpush1.bf16.msra.mxu0 %v3947
    %4980 = vmatprep.subr.bf16.mxu0 %v3940
    %4981 = vmatpush1.bf16.msra.mxu0 %v3939
    %4982 = vmatprep.subr.bf16.mxu0 %v3932
    %4983 = vmatpush1.bf16.msra.mxu0 %v3931
    %4984 = vmatprep.subr.bf16.mxu0 %v3924
    %4985 = vmatpush1.bf16.msra.mxu0 %v3923
    %4986 = vmatprep.subr.bf16.mxu0 %v3916
    %4987 = vmatpush1.bf16.msra.mxu0 %v3915
    %4988 = vmatprep.subr.bf16.mxu0 %v3908
    %4989 = vmatpush1.bf16.msra.mxu0 %v3907
    %4990 = vmatprep.subr.bf16.mxu0 %v3900
    %4991 = vmatpush1.bf16.msra.mxu0 %v3899
    %4992 = vmatprep.subr.bf16.mxu0 %v3892
    %4993 = vmatpush1.bf16.msra.mxu0 %v3891
    %4994 = vmatprep.subr.bf16.mxu0 %v4012
    %4995 = vmatpush2.bf16.msra.mxu0 %v4011
    %4996 = vmatprep.subr.bf16.mxu0 %v4004
    %4997 = vmatpush2.bf16.msra.mxu0 %v4003
    %4998 = vmatprep.subr.bf16.mxu0 %v3996
    %4999 = vmatpush2.bf16.msra.mxu0 %v3995
    %5000 = vmatprep.subr.bf16.mxu0 %v3988
    %5001 = vmatpush2.bf16.msra.mxu0 %v3987
    %5002 = vmatprep.subr.bf16.mxu0 %v3980
    %5003 = vmatpush2.bf16.msra.mxu0 %v3979
    %5004 = vmatprep.subr.bf16.mxu0 %v3972
    %5005 = vmatpush2.bf16.msra.mxu0 %v3971
    %5006 = vmatprep.subr.bf16.mxu0 %v3964
    %5007 = vmatpush2.bf16.msra.mxu0 %v3963
    %5008 = vmatprep.subr.bf16.mxu0 %v3956
    %5009 = vmatpush2.bf16.msra.mxu0 %v3955
    %5010 = vmatprep.mubr.bf16.mxu0 %v1412
    %5011 = vmatmul.mubr.bf16.gmra.mxu0 %v1411
    %v5012 = vpop.f32.mrf.mxu0
    %v5013 = vadd.f32 %v4972, %v5012
    %v5014 = vpop.f32.mrf.mxu0
    %v5015 = vadd.f32 %v4974, %v5014
    %v5016 = vpop.f32.mrf.mxu0
    %v5017 = vpop.f32.mrf.mxu0
    %5018 = vdwg.mxu0
    %5019 = vmatprep.subr.bf16.mxu0 %v3566
    %5020 = vmatpush1.bf16.msra.mxu0 %v3565
    %5021 = vmatprep.subr.bf16.mxu0 %v3558
    %5022 = vmatpush1.bf16.msra.mxu0 %v3557
    %5023 = vmatprep.subr.bf16.mxu0 %v3550
    %5024 = vmatpush1.bf16.msra.mxu0 %v3549
    %5025 = vmatprep.subr.bf16.mxu0 %v3542
    %5026 = vmatpush1.bf16.msra.mxu0 %v3541
    %5027 = vmatprep.subr.bf16.mxu0 %v3534
    %5028 = vmatpush1.bf16.msra.mxu0 %v3533
    %5029 = vmatprep.subr.bf16.mxu0 %v3526
    %5030 = vmatpush1.bf16.msra.mxu0 %v3525
    %5031 = vmatprep.subr.bf16.mxu0 %v3518
    %5032 = vmatpush1.bf16.msra.mxu0 %v3517
    %5033 = vmatprep.subr.bf16.mxu0 %v3510
    %5034 = vmatpush1.bf16.msra.mxu0 %v3509
    %5035 = vmatprep.subr.bf16.mxu0 %v3630
    %5036 = vmatpush2.bf16.msra.mxu0 %v3629
    %5037 = vmatprep.subr.bf16.mxu0 %v3622
    %5038 = vmatpush2.bf16.msra.mxu0 %v3621
    %5039 = vmatprep.subr.bf16.mxu0 %v3614
    %5040 = vmatpush2.bf16.msra.mxu0 %v3613
    %5041 = vmatprep.subr.bf16.mxu0 %v3606
    %5042 = vmatpush2.bf16.msra.mxu0 %v3605
    %5043 = vmatprep.subr.bf16.mxu0 %v3598
    %5044 = vmatpush2.bf16.msra.mxu0 %v3597
    %5045 = vmatprep.subr.bf16.mxu0 %v3590
    %5046 = vmatpush2.bf16.msra.mxu0 %v3589
    %5047 = vmatprep.subr.bf16.mxu0 %v3582
    %5048 = vmatpush2.bf16.msra.mxu0 %v3581
    %5049 = vmatprep.subr.bf16.mxu0 %v3574
    %5050 = vmatpush2.bf16.msra.mxu0 %v3573
    %5051 = vmatprep.mubr.bf16.mxu0 %v1406
    %5052 = vmatmul.mubr.bf16.gmra.mxu0 %v1405
    %v5053 = vpop.f32.mrf.mxu0
    %v5054 = vadd.f32 %v1954, %v5053
    %v5055 = vpop.f32.mrf.mxu0
    %v5056 = vadd.f32 %v1958, %v5055
    %v5057 = vpop.f32.mrf.mxu0
    %v5058 = vpop.f32.mrf.mxu0
    %5059 = vdwg.mxu0
    %5060 = vmatprep.subr.bf16.mxu0 %v3694
    %5061 = vmatpush1.bf16.msra.mxu0 %v3693
    %5062 = vmatprep.subr.bf16.mxu0 %v3686
    %5063 = vmatpush1.bf16.msra.mxu0 %v3685
    %5064 = vmatprep.subr.bf16.mxu0 %v3678
    %5065 = vmatpush1.bf16.msra.mxu0 %v3677
    %5066 = vmatprep.subr.bf16.mxu0 %v3670
    %5067 = vmatpush1.bf16.msra.mxu0 %v3669
    %5068 = vmatprep.subr.bf16.mxu0 %v3662
    %5069 = vmatpush1.bf16.msra.mxu0 %v3661
    %5070 = vmatprep.subr.bf16.mxu0 %v3654
    %5071 = vmatpush1.bf16.msra.mxu0 %v3653
    %5072 = vmatprep.subr.bf16.mxu0 %v3646
    %5073 = vmatpush1.bf16.msra.mxu0 %v3645
    %5074 = vmatprep.subr.bf16.mxu0 %v3638
    %5075 = vmatpush1.bf16.msra.mxu0 %v3637
    %5076 = vmatprep.subr.bf16.mxu0 %v3758
    %5077 = vmatpush2.bf16.msra.mxu0 %v3757
    %5078 = vmatprep.subr.bf16.mxu0 %v3750
    %5079 = vmatpush2.bf16.msra.mxu0 %v3749
    %5080 = vmatprep.subr.bf16.mxu0 %v3742
    %5081 = vmatpush2.bf16.msra.mxu0 %v3741
    %5082 = vmatprep.subr.bf16.mxu0 %v3734
    %5083 = vmatpush2.bf16.msra.mxu0 %v3733
    %5084 = vmatprep.subr.bf16.mxu0 %v3726
    %5085 = vmatpush2.bf16.msra.mxu0 %v3725
    %5086 = vmatprep.subr.bf16.mxu0 %v3718
    %5087 = vmatpush2.bf16.msra.mxu0 %v3717
    %5088 = vmatprep.subr.bf16.mxu0 %v3710
    %5089 = vmatpush2.bf16.msra.mxu0 %v3709
    %5090 = vmatprep.subr.bf16.mxu0 %v3702
    %5091 = vmatpush2.bf16.msra.mxu0 %v3701
    %5092 = vmatprep.mubr.bf16.mxu0 %v1408
    %5093 = vmatmul.mubr.bf16.gmra.mxu0 %v1407
    %v5094 = vpop.f32.mrf.mxu0
    %v5095 = vadd.f32 %v5054, %v5094
    %v5096 = vpop.f32.mrf.mxu0
    %v5097 = vadd.f32 %v5056, %v5096
    %v5098 = vpop.f32.mrf.mxu0
    %v5099 = vpop.f32.mrf.mxu0
    %5100 = vdwg.mxu0
    %5101 = vmatprep.subr.bf16.mxu0 %v3822
    %5102 = vmatpush1.bf16.msra.mxu0 %v3821
    %5103 = vmatprep.subr.bf16.mxu0 %v3814
    %5104 = vmatpush1.bf16.msra.mxu0 %v3813
    %5105 = vmatprep.subr.bf16.mxu0 %v3806
    %5106 = vmatpush1.bf16.msra.mxu0 %v3805
    %5107 = vmatprep.subr.bf16.mxu0 %v3798
    %5108 = vmatpush1.bf16.msra.mxu0 %v3797
    %5109 = vmatprep.subr.bf16.mxu0 %v3790
    %5110 = vmatpush1.bf16.msra.mxu0 %v3789
    %5111 = vmatprep.subr.bf16.mxu0 %v3782
    %5112 = vmatpush1.bf16.msra.mxu0 %v3781
    %5113 = vmatprep.subr.bf16.mxu0 %v3774
    %5114 = vmatpush1.bf16.msra.mxu0 %v3773
    %5115 = vmatprep.subr.bf16.mxu0 %v3766
    %5116 = vmatpush1.bf16.msra.mxu0 %v3765
    %5117 = vmatprep.subr.bf16.mxu0 %v3886
    %5118 = vmatpush2.bf16.msra.mxu0 %v3885
    %5119 = vmatprep.subr.bf16.mxu0 %v3878
    %5120 = vmatpush2.bf16.msra.mxu0 %v3877
    %5121 = vmatprep.subr.bf16.mxu0 %v3870
    %5122 = vmatpush2.bf16.msra.mxu0 %v3869
    %5123 = vmatprep.subr.bf16.mxu0 %v3862
    %5124 = vmatpush2.bf16.msra.mxu0 %v3861
    %5125 = vmatprep.subr.bf16.mxu0 %v3854
    %5126 = vmatpush2.bf16.msra.mxu0 %v3853
    %5127 = vmatprep.subr.bf16.mxu0 %v3846
    %5128 = vmatpush2.bf16.msra.mxu0 %v3845
    %5129 = vmatprep.subr.bf16.mxu0 %v3838
    %5130 = vmatpush2.bf16.msra.mxu0 %v3837
    %5131 = vmatprep.subr.bf16.mxu0 %v3830
    %5132 = vmatpush2.bf16.msra.mxu0 %v3829
    %5133 = vmatprep.mubr.bf16.mxu0 %v1410
    %5134 = vmatmul.mubr.bf16.gmra.mxu0 %v1409
    %v5135 = vpop.f32.mrf.mxu0
    %v5136 = vadd.f32 %v5095, %v5135
    %v5137 = vpop.f32.mrf.mxu0
    %v5138 = vadd.f32 %v5097, %v5137
    %v5139 = vpop.f32.mrf.mxu0
    %v5140 = vpop.f32.mrf.mxu0
    %5141 = vdwg.mxu0
    %5142 = vmatprep.subr.bf16.mxu0 %v3950
    %5143 = vmatpush1.bf16.msra.mxu0 %v3949
    %5144 = vmatprep.subr.bf16.mxu0 %v3942
    %5145 = vmatpush1.bf16.msra.mxu0 %v3941
    %5146 = vmatprep.subr.bf16.mxu0 %v3934
    %5147 = vmatpush1.bf16.msra.mxu0 %v3933
    %5148 = vmatprep.subr.bf16.mxu0 %v3926
    %5149 = vmatpush1.bf16.msra.mxu0 %v3925
    %5150 = vmatprep.subr.bf16.mxu0 %v3918
    %5151 = vmatpush1.bf16.msra.mxu0 %v3917
    %5152 = vmatprep.subr.bf16.mxu0 %v3910
    %5153 = vmatpush1.bf16.msra.mxu0 %v3909
    %5154 = vmatprep.subr.bf16.mxu0 %v3902
    %5155 = vmatpush1.bf16.msra.mxu0 %v3901
    %5156 = vmatprep.subr.bf16.mxu0 %v3894
    %5157 = vmatpush1.bf16.msra.mxu0 %v3893
    %5158 = vmatprep.subr.bf16.mxu0 %v4014
    %5159 = vmatpush2.bf16.msra.mxu0 %v4013
    %5160 = vmatprep.subr.bf16.mxu0 %v4006
    %5161 = vmatpush2.bf16.msra.mxu0 %v4005
    %5162 = vmatprep.subr.bf16.mxu0 %v3998
    %5163 = vmatpush2.bf16.msra.mxu0 %v3997
    %5164 = vmatprep.subr.bf16.mxu0 %v3990
    %5165 = vmatpush2.bf16.msra.mxu0 %v3989
    %5166 = vmatprep.subr.bf16.mxu0 %v3982
    %5167 = vmatpush2.bf16.msra.mxu0 %v3981
    %5168 = vmatprep.subr.bf16.mxu0 %v3974
    %5169 = vmatpush2.bf16.msra.mxu0 %v3973
    %5170 = vmatprep.subr.bf16.mxu0 %v3966
    %5171 = vmatpush2.bf16.msra.mxu0 %v3965
    %5172 = vmatprep.subr.bf16.mxu0 %v3958
    %5173 = vmatpush2.bf16.msra.mxu0 %v3957
    %5174 = vmatprep.mubr.bf16.mxu0 %v1412
    %5175 = vmatmul.mubr.bf16.gmra.mxu0 %v1411
    %v5176 = vpop.f32.mrf.mxu0
    %v5177 = vadd.f32 %v5136, %v5176
    %v5178 = vpop.f32.mrf.mxu0
    %v5179 = vadd.f32 %v5138, %v5178
    %v5180 = vpop.f32.mrf.mxu0
    %v5181 = vpop.f32.mrf.mxu0
    %5182 = vdwg.mxu0
    %v5183 = vmax.f32 %v4685, 0.0
    %v5184 = vmax.f32 %v4687, 0.0
    %v5185 = vmax.f32 %v4849, 0.0
    %v5186 = vmax.f32 %v4851, 0.0
    %v5187 = vmax.f32 %v5013, 0.0
    %v5188 = vmax.f32 %v5015, 0.0
    %v5189 = vmax.f32 %v5177, 0.0
    %v5190 = vmax.f32 %v5179, 0.0
    %v5191 = vld [vmem:[#allocation16] sm:$0xff]
    %v5193 = vlaneseq
    %v5194 = vshrl.u32 %v5193, 7
    %v5195 = vsub.s32 0, %v5194
    %v5196 = vrot.slane %v5191, %v5195
    %v5197 = vlaneseq
    %v5198 = vshrl.u32 %v5197, 7
    %v5199 = vsub.s32 1, %v5198
    %v5200 = vrot.slane %v5191, %v5199
    %v5201 = vlaneseq
    %v5202 = vshrl.u32 %v5201, 7
    %v5203 = vsub.s32 2, %v5202
    %v5204 = vrot.slane %v5191, %v5203
    %v5205 = vlaneseq
    %v5206 = vshrl.u32 %v5205, 7
    %v5207 = vsub.s32 3, %v5206
    %v5208 = vrot.slane %v5191, %v5207
    %v5209 = vlaneseq
    %v5210 = vshrl.u32 %v5209, 7
    %v5211 = vsub.s32 4, %v5210
    %v5212 = vrot.slane %v5191, %v5211
    %v5213 = vlaneseq
    %v5214 = vshrl.u32 %v5213, 7
    %v5215 = vsub.s32 5, %v5214
    %v5216 = vrot.slane %v5191, %v5215
    %v5217 = vlaneseq
    %v5218 = vshrl.u32 %v5217, 7
    %v5219 = vsub.s32 6, %v5218
    %v5220 = vrot.slane %v5191, %v5219
    %v5221 = vlaneseq
    %v5222 = vshrl.u32 %v5221, 7
    %v5223 = vsub.s32 7, %v5222
    %v5224 = vrot.slane %v5191, %v5223
    %v5233 = vmul.f32 %v5183, %v5196
    %v5234 = vmul.f32 %v5184, %v5200
    %v5235 = vmul.f32 %v5185, %v5204
    %v5236 = vmul.f32 %v5186, %v5208
    %v5237 = vmul.f32 %v5187, %v5212
    %v5238 = vmul.f32 %v5188, %v5216
    %v5239 = vmul.f32 %v5189, %v5220
    %v5240 = vmul.f32 %v5190, %v5224
    %v5241 = vadd.f32 %v5233, %v5234
    %v5242 = vadd.f32 %v5241, %v5235
    %v5243 = vadd.f32 %v5242, %v5236
    %v5244 = vadd.f32 %v5243, %v5237
    %v5245 = vadd.f32 %v5244, %v5238
    %v5246 = vadd.f32 %v5245, %v5239
    %v5247 = vadd.f32 %v5246, %v5240
    %5248 = vadd.xlane.f32.xlu0 %v5247
    %v5249 = vpop.xlane.xlu0 %5248
    %v5250 = vld [vmem:[#allocation5] sm:$0xff]
    %v5251 = vld [vmem:[%s7] sm:$0xff]
    %v5252 = vld [vmem:[%s7 + $0x8] sm:$0x3]
    %v5253 = vld [vmem:[#allocation14] sm:$0x1]
    %v5255 = vlaneseq
    %v5256 = vshrl.u32 %v5255, 7
    %v5257 = vsub.s32 0, %v5256
    %v5258 = vrot.slane %v5253, %v5257
    %vm5260 = vcmask 80896
    %v5262 = vsel %vm5260, %v5250, 0
    %vm5264 = vcmask 1041408
    %v5266 = vsel %vm5264, %v5252, 0
    %5268 = vmatprep.subr.mxu0 0.0
    %5269 = vmatpush1.msra.mxu0 0.0
    %5270 = vmatprep.subr.mxu0 0.0
    %5271 = vmatpush1.msra.mxu0 0.0
    %5272 = vmatprep.subr.mxu0 0.0
    %5273 = vmatpush1.msra.mxu0 0.0
    %5274 = vmatprep.subr.mxu0 0.0
    %5275 = vmatpush1.msra.mxu0 0.0
    %5276 = vmatprep.subr.mxu0 0.0
    %5277 = vmatpush1.msra.mxu0 0.0
    %5278 = vmatprep.subr.mxu0 0.0
    %5279 = vmatpush1.msra.mxu0 0.0
    %5280 = vmatprep.subr.mxu0 0.0
    %5281 = vmatpush1.msra.mxu0 0.0
    %5282 = vmatprep.subr.mxu0 0.0
    %5283 = vmatpush1.msra.mxu0 0.0
    %5284 = vmatprep.subr.mxu0 0.0
    %5285 = vmatpush1.msra.mxu0 0.0
    %5286 = vmatprep.subr.mxu0 0.0
    %5287 = vmatpush1.msra.mxu0 0.0
    %5288 = vmatprep.subr.mxu0 0.0
    %5289 = vmatpush1.msra.mxu0 0.0
    %5290 = vmatprep.subr.mxu0 0.0
    %5291 = vmatpush1.msra.mxu0 0.0
    %5292 = vmatprep.subr.mxu0 0.0
    %5293 = vmatpush1.msra.mxu0 0.0
    %5294 = vmatprep.subr.mxu0 0.0
    %5295 = vmatpush1.msra.mxu0 0.0
    %5296 = vmatprep.subr.mxu0 0.0
    %5297 = vmatpush1.msra.mxu0 %v5266
    %5298 = vmatprep.subr.mxu0 0.0
    %5299 = vmatpush1.msra.mxu0 %v5251
    %5300 = vmatprep.subr.mxu0 0.0
    %5301 = vmatpush2.msra.mxu0 0.0
    %5302 = vmatprep.subr.mxu0 0.0
    %5303 = vmatpush2.msra.mxu0 0.0
    %5304 = vmatprep.subr.mxu0 0.0
    %5305 = vmatpush2.msra.mxu0 0.0
    %5306 = vmatprep.subr.mxu0 0.0
    %5307 = vmatpush2.msra.mxu0 0.0
    %5308 = vmatprep.subr.mxu0 0.0
    %5309 = vmatpush2.msra.mxu0 0.0
    %5310 = vmatprep.subr.mxu0 0.0
    %5311 = vmatpush2.msra.mxu0 0.0
    %5312 = vmatprep.subr.mxu0 0.0
    %5313 = vmatpush2.msra.mxu0 0.0
    %5314 = vmatprep.subr.mxu0 0.0
    %5315 = vmatpush2.msra.mxu0 0.0
    %5316 = vmatprep.subr.mxu0 0.0
    %5317 = vmatpush2.msra.mxu0 0.0
    %5318 = vmatprep.subr.mxu0 0.0
    %5319 = vmatpush2.msra.mxu0 0.0
    %5320 = vmatprep.subr.mxu0 0.0
    %5321 = vmatpush2.msra.mxu0 0.0
    %5322 = vmatprep.subr.mxu0 0.0
    %5323 = vmatpush2.msra.mxu0 0.0
    %5324 = vmatprep.subr.mxu0 0.0
    %5325 = vmatpush2.msra.mxu0 0.0
    %5326 = vmatprep.subr.mxu0 0.0
    %5327 = vmatpush2.msra.mxu0 0.0
    %5328 = vmatprep.subr.mxu0 0.0
    %5329 = vmatpush2.msra.mxu0 0.0
    %5330 = vmatprep.subr.mxu0 0.0
    %5331 = vmatpush2.msra.mxu0 0.0
    %5332 = vmatprep.mubr.f32.mxu0 0.0
    %5333 = vmatmul.mubr.f32.gmra.mxu0 %v5262
    %v5334 = vpop.f32.mrf.mxu0
    %v5335 = vadd.f32 %v5258, %v5334
    %v5336 = vpop.f32.mrf.mxu0
    %5337 = vdwg.mxu0
    %v5338 = vmax.f32 %v5335, 0.0
    %v5339 = vld [vmem:[#allocation17] sm:$0x1]
    %v5341 = vlaneseq
    %v5342 = vshrl.u32 %v5341, 7
    %v5343 = vsub.s32 0, %v5342
    %v5344 = vrot.slane %v5339, %v5343
    %v5346 = vmul.f32 %v5338, %v5344
    %vm5347 = vcmask 39936
    %v5348 = vsel %vm5347, %v5346, 0.0
    %5349 = vadd.xlane.f32.xlu0 %v5348
    %v5350 = vpop.xlane.xlu0 %5349
    %v5351 = vld [vmem:[#allocation10] sm:$0xff]
    %v5352 = vld [vmem:[#allocation10 + $0x8] sm:$0xff]
    %v5353 = vld [vmem:[#allocation10 + $0x10] sm:$0xff]
    %v5354 = vld [vmem:[#allocation10 + $0x18] sm:$0xff]
    %v5355 = vld [vmem:[#allocation10 + $0x20] sm:$0xff]
    %v5356 = vld [vmem:[#allocation10 + $0x28] sm:$0xff]
    %v5357 = vld [vmem:[#allocation10 + $0x30] sm:$0xff]
    %v5358 = vld [vmem:[#allocation10 + $0x38] sm:$0xff]
    %v5359 = vld [vmem:[#allocation10 + $0x40] sm:$0xff]
    %v5360 = vld [vmem:[#allocation10 + $0x48] sm:$0xff]
    %v5361 = vld [vmem:[#allocation10 + $0x50] sm:$0xff]
    %v5362 = vld [vmem:[#allocation10 + $0x58] sm:$0xff]
    %v5363 = vld [vmem:[#allocation10 + $0x60] sm:$0xff]
    %v5364 = vld [vmem:[#allocation10 + $0x68] sm:$0xff]
    %v5365 = vld [vmem:[#allocation10 + $0x70] sm:$0xff]
    %v5366 = vld [vmem:[#allocation10 + $0x78] sm:$0xff]
    %v5367 = vld [vmem:[#allocation10 + $0x80] sm:$0xff]
    %v5368 = vld [vmem:[#allocation10 + $0x88] sm:$0xff]
    %v5369 = vld [vmem:[#allocation10 + $0x90] sm:$0xff]
    %v5370 = vld [vmem:[#allocation10 + $0x98] sm:$0xff]
    %v5371 = vld [vmem:[#allocation10 + $0xa0] sm:$0xff]
    %v5372 = vld [vmem:[#allocation10 + $0xa8] sm:$0xff]
    %v5373 = vld [vmem:[#allocation10 + $0xb0] sm:$0xff]
    %v5374 = vld [vmem:[#allocation10 + $0xb8] sm:$0xff]
    %v5375 = vld [vmem:[#allocation10 + $0xc0] sm:$0xff]
    %v5376 = vld [vmem:[#allocation10 + $0xc8] sm:$0xff]
    %v5377 = vld [vmem:[#allocation10 + $0xd0] sm:$0xff]
    %v5378 = vlaneseq
    %v5379 = vand.u32 %v5378, 127
    %v5380 = vld [vmem:[#allocation19] sm:$0x1]
    %v5382 = vlaneseq
    %v5383 = vshrl.u32 %v5382, 7
    %v5384 = vsub.s32 0, %v5383
    %v5385 = vrot.slane %v5380, %v5384
    %v5388 = vsel %vm1204, %v511, 0
    %5390 = vmatprep.subr.mxu0 0.0
    %5391 = vmatpush1.msra.mxu0 %v5366
    %5392 = vmatprep.subr.mxu0 0.0
    %5393 = vmatpush1.msra.mxu0 %v5365
    %5394 = vmatprep.subr.mxu0 0.0
    %5395 = vmatpush1.msra.mxu0 %v5364
    %5396 = vmatprep.subr.mxu0 0.0
    %5397 = vmatpush1.msra.mxu0 %v5363
    %5398 = vmatprep.subr.mxu0 0.0
    %5399 = vmatpush1.msra.mxu0 %v5362
    %5400 = vmatprep.subr.mxu0 0.0
    %5401 = vmatpush1.msra.mxu0 %v5361
    %5402 = vmatprep.subr.mxu0 0.0
    %5403 = vmatpush1.msra.mxu0 %v5360
    %5404 = vmatprep.subr.mxu0 0.0
    %5405 = vmatpush1.msra.mxu0 %v5359
    %5406 = vmatprep.subr.mxu0 0.0
    %5407 = vmatpush1.msra.mxu0 %v5358
    %5408 = vmatprep.subr.mxu0 0.0
    %5409 = vmatpush1.msra.mxu0 %v5357
    %5410 = vmatprep.subr.mxu0 0.0
    %5411 = vmatpush1.msra.mxu0 %v5356
    %5412 = vmatprep.subr.mxu0 0.0
    %5413 = vmatpush1.msra.mxu0 %v5355
    %5414 = vmatprep.subr.mxu0 0.0
    %5415 = vmatpush1.msra.mxu0 %v5354
    %5416 = vmatprep.subr.mxu0 0.0
    %5417 = vmatpush1.msra.mxu0 %v5353
    %5418 = vmatprep.subr.mxu0 0.0
    %5419 = vmatpush1.msra.mxu0 %v5352
    %5420 = vmatprep.subr.mxu0 0.0
    %5421 = vmatpush1.msra.mxu0 %v5351
    %5422 = vmatprep.subr.mxu0 0.0
    %5423 = vmatpush2.msra.mxu0 0.0
    %5424 = vmatprep.subr.mxu0 0.0
    %5425 = vmatpush2.msra.mxu0 0.0
    %5426 = vmatprep.subr.mxu0 0.0
    %5427 = vmatpush2.msra.mxu0 0.0
    %5428 = vmatprep.subr.mxu0 0.0
    %5429 = vmatpush2.msra.mxu0 0.0
    %5430 = vmatprep.subr.mxu0 0.0
    %5431 = vmatpush2.msra.mxu0 0.0
    %5432 = vmatprep.subr.mxu0 0.0
    %5433 = vmatpush2.msra.mxu0 %v5377
    %5434 = vmatprep.subr.mxu0 0.0
    %5435 = vmatpush2.msra.mxu0 %v5376
    %5436 = vmatprep.subr.mxu0 0.0
    %5437 = vmatpush2.msra.mxu0 %v5375
    %5438 = vmatprep.subr.mxu0 0.0
    %5439 = vmatpush2.msra.mxu0 %v5374
    %5440 = vmatprep.subr.mxu0 0.0
    %5441 = vmatpush2.msra.mxu0 %v5373
    %5442 = vmatprep.subr.mxu0 0.0
    %5443 = vmatpush2.msra.mxu0 %v5372
    %5444 = vmatprep.subr.mxu0 0.0
    %5445 = vmatpush2.msra.mxu0 %v5371
    %5446 = vmatprep.subr.mxu0 0.0
    %5447 = vmatpush2.msra.mxu0 %v5370
    %5448 = vmatprep.subr.mxu0 0.0
    %5449 = vmatpush2.msra.mxu0 %v5369
    %5450 = vmatprep.subr.mxu0 0.0
    %5451 = vmatpush2.msra.mxu0 %v5368
    %5452 = vmatprep.subr.mxu0 0.0
    %5453 = vmatpush2.msra.mxu0 %v5367
    %5454 = vmatprep.mubr.f32.mxu0 %v5388
    %5455 = vmatmul.mubr.f32.gmra.mxu0 %v505
    %v5456 = vpop.f32.mrf.mxu0
    %v5457 = vadd.f32 %v5385, %v5456
    %v5458 = vpop.f32.mrf.mxu0
    %5459 = vdwg.mxu0
    %vm5460 = vcmp.eq.s32.totalorder %v5379, 23
    %v5461 = vsel %vm5460, %v5249, 0.0
    %v5462 = vadd.f32 %v5457, %v5461
    %vm5463 = vcmp.eq.s32.totalorder %v5379, 24
    %v5464 = vsel %vm5463, %v5350, 0.0
    %v5465 = vadd.f32 %v5462, %v5464
    %5466 = vst [vmem:[#allocation20] sm:$0xff] %v5465
    // Predicated region
    $region94: #{tpu_custom_call.1} parent=1 // pred_check
      _
    $region95: #{tpu_custom_call.1} parent=1 // pred_check_branch
      %5468 = sbr.rel (0) target = $region97
    $region96: #{tpu_custom_call.1} parent=1 // pred_region
      %s5470 = ssub.s32 128, 128
      %5471 = vsyncadd [#allocation4], %s5470
      %s5473 = sshll.u32 [#allocation20], 4
      %s5474 = int_to_ptr.vmem [resolvable:$true] %s5473
      %5476 = dma.vmem_to_hbm [thread:$0]  %s5474, 128, %s12, [#allocation4]
    $region97: #{tpu_custom_call.1} parent=1 // pred_fallthru
      _
    // Predicated region
    $region98: #{tpu_custom_call.1} parent=1 // pred_check
      _
    $region99: #{tpu_custom_call.1} parent=1 // pred_check_branch
      %5478 = sbr.rel (0) target = $region101
    $region100: #{tpu_custom_call.1} parent=1 // pred_region
      %5479 = dma.done [#allocation4], 128
    $region101: #{tpu_custom_call.1} parent=1 // pred_fallthru
      _
    %5480 = vsyncpa [#allocation3], 1
    %5481 = vsyncpa [#allocation6], 1
    %5482 = vsyncpa [#allocation9], 1
    %5483 = vsyncpa [#allocation12], 1
    %5484 = vsyncpa [#allocation15], 1
    %5485 = vsyncpa [#allocation18], 1
    %5486 = vsyncpa [#allocation4], 1

</llo_original>
